<compile_context>
chip_gen: v7x
topology: tpu7x:2x2x1
jax: 0.10.0
libtpu: 0.0.40
codegen_flags: <defaults>
</compile_context>

<pallas_src>
import jax
import jax.numpy as jnp
from jax.experimental import pallas as pl
from jax.experimental.pallas import tpu as pltpu


def _vmem_budget():
    """~85% of physical VMEM (v5e/v6e: 128 MiB, v7x: 64 MiB)."""
    cap = 64 << 20
    try:
        cap = int(getattr(pltpu.get_tpu_info(), "vmem_capacity_bytes", cap))
    except Exception:
        pass
    return int(cap * 0.85)


def _pick_d_tile(DO, HO, WO, *, bytes_per_row, fixed_bytes, budget,
                 target_rows=2048, row_align=8):
    """Largest output-D tile whose row count is legal for the output BlockSpec
    (multiple of row_align, or the full extent), stays under target_rows and
    fits the VMEM budget."""
    legal = []
    for td in range(1, DO + 1):
        if DO % td:
            continue
        rows = td * HO * WO
        if rows % row_align == 0 or td == DO:
            legal.append(td)
    best = None
    for td in legal:
        rows = td * HO * WO
        if rows <= target_rows and fixed_bytes + rows * bytes_per_row <= budget:
            if best is None or td > best:
                best = td
    if best is None:
        # TODO(synk): pad the row count to a multiple of row_align instead of
        # falling back to the smallest legal tile.
        best = min(legal, key=lambda td: td * HO * WO)
    return best


def _make_pertap_kernel(Cin, KD, KH, KW, HO, WO, TD, dil, M_TILE, EPI_ROWS):
    """One K=Cin MXU dot per tap, accumulated into an f32 VMEM scratch."""
    def kernel(x_ref, w_ref, b_ref, o_ref, acc_ref):
        # x_ref: (1, Dp, Hp, Wp, Cin) bf16, resident per batch element.
        # w_ref: (KD*KH*KW, Cin, Cpad) bf16.  b_ref: (1, Cpad) f32.
        d_base = pl.program_id(1) * TD
        t = 0
        for kd in range(KD):
            xd = x_ref[0, pl.ds(d_base + kd * dil, TD)]       # (TD, Hp, Wp, Cin)
            for kh in range(KH):
                h0 = kh * dil
                for kw in range(KW):
                    w0 = kw * dil
                    win = xd[:, h0:h0 + HO, w0:w0 + WO, :]    # (TD, HO, WO, Cin)
                    lhs = win.reshape(M_TILE, Cin)
                    part = jax.lax.dot_general(
                        lhs, w_ref[t], (((1,), (0,)), ((), ())),
                        preferred_element_type=jnp.float32)   # (M_TILE, Cpad)
                    if t == 0:
                        acc_ref[...] = part
                    else:
                        acc_ref[...] += part
                    t += 1
        # Chunked epilogue: bias (BN folded) + ReLU, lane-dense stores.
        b = b_ref[...]
        for r0 in range(0, M_TILE, EPI_ROWS):
            rows = min(EPI_ROWS, M_TILE - r0)
            y = jnp.maximum(acc_ref[r0:r0 + rows, :] + b, 0.0)
            o_ref[0, r0:r0 + rows, :] = y.astype(o_ref.dtype)
    return kernel


def _make_im2col_kernel(Cin, KD, KH, KW, HO, WO, TD, dil, M_TILE, EPI_ROWS):
    """Single big-K contraction via an im2col VMEM scratch (small-Cin stem)."""
    def kernel(x_ref, w_ref, b_ref, o_ref, cols_ref):
        d_base = pl.program_id(1) * TD
        t = 0
        for kd in range(KD):
            xd = x_ref[0, pl.ds(d_base + kd * dil, TD)]
            for kh in range(KH):
                h0 = kh * dil
                for kw in range(KW):
                    w0 = kw * dil
                    patch = xd[:, h0:h0 + HO, w0:w0 + WO, :]
                    cols_ref[:, t * Cin:(t + 1) * Cin] = patch.reshape(M_TILE, Cin)
                    t += 1
        wmat = w_ref[...]
        b = b_ref[...]
        # Chunked dot + epilogue (bounds vreg pressure at large M tiles).
        for r0 in range(0, M_TILE, EPI_ROWS):
            rows = min(EPI_ROWS, M_TILE - r0)
            acc = jax.lax.dot_general(
                cols_ref[r0:r0 + rows, :], wmat,
                (((1,), (0,)), ((), ())),
                preferred_element_type=jnp.float32)
            o_ref[0, r0:r0 + rows, :] = jnp.maximum(acc + b, 0.0).astype(o_ref.dtype)
    return kernel


def basic_conv3d(x_ndhwc, w, conv_bias, gamma, beta, running_mean, running_var,
                 *, stride=1, padding=0, dilation=1, eps=1e-5,
                 mode="auto", out_dtype=jnp.bfloat16, target_rows=2048):
    """BasicConv3d forward (inference BatchNorm).  x_ndhwc: [N, D, H, W, Cin]."""
    assert stride == 1, "stride > 1 not supported by this kernel"
    N, D, H, W, Cin = x_ndhwc.shape
    KD, KH, KW, Cin_w, Cout = w.shape
    assert Cin == Cin_w

    if mode == "auto":
        mode = "pertap" if Cin >= 128 else "im2col"
    assert mode in ("pertap", "im2col")

    p, dil = padding, dilation
    # Cast to bf16 BEFORE padding: one fewer full-f32 HBM pass.
    xp = jnp.pad(x_ndhwc.astype(jnp.bfloat16),
                 ((0, 0), (p, p), (p, p), (p, p), (0, 0)))
    Dp, Hp, Wp = D + 2 * p, H + 2 * p, W + 2 * p
    DO = Dp - dil * (KD - 1)
    HO = Hp - dil * (KH - 1)
    WO = Wp - dil * (KW - 1)

    # Fold BatchNorm (inference) + conv bias:
    #   relu(bn(conv(x, w) + b)) = relu(conv(x, w*scale) + beta + (b - mean)*scale)
    scale = gamma / jnp.sqrt(running_var + eps)               # (Cout,)
    bias = beta + (conv_bias - running_mean) * scale          # (Cout,)

    NTAP = KD * KH * KW
    Ktot = NTAP * Cin
    Cpad = ((Cout + 127) // 128) * 128                        # lane-dense out
    w_sc = (w.astype(jnp.float32) * scale).reshape(NTAP, Cin, Cout)
    w_sc = jnp.pad(w_sc, ((0, 0), (0, 0), (0, Cpad - Cout))).astype(jnp.bfloat16)
    if mode == "im2col":
        w_sc = w_sc.reshape(Ktot, Cpad)
        w_spec = pl.BlockSpec((Ktot, Cpad), lambda n, d: (0, 0))
        w_bytes = Ktot * Cpad * 2
    else:
        w_spec = pl.BlockSpec((NTAP, Cin, Cpad), lambda n, d: (0, 0, 0))
        w_bytes = NTAP * Cin * Cpad * 2
    bias_pad = jnp.pad(bias.astype(jnp.float32), (0, Cpad - Cout)).reshape(1, Cpad)

    out_itemsize = jnp.dtype(out_dtype).itemsize
    row_align = 8 if out_itemsize >= 4 else (32 // out_itemsize)   # 16 for bf16
    budget = _vmem_budget()
    x_blk = Dp * Hp * Wp * Cin * 2
    fixed = 2 * x_blk + 2 * w_bytes + 2 * Cpad * 4 + (4 << 20)     # + headroom
    scratch_per_row = (Cpad * 4) if mode == "pertap" else (Ktot * 2)
    bytes_per_row = 2 * Cpad * out_itemsize + scratch_per_row

    TD = _pick_d_tile(DO, HO, WO, bytes_per_row=bytes_per_row, fixed_bytes=fixed,
                      budget=budget, target_rows=target_rows, row_align=row_align)
    M_TILE = TD * HO * WO
    n_dt = DO // TD
    EPI_ROWS = min(M_TILE, 256)

    if mode == "pertap":
        kernel = _make_pertap_kernel(Cin, KD, KH, KW, HO, WO, TD, dil, M_TILE, EPI_ROWS)
        scratch = [pltpu.VMEM((M_TILE, Cpad), jnp.float32)]
    else:
        kernel = _make_im2col_kernel(Cin, KD, KH, KW, HO, WO, TD, dil, M_TILE, EPI_ROWS)
        scratch = [pltpu.VMEM((M_TILE, Ktot), jnp.bfloat16)]

    vmem_limit = min(max(fixed + M_TILE * bytes_per_row, 32 << 20), budget)

    flops = 2 * N * DO * HO * WO * Ktot * Cpad
    bytes_accessed = (N * Dp * Hp * Wp * Cin * 2 + w_bytes + Cpad * 4
                      + N * DO * HO * WO * Cpad * out_itemsize)

    # Megacore: split on batch when possible (avoid both cores re-fetching the
    # same resident input block); with one batch element split on D instead.
    dims = ("parallel", "arbitrary") if N > 1 else ("parallel", "parallel")

    out_slab = pl.pallas_call(
        kernel,
        out_shape=jax.ShapeDtypeStruct((N, DO * HO * WO, Cpad), out_dtype),
        grid=(N, n_dt),
        in_specs=[
            # Padded volume for one batch element; resident across D-tiles.
            pl.BlockSpec((1, Dp, Hp, Wp, Cin), lambda n, d: (n, 0, 0, 0, 0)),
            # BN-folded, Cout-padded weights; resident across the grid.
            w_spec,
            pl.BlockSpec((1, Cpad), lambda n, d: (0, 0)),
        ],
        out_specs=pl.BlockSpec((1, M_TILE, Cpad), lambda n, d: (n, d, 0)),
        scratch_shapes=scratch,
        compiler_params=pltpu.CompilerParams(
            dimension_semantics=dims,
            vmem_limit_bytes=int(vmem_limit)),
        cost_estimate=pl.CostEstimate(
            flops=int(flops), transcendentals=0,
            bytes_accessed=int(bytes_accessed)),
    )(xp, w_sc, bias_pad)

    # Channel un-pad + reshape back to NDHWC (cheap at small Cout; ideally the
    # model keeps Cout a multiple of 128 so this slice disappears).
    out = out_slab[:, :, :Cout].reshape(N, DO, HO, WO, Cout)
    return out.astype(x_ndhwc.dtype)


def _reference(x, w, conv_bias, gamma, beta, mean, var, *, padding, dilation,
               eps=1e-5):
    """Pure-JAX reference with the same bf16 operand rounding as the kernel."""
    scale = gamma / jnp.sqrt(var + eps)
    bias = beta + (conv_bias - mean) * scale
    xq = x.astype(jnp.bfloat16).astype(jnp.float32)
    wq = (w.astype(jnp.float32) * scale).astype(jnp.bfloat16).astype(jnp.float32)
    out = jax.lax.conv_general_dilated(
        xq, wq, window_strides=(1, 1, 1), padding=[(padding, padding)] * 3,
        rhs_dilation=(dilation,) * 3,
        dimension_numbers=("NDHWC", "DHWIO", "NDHWC"),
        precision=jax.lax.Precision.HIGHEST)
    return jnp.maximum(out + bias, 0.0)


def _make_params(key, N, Cin, D, H, W, Cout, K):
    # Kernel-native layouts (NDHWC / DHWIO).  PyTorch NCDHW and
    # (Cout,Cin,KD,KH,KW) map via transpose(0,2,3,4,1) / transpose(2,3,4,1,0).
    k = jax.random.split(key, 7)
    x = jax.random.normal(k[0], (N, D, H, W, Cin), jnp.float32)
    w = jax.random.normal(k[1], (K, K, K, Cin, Cout), jnp.float32) * 0.1
    b = jax.random.normal(k[2], (Cout,), jnp.float32) * 0.1
    gamma = 1.0 + 0.1 * jax.random.normal(k[3], (Cout,), jnp.float32)
    beta = 0.1 * jax.random.normal(k[4], (Cout,), jnp.float32)
    mean = 0.1 * jax.random.normal(k[5], (Cout,), jnp.float32)
    var = 0.5 + jax.nn.softplus(jax.random.normal(k[6], (Cout,), jnp.float32))
    return x, w, b, gamma, beta, mean, var


if __name__ == "__main__":
    key = jax.random.PRNGKey(0)
    k_a, k_b = jax.random.split(key)

    # --- Test A: small-Cin stem path (im2col), f32 output slab, tight check.
    #     Small target_rows so the multi-D-tile path (grid axis 1 > 1) runs.
    x, w, b, g, bt, mu, var = _make_params(k_a, N=2, Cin=4, D=8, H=8, W=8,
                                           Cout=8, K=3)
    out = basic_conv3d(x, w, b, g, bt, mu, var, padding=1, dilation=1,
                       mode="im2col", out_dtype=jnp.float32, target_rows=256)
    out = jax.block_until_ready(out)
    ref = _reference(x, w, b, g, bt, mu, var, padding=1, dilation=1)
    err = float(jnp.max(jnp.abs(out - ref)))
    assert jnp.allclose(out, ref, atol=1e-3, rtol=1e-3), f"im2col max err {err}"

    # --- Test B: per-tap MXU path (what large-Cin layers use), bf16 out slab.
    x, w, b, g, bt, mu, var = _make_params(k_b, N=1, Cin=16, D=6, H=10, W=10,
                                           Cout=32, K=3)
    out = basic_conv3d(x, w, b, g, bt, mu, var, padding=1, dilation=1,
                       mode="pertap", out_dtype=jnp.bfloat16)
    out = jax.block_until_ready(out)
    ref = _reference(x, w, b, g, bt, mu, var, padding=1, dilation=1)
    err = float(jnp.max(jnp.abs(out - ref)))
    # bf16 output rounding => looser tolerance (still catches logic errors).
    assert jnp.allclose(out, ref, atol=3e-2, rtol=3e-2), f"pertap max err {err}"

    print("KERNEL_OK")
</pallas_src>

<mosaic_0001>
module attributes {stable_mosaic.version = 11 : i64} {
  func.func @kernel(%arg0: i32, %arg1: i32, %arg2: memref<1x10x10x10x4xbf16, #tpu.memory_space<vmem>>, %arg3: memref<108x128xbf16, #tpu.memory_space<vmem>>, %arg4: memref<1x128xf32, #tpu.memory_space<vmem>>, %arg5: memref<1x256x128xf32, #tpu.memory_space<vmem>>, %arg6: memref<256x108xbf16, #tpu.memory_space<vmem>>) attributes {dimension_semantics = [#tpu.dimension_semantics<parallel>, #tpu.dimension_semantics<arbitrary>], iteration_bounds = array<i64: 2, 2>, scalar_prefetch = 0 : i64, scratch_operands = 1 : i64, tpu.core_type = #tpu.core_type<tc>, window_params = [{transform_indices = @transform_0, window_bounds = array<i64: 1, 10, 10, 10, 4>}, {pipeline_mode = #tpu.pipeline_mode<synchronous>, transform_indices = @transform_1, window_bounds = array<i64: 108, 128>}, {pipeline_mode = #tpu.pipeline_mode<synchronous>, transform_indices = @transform_2, window_bounds = array<i64: 1, 128>}, {transform_indices = @transform_3, window_bounds = array<i64: 1, 256, 128>}]} {
    %c4_i32 = arith.constant 4 : i32
    %0 = arith.muli %arg1, %c4_i32 : i32
    %c0_i32 = arith.constant 0 : i32
    %1 = arith.addi %0, %c0_i32 : i32
    %c0 = arith.constant 0 : index
    %2 = arith.index_cast %1 : i32 to index
    %c0_0 = arith.constant 0 : index
    %c0_1 = arith.constant 0 : index
    %c0_2 = arith.constant 0 : index
    %3 = vector.load %arg2[%c0, %2, %c0_0, %c0_1, %c0_2] : memref<1x10x10x10x4xbf16, #tpu.memory_space<vmem>>, vector<1x4x10x10x4xbf16>
    %4 = vector.shape_cast %3 : vector<1x4x10x10x4xbf16> to vector<4x10x10x4xbf16>
    %5 = vector.extract_strided_slice %4 {offsets = [0, 0, 0, 0], sizes = [4, 8, 8, 4], strides = [1, 1, 1, 1]} : vector<4x10x10x4xbf16> to vector<4x8x8x4xbf16>
    %6 = vector.shape_cast %5 : vector<4x8x8x4xbf16> to vector<256x4xbf16>
    %c0_3 = arith.constant 0 : index
    %c0_4 = arith.constant 0 : index
    %7 = vector.load %arg6[%c0_3, %c0_4] : memref<256x108xbf16, #tpu.memory_space<vmem>>, vector<256x4xbf16>
    tpu.vector_store %arg6[%c0_3, %c0_4], %6 {strides = array<i32>} : memref<256x108xbf16, #tpu.memory_space<vmem>>, vector<256x4xbf16>,
    %8 = vector.extract_strided_slice %4 {offsets = [0, 0, 1, 0], sizes = [4, 8, 8, 4], strides = [1, 1, 1, 1]} : vector<4x10x10x4xbf16> to vector<4x8x8x4xbf16>
    %9 = vector.shape_cast %8 : vector<4x8x8x4xbf16> to vector<256x4xbf16>
    %c0_5 = arith.constant 0 : index
    %c4 = arith.constant 4 : index
    %10 = vector.load %arg6[%c0_5, %c4] : memref<256x108xbf16, #tpu.memory_space<vmem>>, vector<256x4xbf16>
    tpu.vector_store %arg6[%c0_5, %c4], %9 {strides = array<i32>} : memref<256x108xbf16, #tpu.memory_space<vmem>>, vector<256x4xbf16>,
    %11 = vector.extract_strided_slice %4 {offsets = [0, 0, 2, 0], sizes = [4, 8, 8, 4], strides = [1, 1, 1, 1]} : vector<4x10x10x4xbf16> to vector<4x8x8x4xbf16>
    %12 = vector.shape_cast %11 : vector<4x8x8x4xbf16> to vector<256x4xbf16>
    %c0_6 = arith.constant 0 : index
    %c8 = arith.constant 8 : index
    %13 = vector.load %arg6[%c0_6, %c8] : memref<256x108xbf16, #tpu.memory_space<vmem>>, vector<256x4xbf16>
    tpu.vector_store %arg6[%c0_6, %c8], %12 {strides = array<i32>} : memref<256x108xbf16, #tpu.memory_space<vmem>>, vector<256x4xbf16>,
    %14 = vector.extract_strided_slice %4 {offsets = [0, 1, 0, 0], sizes = [4, 8, 8, 4], strides = [1, 1, 1, 1]} : vector<4x10x10x4xbf16> to vector<4x8x8x4xbf16>
    %15 = vector.shape_cast %14 : vector<4x8x8x4xbf16> to vector<256x4xbf16>
    %c0_7 = arith.constant 0 : index
    %c12 = arith.constant 12 : index
    %16 = vector.load %arg6[%c0_7, %c12] : memref<256x108xbf16, #tpu.memory_space<vmem>>, vector<256x4xbf16>
    tpu.vector_store %arg6[%c0_7, %c12], %15 {strides = array<i32>} : memref<256x108xbf16, #tpu.memory_space<vmem>>, vector<256x4xbf16>,
    %17 = vector.extract_strided_slice %4 {offsets = [0, 1, 1, 0], sizes = [4, 8, 8, 4], strides = [1, 1, 1, 1]} : vector<4x10x10x4xbf16> to vector<4x8x8x4xbf16>
    %18 = vector.shape_cast %17 : vector<4x8x8x4xbf16> to vector<256x4xbf16>
    %c0_8 = arith.constant 0 : index
    %c16 = arith.constant 16 : index
    %19 = vector.load %arg6[%c0_8, %c16] : memref<256x108xbf16, #tpu.memory_space<vmem>>, vector<256x4xbf16>
    tpu.vector_store %arg6[%c0_8, %c16], %18 {strides = array<i32>} : memref<256x108xbf16, #tpu.memory_space<vmem>>, vector<256x4xbf16>,
    %20 = vector.extract_strided_slice %4 {offsets = [0, 1, 2, 0], sizes = [4, 8, 8, 4], strides = [1, 1, 1, 1]} : vector<4x10x10x4xbf16> to vector<4x8x8x4xbf16>
    %21 = vector.shape_cast %20 : vector<4x8x8x4xbf16> to vector<256x4xbf16>
    %c0_9 = arith.constant 0 : index
    %c20 = arith.constant 20 : index
    %22 = vector.load %arg6[%c0_9, %c20] : memref<256x108xbf16, #tpu.memory_space<vmem>>, vector<256x4xbf16>
    tpu.vector_store %arg6[%c0_9, %c20], %21 {strides = array<i32>} : memref<256x108xbf16, #tpu.memory_space<vmem>>, vector<256x4xbf16>,
    %23 = vector.extract_strided_slice %4 {offsets = [0, 2, 0, 0], sizes = [4, 8, 8, 4], strides = [1, 1, 1, 1]} : vector<4x10x10x4xbf16> to vector<4x8x8x4xbf16>
    %24 = vector.shape_cast %23 : vector<4x8x8x4xbf16> to vector<256x4xbf16>
    %c0_10 = arith.constant 0 : index
    %c24 = arith.constant 24 : index
    %25 = vector.load %arg6[%c0_10, %c24] : memref<256x108xbf16, #tpu.memory_space<vmem>>, vector<256x4xbf16>
    tpu.vector_store %arg6[%c0_10, %c24], %24 {strides = array<i32>} : memref<256x108xbf16, #tpu.memory_space<vmem>>, vector<256x4xbf16>,
    %26 = vector.extract_strided_slice %4 {offsets = [0, 2, 1, 0], sizes = [4, 8, 8, 4], strides = [1, 1, 1, 1]} : vector<4x10x10x4xbf16> to vector<4x8x8x4xbf16>
    %27 = vector.shape_cast %26 : vector<4x8x8x4xbf16> to vector<256x4xbf16>
    %c0_11 = arith.constant 0 : index
    %c28 = arith.constant 28 : index
    %28 = vector.load %arg6[%c0_11, %c28] : memref<256x108xbf16, #tpu.memory_space<vmem>>, vector<256x4xbf16>
    tpu.vector_store %arg6[%c0_11, %c28], %27 {strides = array<i32>} : memref<256x108xbf16, #tpu.memory_space<vmem>>, vector<256x4xbf16>,
    %29 = vector.extract_strided_slice %4 {offsets = [0, 2, 2, 0], sizes = [4, 8, 8, 4], strides = [1, 1, 1, 1]} : vector<4x10x10x4xbf16> to vector<4x8x8x4xbf16>
    %30 = vector.shape_cast %29 : vector<4x8x8x4xbf16> to vector<256x4xbf16>
    %c0_12 = arith.constant 0 : index
    %c32 = arith.constant 32 : index
    %31 = vector.load %arg6[%c0_12, %c32] : memref<256x108xbf16, #tpu.memory_space<vmem>>, vector<256x4xbf16>
    tpu.vector_store %arg6[%c0_12, %c32], %30 {strides = array<i32>} : memref<256x108xbf16, #tpu.memory_space<vmem>>, vector<256x4xbf16>,
    %c1_i32 = arith.constant 1 : i32
    %32 = arith.addi %0, %c1_i32 : i32
    %c0_13 = arith.constant 0 : index
    %33 = arith.index_cast %32 : i32 to index
    %c0_14 = arith.constant 0 : index
    %c0_15 = arith.constant 0 : index
    %c0_16 = arith.constant 0 : index
    %34 = vector.load %arg2[%c0_13, %33, %c0_14, %c0_15, %c0_16] : memref<1x10x10x10x4xbf16, #tpu.memory_space<vmem>>, vector<1x4x10x10x4xbf16>
    %35 = vector.shape_cast %34 : vector<1x4x10x10x4xbf16> to vector<4x10x10x4xbf16>
    %36 = vector.extract_strided_slice %35 {offsets = [0, 0, 0, 0], sizes = [4, 8, 8, 4], strides = [1, 1, 1, 1]} : vector<4x10x10x4xbf16> to vector<4x8x8x4xbf16>
    %37 = vector.shape_cast %36 : vector<4x8x8x4xbf16> to vector<256x4xbf16>
    %c0_17 = arith.constant 0 : index
    %c36 = arith.constant 36 : index
    %38 = vector.load %arg6[%c0_17, %c36] : memref<256x108xbf16, #tpu.memory_space<vmem>>, vector<256x4xbf16>
    tpu.vector_store %arg6[%c0_17, %c36], %37 {strides = array<i32>} : memref<256x108xbf16, #tpu.memory_space<vmem>>, vector<256x4xbf16>,
    %39 = vector.extract_strided_slice %35 {offsets = [0, 0, 1, 0], sizes = [4, 8, 8, 4], strides = [1, 1, 1, 1]} : vector<4x10x10x4xbf16> to vector<4x8x8x4xbf16>
    %40 = vector.shape_cast %39 : vector<4x8x8x4xbf16> to vector<256x4xbf16>
    %c0_18 = arith.constant 0 : index
    %c40 = arith.constant 40 : index
    %41 = vector.load %arg6[%c0_18, %c40] : memref<256x108xbf16, #tpu.memory_space<vmem>>, vector<256x4xbf16>
    tpu.vector_store %arg6[%c0_18, %c40], %40 {strides = array<i32>} : memref<256x108xbf16, #tpu.memory_space<vmem>>, vector<256x4xbf16>,
    %42 = vector.extract_strided_slice %35 {offsets = [0, 0, 2, 0], sizes = [4, 8, 8, 4], strides = [1, 1, 1, 1]} : vector<4x10x10x4xbf16> to vector<4x8x8x4xbf16>
    %43 = vector.shape_cast %42 : vector<4x8x8x4xbf16> to vector<256x4xbf16>
    %c0_19 = arith.constant 0 : index
    %c44 = arith.constant 44 : index
    %44 = vector.load %arg6[%c0_19, %c44] : memref<256x108xbf16, #tpu.memory_space<vmem>>, vector<256x4xbf16>
    tpu.vector_store %arg6[%c0_19, %c44], %43 {strides = array<i32>} : memref<256x108xbf16, #tpu.memory_space<vmem>>, vector<256x4xbf16>,
    %45 = vector.extract_strided_slice %35 {offsets = [0, 1, 0, 0], sizes = [4, 8, 8, 4], strides = [1, 1, 1, 1]} : vector<4x10x10x4xbf16> to vector<4x8x8x4xbf16>
    %46 = vector.shape_cast %45 : vector<4x8x8x4xbf16> to vector<256x4xbf16>
    %c0_20 = arith.constant 0 : index
    %c48 = arith.constant 48 : index
    %47 = vector.load %arg6[%c0_20, %c48] : memref<256x108xbf16, #tpu.memory_space<vmem>>, vector<256x4xbf16>
    tpu.vector_store %arg6[%c0_20, %c48], %46 {strides = array<i32>} : memref<256x108xbf16, #tpu.memory_space<vmem>>, vector<256x4xbf16>,
    %48 = vector.extract_strided_slice %35 {offsets = [0, 1, 1, 0], sizes = [4, 8, 8, 4], strides = [1, 1, 1, 1]} : vector<4x10x10x4xbf16> to vector<4x8x8x4xbf16>
    %49 = vector.shape_cast %48 : vector<4x8x8x4xbf16> to vector<256x4xbf16>
    %c0_21 = arith.constant 0 : index
    %c52 = arith.constant 52 : index
    %50 = vector.load %arg6[%c0_21, %c52] : memref<256x108xbf16, #tpu.memory_space<vmem>>, vector<256x4xbf16>
    tpu.vector_store %arg6[%c0_21, %c52], %49 {strides = array<i32>} : memref<256x108xbf16, #tpu.memory_space<vmem>>, vector<256x4xbf16>,
    %51 = vector.extract_strided_slice %35 {offsets = [0, 1, 2, 0], sizes = [4, 8, 8, 4], strides = [1, 1, 1, 1]} : vector<4x10x10x4xbf16> to vector<4x8x8x4xbf16>
    %52 = vector.shape_cast %51 : vector<4x8x8x4xbf16> to vector<256x4xbf16>
    %c0_22 = arith.constant 0 : index
    %c56 = arith.constant 56 : index
    %53 = vector.load %arg6[%c0_22, %c56] : memref<256x108xbf16, #tpu.memory_space<vmem>>, vector<256x4xbf16>
    tpu.vector_store %arg6[%c0_22, %c56], %52 {strides = array<i32>} : memref<256x108xbf16, #tpu.memory_space<vmem>>, vector<256x4xbf16>,
    %54 = vector.extract_strided_slice %35 {offsets = [0, 2, 0, 0], sizes = [4, 8, 8, 4], strides = [1, 1, 1, 1]} : vector<4x10x10x4xbf16> to vector<4x8x8x4xbf16>
    %55 = vector.shape_cast %54 : vector<4x8x8x4xbf16> to vector<256x4xbf16>
    %c0_23 = arith.constant 0 : index
    %c60 = arith.constant 60 : index
    %56 = vector.load %arg6[%c0_23, %c60] : memref<256x108xbf16, #tpu.memory_space<vmem>>, vector<256x4xbf16>
    tpu.vector_store %arg6[%c0_23, %c60], %55 {strides = array<i32>} : memref<256x108xbf16, #tpu.memory_space<vmem>>, vector<256x4xbf16>,
    %57 = vector.extract_strided_slice %35 {offsets = [0, 2, 1, 0], sizes = [4, 8, 8, 4], strides = [1, 1, 1, 1]} : vector<4x10x10x4xbf16> to vector<4x8x8x4xbf16>
    %58 = vector.shape_cast %57 : vector<4x8x8x4xbf16> to vector<256x4xbf16>
    %c0_24 = arith.constant 0 : index
    %c64 = arith.constant 64 : index
    %59 = vector.load %arg6[%c0_24, %c64] : memref<256x108xbf16, #tpu.memory_space<vmem>>, vector<256x4xbf16>
    tpu.vector_store %arg6[%c0_24, %c64], %58 {strides = array<i32>} : memref<256x108xbf16, #tpu.memory_space<vmem>>, vector<256x4xbf16>,
    %60 = vector.extract_strided_slice %35 {offsets = [0, 2, 2, 0], sizes = [4, 8, 8, 4], strides = [1, 1, 1, 1]} : vector<4x10x10x4xbf16> to vector<4x8x8x4xbf16>
    %61 = vector.shape_cast %60 : vector<4x8x8x4xbf16> to vector<256x4xbf16>
    %c0_25 = arith.constant 0 : index
    %c68 = arith.constant 68 : index
    %62 = vector.load %arg6[%c0_25, %c68] : memref<256x108xbf16, #tpu.memory_space<vmem>>, vector<256x4xbf16>
    tpu.vector_store %arg6[%c0_25, %c68], %61 {strides = array<i32>} : memref<256x108xbf16, #tpu.memory_space<vmem>>, vector<256x4xbf16>,
    %c2_i32 = arith.constant 2 : i32
    %63 = arith.addi %0, %c2_i32 : i32
    %c0_26 = arith.constant 0 : index
    %64 = arith.index_cast %63 : i32 to index
    %c0_27 = arith.constant 0 : index
    %c0_28 = arith.constant 0 : index
    %c0_29 = arith.constant 0 : index
    %65 = vector.load %arg2[%c0_26, %64, %c0_27, %c0_28, %c0_29] : memref<1x10x10x10x4xbf16, #tpu.memory_space<vmem>>, vector<1x4x10x10x4xbf16>
    %66 = vector.shape_cast %65 : vector<1x4x10x10x4xbf16> to vector<4x10x10x4xbf16>
    %67 = vector.extract_strided_slice %66 {offsets = [0, 0, 0, 0], sizes = [4, 8, 8, 4], strides = [1, 1, 1, 1]} : vector<4x10x10x4xbf16> to vector<4x8x8x4xbf16>
    %68 = vector.shape_cast %67 : vector<4x8x8x4xbf16> to vector<256x4xbf16>
    %c0_30 = arith.constant 0 : index
    %c72 = arith.constant 72 : index
    %69 = vector.load %arg6[%c0_30, %c72] : memref<256x108xbf16, #tpu.memory_space<vmem>>, vector<256x4xbf16>
    tpu.vector_store %arg6[%c0_30, %c72], %68 {strides = array<i32>} : memref<256x108xbf16, #tpu.memory_space<vmem>>, vector<256x4xbf16>,
    %70 = vector.extract_strided_slice %66 {offsets = [0, 0, 1, 0], sizes = [4, 8, 8, 4], strides = [1, 1, 1, 1]} : vector<4x10x10x4xbf16> to vector<4x8x8x4xbf16>
    %71 = vector.shape_cast %70 : vector<4x8x8x4xbf16> to vector<256x4xbf16>
    %c0_31 = arith.constant 0 : index
    %c76 = arith.constant 76 : index
    %72 = vector.load %arg6[%c0_31, %c76] : memref<256x108xbf16, #tpu.memory_space<vmem>>, vector<256x4xbf16>
    tpu.vector_store %arg6[%c0_31, %c76], %71 {strides = array<i32>} : memref<256x108xbf16, #tpu.memory_space<vmem>>, vector<256x4xbf16>,
    %73 = vector.extract_strided_slice %66 {offsets = [0, 0, 2, 0], sizes = [4, 8, 8, 4], strides = [1, 1, 1, 1]} : vector<4x10x10x4xbf16> to vector<4x8x8x4xbf16>
    %74 = vector.shape_cast %73 : vector<4x8x8x4xbf16> to vector<256x4xbf16>
    %c0_32 = arith.constant 0 : index
    %c80 = arith.constant 80 : index
    %75 = vector.load %arg6[%c0_32, %c80] : memref<256x108xbf16, #tpu.memory_space<vmem>>, vector<256x4xbf16>
    tpu.vector_store %arg6[%c0_32, %c80], %74 {strides = array<i32>} : memref<256x108xbf16, #tpu.memory_space<vmem>>, vector<256x4xbf16>,
    %76 = vector.extract_strided_slice %66 {offsets = [0, 1, 0, 0], sizes = [4, 8, 8, 4], strides = [1, 1, 1, 1]} : vector<4x10x10x4xbf16> to vector<4x8x8x4xbf16>
    %77 = vector.shape_cast %76 : vector<4x8x8x4xbf16> to vector<256x4xbf16>
    %c0_33 = arith.constant 0 : index
    %c84 = arith.constant 84 : index
    %78 = vector.load %arg6[%c0_33, %c84] : memref<256x108xbf16, #tpu.memory_space<vmem>>, vector<256x4xbf16>
    tpu.vector_store %arg6[%c0_33, %c84], %77 {strides = array<i32>} : memref<256x108xbf16, #tpu.memory_space<vmem>>, vector<256x4xbf16>,
    %79 = vector.extract_strided_slice %66 {offsets = [0, 1, 1, 0], sizes = [4, 8, 8, 4], strides = [1, 1, 1, 1]} : vector<4x10x10x4xbf16> to vector<4x8x8x4xbf16>
    %80 = vector.shape_cast %79 : vector<4x8x8x4xbf16> to vector<256x4xbf16>
    %c0_34 = arith.constant 0 : index
    %c88 = arith.constant 88 : index
    %81 = vector.load %arg6[%c0_34, %c88] : memref<256x108xbf16, #tpu.memory_space<vmem>>, vector<256x4xbf16>
    tpu.vector_store %arg6[%c0_34, %c88], %80 {strides = array<i32>} : memref<256x108xbf16, #tpu.memory_space<vmem>>, vector<256x4xbf16>,
    %82 = vector.extract_strided_slice %66 {offsets = [0, 1, 2, 0], sizes = [4, 8, 8, 4], strides = [1, 1, 1, 1]} : vector<4x10x10x4xbf16> to vector<4x8x8x4xbf16>
    %83 = vector.shape_cast %82 : vector<4x8x8x4xbf16> to vector<256x4xbf16>
    %c0_35 = arith.constant 0 : index
    %c92 = arith.constant 92 : index
    %84 = vector.load %arg6[%c0_35, %c92] : memref<256x108xbf16, #tpu.memory_space<vmem>>, vector<256x4xbf16>
    tpu.vector_store %arg6[%c0_35, %c92], %83 {strides = array<i32>} : memref<256x108xbf16, #tpu.memory_space<vmem>>, vector<256x4xbf16>,
    %85 = vector.extract_strided_slice %66 {offsets = [0, 2, 0, 0], sizes = [4, 8, 8, 4], strides = [1, 1, 1, 1]} : vector<4x10x10x4xbf16> to vector<4x8x8x4xbf16>
    %86 = vector.shape_cast %85 : vector<4x8x8x4xbf16> to vector<256x4xbf16>
    %c0_36 = arith.constant 0 : index
    %c96 = arith.constant 96 : index
    %87 = vector.load %arg6[%c0_36, %c96] : memref<256x108xbf16, #tpu.memory_space<vmem>>, vector<256x4xbf16>
    tpu.vector_store %arg6[%c0_36, %c96], %86 {strides = array<i32>} : memref<256x108xbf16, #tpu.memory_space<vmem>>, vector<256x4xbf16>,
    %88 = vector.extract_strided_slice %66 {offsets = [0, 2, 1, 0], sizes = [4, 8, 8, 4], strides = [1, 1, 1, 1]} : vector<4x10x10x4xbf16> to vector<4x8x8x4xbf16>
    %89 = vector.shape_cast %88 : vector<4x8x8x4xbf16> to vector<256x4xbf16>
    %c0_37 = arith.constant 0 : index
    %c100 = arith.constant 100 : index
    %90 = vector.load %arg6[%c0_37, %c100] : memref<256x108xbf16, #tpu.memory_space<vmem>>, vector<256x4xbf16>
    tpu.vector_store %arg6[%c0_37, %c100], %89 {strides = array<i32>} : memref<256x108xbf16, #tpu.memory_space<vmem>>, vector<256x4xbf16>,
    %91 = vector.extract_strided_slice %66 {offsets = [0, 2, 2, 0], sizes = [4, 8, 8, 4], strides = [1, 1, 1, 1]} : vector<4x10x10x4xbf16> to vector<4x8x8x4xbf16>
    %92 = vector.shape_cast %91 : vector<4x8x8x4xbf16> to vector<256x4xbf16>
    %c0_38 = arith.constant 0 : index
    %c104 = arith.constant 104 : index
    %93 = vector.load %arg6[%c0_38, %c104] : memref<256x108xbf16, #tpu.memory_space<vmem>>, vector<256x4xbf16>
    tpu.vector_store %arg6[%c0_38, %c104], %92 {strides = array<i32>} : memref<256x108xbf16, #tpu.memory_space<vmem>>, vector<256x4xbf16>,
    %c0_39 = arith.constant 0 : index
    %c0_40 = arith.constant 0 : index
    %94 = vector.load %arg3[%c0_39, %c0_40] : memref<108x128xbf16, #tpu.memory_space<vmem>>, vector<108x128xbf16>
    %c0_41 = arith.constant 0 : index
    %c0_42 = arith.constant 0 : index
    %95 = vector.load %arg4[%c0_41, %c0_42] : memref<1x128xf32, #tpu.memory_space<vmem>>, vector<1x128xf32>
    %c0_43 = arith.constant 0 : index
    %c0_44 = arith.constant 0 : index
    %96 = vector.load %arg6[%c0_43, %c0_44] : memref<256x108xbf16, #tpu.memory_space<vmem>>, vector<256x108xbf16>
    %cst = arith.constant dense<0.000000e+00> : vector<256x128xf32>
    %97 = tpu.matmul %96, %94, %cst {dimension_numbers = #tpu.dot_dimension_numbers<[1], [0], [0], [1], [0, 0, 1, 1], [], []>} : vector<256x108xbf16>, vector<108x128xbf16>, vector<256x128xf32> -> vector<256x128xf32>
    %98 = vector.broadcast %95 : vector<1x128xf32> to vector<256x128xf32>
    %99 = arith.addf %97, %98 : vector<256x128xf32>
    %cst_45 = arith.constant 0.000000e+00 : f32
    %100 = vector.broadcast %cst_45 : f32 to vector<256x128xf32>
    %101 = arith.maximumf %99, %100 : vector<256x128xf32>
    %c0_46 = arith.constant 0 : index
    %c0_47 = arith.constant 0 : index
    %c0_48 = arith.constant 0 : index
    %102 = vector.load %arg5[%c0_46, %c0_47, %c0_48] : memref<1x256x128xf32, #tpu.memory_space<vmem>>, vector<1x256x128xf32>
    %103 = vector.shape_cast %102 : vector<1x256x128xf32> to vector<256x128xf32>
    %104 = vector.shape_cast %101 : vector<256x128xf32> to vector<1x256x128xf32>
    tpu.vector_store %arg5[%c0_46, %c0_47, %c0_48], %104 {strides = array<i32>} : memref<1x256x128xf32, #tpu.memory_space<vmem>>, vector<1x256x128xf32>,
    return
  }
  func.func @transform_0(%arg0: i32, %arg1: i32) -> (i32, i32, i32, i32, i32) {
    %c0_i32 = arith.constant 0 : i32
    %c0_i32_0 = arith.constant 0 : i32
    %c0_i32_1 = arith.constant 0 : i32
    %c0_i32_2 = arith.constant 0 : i32
    %c0_i32_3 = arith.constant 0 : i32
    return %arg0, %c0_i32, %c0_i32_0, %c0_i32_1, %c0_i32_2 : i32, i32, i32, i32, i32
  }
  func.func @transform_1(%arg0: i32, %arg1: i32) -> (i32, i32) {
    %c0_i32 = arith.constant 0 : i32
    %c0_i32_0 = arith.constant 0 : i32
    %c0_i32_1 = arith.constant 0 : i32
    return %c0_i32, %c0_i32_0 : i32, i32
  }
  func.func @transform_2(%arg0: i32, %arg1: i32) -> (i32, i32) {
    %c0_i32 = arith.constant 0 : i32
    %c0_i32_0 = arith.constant 0 : i32
    %c0_i32_1 = arith.constant 0 : i32
    return %c0_i32, %c0_i32_0 : i32, i32
  }
  func.func @transform_3(%arg0: i32, %arg1: i32) -> (i32, i32, i32) {
    %c0_i32 = arith.constant 0 : i32
    %c0_i32_0 = arith.constant 0 : i32
    return %arg0, %arg1, %c0_i32 : i32, i32, i32
  }
}

</mosaic_0001>

<llo_original>
// kernel: tpu_custom_call.1
$region0: #{tpu_custom_call.1}
  #allocation0 [shape = 'u32[]', space=smem, size = 0x4, offset = 0x4, fixed_abs, tag = 'smem constant byte address 0x4 - core index']
  #allocation1 [shape = 'u32[144,128]{1,0:T(1,128)}', space=vmem, size = 0x12000, scoped, tag = 'internal scratch']
  #allocation2 [shape = 'bf16[256,108]{1,0:T(16,128)(2,1)}', space=vmem, size = 0x10000, scoped, tag = 'scratch operand']
  %s0 = inlined_call_operand.vmem [shape: bf16[2,10,10,10,4], index: 0, kind: input, shape index: {}]
  %s1 = inlined_call_operand.vmem [shape: bf16[108,128], index: 1, kind: input, shape index: {}]
  %s2 = inlined_call_operand.vmem [shape: f32[1,128], index: 2, kind: input, shape index: {}]
  %s3 = inlined_call_operand.hbm [shape: f32[2,512,128], index: 3, kind: output, shape index: {}]
  %s4 = sld [smem:[#allocation0]]
  $region45: #{tpu_custom_call.1} parent=0
    _
  %s6 = ssub.s32 1, %s4
  %s7 = scalar_select 0, %s6, %s4
  $region1: #{tpu_custom_call.1} parent=0
    #allocation3 [shape = 'u8[262144]{0}', space=vmem, size = 0x40000, scoped, tag = 'output window, operand 0']
    #allocation4 [shape = 's32[2]{0}', space=sflag, size = 0x8, scoped, tag = 'scoped memory for tpu_custom_call.1']
    %8 = vsyncpa [#allocation4], 0
    %s9 = scalar_lea.sflag [#allocation4], 1
    %10 = vsyncpa %s9, 0
    loop: start=0, step=1, limit=6
    $region2: #{tpu_custom_call.1} parent=1 // loop_pre_header
      _
    $region3: #{tpu_custom_call.1} parent=1 // loop_header
      %s12 = sphi 0, %s16
      %p13 = scmp.ge.s32.totalorder %s12, 6
      %s19 = sphi 0, %s31
      %s20 = sphi 0, %s27
      %s21 = sphi 0, %s19
      %s22 = sphi 0, %s20
      %s23 = sphi 0, %s21
      %s24 = sphi 0, %s22
      %s34 = sphi 0, %s36
      %s37 = sphi 0, %s34
      %s38 = sphi 0, %s37
      %s54 = sphi 0, %s38
      %s58 = sphi 0, %s58
      %s60 = sphi 0, %s58
      %s61 = sphi 0, %s60
      %s75 = sphi 0, %s61
      %s79 = sphi 0, %s79
      %s81 = sphi 0, %s79
      %s82 = sphi 0, %s81
      %s96 = sphi 0, %s82
      %s104 = sphi 0, %s106
      %s107 = sphi 0, %s104
      %s108 = sphi 0, %s107
      %s124 = sphi 0, %s108
    $region4: #{tpu_custom_call.1} parent=1 // loop_header_branch
      %15 = sbr.rel (%p13) target = $region8
    $region5: #{tpu_custom_call.1} parent=1 // loop_body
      %s17 = ssub.s32 %s12, 1
      %s18 = ssub.s32 %s12, 2
      %s25 = sadd.s32 1, %s20
      %p26 = scmp.ge.s32.totalorder %s25, 2
      %s27 = scalar_select %p26, 0, %s25
      %s28 = sadd.s32 1, %s19
      %s29 = scalar_select %p26, %s28, %s19
      %p30 = scmp.ge.s32.totalorder %s29, 2
      %s31 = scalar_select %p30, 0, %s29
      %s32 = ssub.s32 %s19, %s31
      %p33 = scmp.eq.s32.totalorder %s32, 0
      %s35 = sadd.s32 %s34, 1
      %s36 = scalar_select %p33, %s34, %s35
      %p39 = pneg %p33
      %p40 = scmp.eq.s32.totalorder %s12, 3
      %p41 = por %p39, %p40
      %p42 = scmp.ne.s32.totalorder %s34, %s37
      %p43 = scmp.eq.s32.totalorder %s12, 0
      %p44 = por %p42, %p43
      %p45 = scmp.ne.s32.totalorder %s34, %s37
      %p46 = scmp.eq.s32.totalorder %s17, 3
      %p47 = por %p45, %p46
      %p48 = scmp.ne.s32.totalorder %s37, %s38
      %p49 = scmp.eq.s32.totalorder %s17, 0
      %p50 = por %p48, %p49
      %p51 = scmp.ne.s32.totalorder %s37, %s38
      %p52 = scmp.eq.s32.totalorder %s18, 3
      %p53 = por %p51, %p52
      %p55 = scmp.ne.s32.totalorder %s38, %s54
      %p56 = scmp.eq.s32.totalorder %s18, 0
      %p57 = por %p55, %p56
      %s59 = sadd.s32 %s58, 1
      %p62 = scmp.eq.s32.totalorder %s12, 3
      %p63 = scmp.ne.s32.totalorder %s58, %s60
      %p64 = scmp.eq.s32.totalorder %s12, 0
      %p65 = por %p63, %p64
      %p66 = scmp.ne.s32.totalorder %s58, %s60
      %p67 = scmp.eq.s32.totalorder %s17, 3
      %p68 = por %p66, %p67
      %p69 = scmp.ne.s32.totalorder %s60, %s61
      %p70 = scmp.eq.s32.totalorder %s17, 0
      %p71 = por %p69, %p70
      %p72 = scmp.ne.s32.totalorder %s60, %s61
      %p73 = scmp.eq.s32.totalorder %s18, 3
      %p74 = por %p72, %p73
      %p76 = scmp.ne.s32.totalorder %s61, %s75
      %p77 = scmp.eq.s32.totalorder %s18, 0
      %p78 = por %p76, %p77
      %s80 = sadd.s32 %s79, 1
      %p83 = scmp.eq.s32.totalorder %s12, 3
      %p84 = scmp.ne.s32.totalorder %s79, %s81
      %p85 = scmp.eq.s32.totalorder %s12, 0
      %p86 = por %p84, %p85
      %p87 = scmp.ne.s32.totalorder %s79, %s81
      %p88 = scmp.eq.s32.totalorder %s17, 3
      %p89 = por %p87, %p88
      %p90 = scmp.ne.s32.totalorder %s81, %s82
      %p91 = scmp.eq.s32.totalorder %s17, 0
      %p92 = por %p90, %p91
      %p93 = scmp.ne.s32.totalorder %s81, %s82
      %p94 = scmp.eq.s32.totalorder %s18, 3
      %p95 = por %p93, %p94
      %p97 = scmp.ne.s32.totalorder %s82, %s96
      %p98 = scmp.eq.s32.totalorder %s18, 0
      %p99 = por %p97, %p98
      %s100 = ssub.s32 %s19, %s31
      %s101 = ssub.s32 %s20, %s27
      %s102 = sor.u32 %s100, %s101
      %p103 = scmp.eq.s32.totalorder %s102, 0
      %s105 = sadd.s32 %s104, 1
      %s106 = scalar_select %p103, %s104, %s105
      %p109 = pneg %p103
      %p110 = scmp.eq.s32.totalorder %s12, 3
      %p111 = por %p109, %p110
      %p112 = scmp.ne.s32.totalorder %s104, %s107
      %p113 = scmp.eq.s32.totalorder %s12, 0
      %p114 = por %p112, %p113
      %p115 = scmp.ne.s32.totalorder %s104, %s107
      %p116 = scmp.eq.s32.totalorder %s17, 3
      %p117 = por %p115, %p116
      %p118 = scmp.ne.s32.totalorder %s107, %s108
      %p119 = scmp.eq.s32.totalorder %s17, 0
      %p120 = por %p118, %p119
      %p121 = scmp.ne.s32.totalorder %s107, %s108
      %p122 = scmp.eq.s32.totalorder %s18, 3
      %p123 = por %p121, %p122
      %p125 = scmp.ne.s32.totalorder %s108, %s124
      %p126 = scmp.eq.s32.totalorder %s18, 0
      %p127 = por %p125, %p126
      %p128 = scmp.le.s32.totalorder 1, %s12
      %p129 = scmp.lt.s32.totalorder %s12, 5
      %p130 = pnand %p128, %p129
      %p131 = pneg %p130
      // Predicated region
      $region9: #{tpu_custom_call.1} parent=5 // pred_check
        _
      $region10: #{tpu_custom_call.1} parent=5 // pred_check_branch
        %133 = sbr.rel (%p130) target = $region12
      $region11: #{tpu_custom_call.1} parent=5 // pred_region
        %s134 = ssub.s32 %s12, 1
        // Predicated region
        $region13: #{tpu_custom_call.1} parent=11 // pred_check
          %p135 = pneg %p71
        $region14: #{tpu_custom_call.1} parent=11 // pred_check_branch
          %137 = sbr.rel (%p135) target = $region16
        $region15: #{tpu_custom_call.1} parent=11 // pred_region
          _
        $region16: #{tpu_custom_call.1} parent=11 // pred_fallthru
          _
        // Predicated region
        $region17: #{tpu_custom_call.1} parent=11 // pred_check
          %p138 = pneg %p92
        $region18: #{tpu_custom_call.1} parent=11 // pred_check_branch
          %140 = sbr.rel (%p138) target = $region20
        $region19: #{tpu_custom_call.1} parent=11 // pred_region
          _
        $region20: #{tpu_custom_call.1} parent=11 // pred_fallthru
          _
      $region12: #{tpu_custom_call.1} parent=5 // pred_fallthru
        _
      %p141 = scmp.lt.s32.totalorder %s12, 4
      // Predicated region
      $region21: #{tpu_custom_call.1} parent=5 // pred_check
        %p142 = pneg %p141
      $region22: #{tpu_custom_call.1} parent=5 // pred_check_branch
        %144 = sbr.rel (%p142) target = $region24
      $region23: #{tpu_custom_call.1} parent=5 // pred_region
        // Predicated region
        $region25: #{tpu_custom_call.1} parent=23 // pred_check
          %p145 = pneg %p44
        $region26: #{tpu_custom_call.1} parent=23 // pred_check_branch
          %147 = sbr.rel (%p145) target = $region28
        $region27: #{tpu_custom_call.1} parent=23 // pred_region
          %p148 = scmp.lt.s32.totalorder %s19, 1
          %s149 = scalar_select %p148, %s19, 1
          %s150 = smul.addr %s149, 200
          %s151 = smul.addr %s150, 4
          %s152 = scalar_lea.vmem %s0, %s151
        $region28: #{tpu_custom_call.1} parent=23 // pred_fallthru
          _
      $region24: #{tpu_custom_call.1} parent=5 // pred_fallthru
        _
      %p153 = scmp.le.s32.totalorder 1, %s12
      %p154 = scmp.lt.s32.totalorder %s12, 5
      %p155 = pnand %p153, %p154
      %p156 = pneg %p155
      // Predicated region
      $region29: #{tpu_custom_call.1} parent=5 // pred_check
        _
      $region30: #{tpu_custom_call.1} parent=5 // pred_check_branch
        %158 = sbr.rel (%p155) target = $region32
      $region31: #{tpu_custom_call.1} parent=5 // pred_region
        %s159 = ssub.s32 %s12, 1
        %p160 = scmp.lt.s32.totalorder %s21, 1
        %s161 = scalar_select %p160, %s21, 1
        %s162 = smul.addr %s161, 200
        %s163 = smul.addr %s162, 4
        %s164 = scalar_lea.vmem %s0, %s163
        %p165 = pneg %p50
        %p166 = pneg %p47
        %p167 = pneg %p71
        %p168 = pneg %p68
        %p169 = pneg %p92
        %p170 = pneg %p89
        %p171 = pneg %p120
        %p172 = pneg %p117
        %s173 = sand.u32 %s107, 1
        %s174 = scalar_lea.sflag [#allocation4], %s173
        %s175 = sand.u32 %s107, 1
        %s176 = smul.addr %s175, 256
        %s177 = scalar_lea.vmem [#allocation3], %s176
        %p178 = scmp.lt.s32.totalorder %s21, 1
        %s179 = scalar_select %p178, %s21, 1
        %s180 = smul.addr %s179, 200
        %s181 = smul.addr %s180, 4
        %s182 = scalar_lea.vmem %s0, %s181
        %s183 = smul.u32 32, %s22
        %s185 = smul.u32 %s22, 4
        %s186 = smul.u32 %s185, 20
        %s187 = smul.addr %s186, 4
        %s188 = scalar_lea.vmem %s182, %s187
        %v189 = vld [vmem:[%s188] sm:$0xf]
        %v190 = vld [vmem:[%s188 + $0x4] sm:$0x1]
        %v191 = vld [vmem:[%s188 + $0x8] sm:$0xf]
        %v192 = vld [vmem:[%s188 + $0xc] sm:$0x1]
        %v193 = vld [vmem:[%s188 + $0x10] sm:$0xf]
        %v194 = vld [vmem:[%s188 + $0x14] sm:$0x1]
        %v195 = vld [vmem:[%s188 + $0x18] sm:$0xf]
        %v196 = vld [vmem:[%s188 + $0x1c] sm:$0x1]
        %v197 = vld [vmem:[%s188 + $0x20] sm:$0xf]
        %v198 = vld [vmem:[%s188 + $0x24] sm:$0x1]
        %v199 = vld [vmem:[%s188 + $0x28] sm:$0xf]
        %v200 = vld [vmem:[%s188 + $0x2c] sm:$0x1]
        %v201 = vld [vmem:[%s188 + $0x30] sm:$0xf]
        %v202 = vld [vmem:[%s188 + $0x34] sm:$0x1]
        %v203 = vld [vmem:[%s188 + $0x38] sm:$0xf]
        %v204 = vld [vmem:[%s188 + $0x3c] sm:$0x1]
        %v205 = vld [vmem:[%s188 + $0x40] sm:$0xf]
        %v206 = vld [vmem:[%s188 + $0x44] sm:$0x1]
        %v207 = vld [vmem:[%s188 + $0x48] sm:$0xf]
        %v208 = vld [vmem:[%s188 + $0x4c] sm:$0x1]
        %v209 = vld [vmem:[%s188 + $0x50] sm:$0xf]
        %v210 = vld [vmem:[%s188 + $0x54] sm:$0x1]
        %v211 = vld [vmem:[%s188 + $0x58] sm:$0xf]
        %v212 = vld [vmem:[%s188 + $0x5c] sm:$0x1]
        %v213 = vld [vmem:[%s188 + $0x60] sm:$0xf]
        %v214 = vld [vmem:[%s188 + $0x64] sm:$0x1]
        %v215 = vld [vmem:[%s188 + $0x68] sm:$0xf]
        %v216 = vld [vmem:[%s188 + $0x6c] sm:$0x1]
        %v217 = vld [vmem:[%s188 + $0x70] sm:$0xf]
        %v218 = vld [vmem:[%s188 + $0x74] sm:$0x1]
        %v219 = vld [vmem:[%s188 + $0x78] sm:$0xf]
        %v220 = vld [vmem:[%s188 + $0x7c] sm:$0x1]
        %v221 = vld [vmem:[%s188 + $0x80] sm:$0xf]
        %v222 = vld [vmem:[%s188 + $0x84] sm:$0x1]
        %v223 = vld [vmem:[%s188 + $0x88] sm:$0xf]
        %v224 = vld [vmem:[%s188 + $0x8c] sm:$0x1]
        %v225 = vld [vmem:[%s188 + $0x90] sm:$0xf]
        %v226 = vld [vmem:[%s188 + $0x94] sm:$0x1]
        %v227 = vld [vmem:[%s188 + $0x98] sm:$0xf]
        %v228 = vld [vmem:[%s188 + $0x9c] sm:$0x1]
        %v229 = vld [vmem:[%s188 + $0xa0] sm:$0xf]
        %v230 = vld [vmem:[%s188 + $0xa4] sm:$0x1]
        %v231 = vld [vmem:[%s188 + $0xa8] sm:$0xf]
        %v232 = vld [vmem:[%s188 + $0xac] sm:$0x1]
        %v233 = vld [vmem:[%s188 + $0xb0] sm:$0xf]
        %v234 = vld [vmem:[%s188 + $0xb4] sm:$0x1]
        %v235 = vld [vmem:[%s188 + $0xb8] sm:$0xf]
        %v236 = vld [vmem:[%s188 + $0xbc] sm:$0x1]
        %v237 = vld [vmem:[%s188 + $0xc0] sm:$0xf]
        %v238 = vld [vmem:[%s188 + $0xc4] sm:$0x1]
        %v239 = vld [vmem:[%s188 + $0xc8] sm:$0xf]
        %v240 = vld [vmem:[%s188 + $0xcc] sm:$0x1]
        %v241 = vld [vmem:[%s188 + $0xd0] sm:$0xf]
        %v242 = vld [vmem:[%s188 + $0xd4] sm:$0x1]
        %v243 = vld [vmem:[%s188 + $0xd8] sm:$0xf]
        %v244 = vld [vmem:[%s188 + $0xdc] sm:$0x1]
        %v245 = vld [vmem:[%s188 + $0xe0] sm:$0xf]
        %v246 = vld [vmem:[%s188 + $0xe4] sm:$0x1]
        %v247 = vld [vmem:[%s188 + $0xe8] sm:$0xf]
        %v248 = vld [vmem:[%s188 + $0xec] sm:$0x1]
        %v249 = vld [vmem:[%s188 + $0xf0] sm:$0xf]
        %v250 = vld [vmem:[%s188 + $0xf4] sm:$0x1]
        %v251 = vld [vmem:[%s188 + $0xf8] sm:$0xf]
        %v252 = vld [vmem:[%s188 + $0xfc] sm:$0x1]
        %v253 = vld [vmem:[%s188 + $0x100] sm:$0xf]
        %v254 = vld [vmem:[%s188 + $0x104] sm:$0x1]
        %v255 = vld [vmem:[%s188 + $0x108] sm:$0xf]
        %v256 = vld [vmem:[%s188 + $0x10c] sm:$0x1]
        %v257 = vld [vmem:[%s188 + $0x110] sm:$0xf]
        %v258 = vld [vmem:[%s188 + $0x114] sm:$0x1]
        %v259 = vld [vmem:[%s188 + $0x118] sm:$0xf]
        %v260 = vld [vmem:[%s188 + $0x11c] sm:$0x1]
        %v261 = vld [vmem:[%s188 + $0x120] sm:$0xf]
        %v262 = vld [vmem:[%s188 + $0x124] sm:$0x1]
        %v263 = vld [vmem:[%s188 + $0x128] sm:$0xf]
        %v264 = vld [vmem:[%s188 + $0x12c] sm:$0x1]
        %v265 = vld [vmem:[%s188 + $0x130] sm:$0xf]
        %v266 = vld [vmem:[%s188 + $0x134] sm:$0x1]
        %v267 = vld [vmem:[%s188 + $0x138] sm:$0xf]
        %v268 = vld [vmem:[%s188 + $0x13c] sm:$0x1]
        %v301 = vunpack.c.l.b16 %v189
        %v302 = vunpack.c.l.b16 %v191
        %v303 = vunpack.c.l.b16 %v193
        %v304 = vunpack.c.l.b16 %v195
        %v305 = vunpack.c.l.b16 %v197
        %v306 = vunpack.c.l.b16 %v199
        %v307 = vunpack.c.l.b16 %v201
        %v308 = vunpack.c.l.b16 %v203
        %v309 = vunpack.c.l.b16 %v209
        %v310 = vunpack.c.l.b16 %v211
        %v311 = vunpack.c.l.b16 %v213
        %v312 = vunpack.c.l.b16 %v215
        %v313 = vunpack.c.l.b16 %v217
        %v314 = vunpack.c.l.b16 %v219
        %v315 = vunpack.c.l.b16 %v221
        %v316 = vunpack.c.l.b16 %v223
        %v317 = vunpack.c.l.b16 %v229
        %v318 = vunpack.c.l.b16 %v231
        %v319 = vunpack.c.l.b16 %v233
        %v320 = vunpack.c.l.b16 %v235
        %v321 = vunpack.c.l.b16 %v237
        %v322 = vunpack.c.l.b16 %v239
        %v323 = vunpack.c.l.b16 %v241
        %v324 = vunpack.c.l.b16 %v243
        %v325 = vunpack.c.l.b16 %v249
        %v326 = vunpack.c.l.b16 %v251
        %v327 = vunpack.c.l.b16 %v253
        %v328 = vunpack.c.l.b16 %v255
        %v329 = vunpack.c.l.b16 %v257
        %v330 = vunpack.c.l.b16 %v259
        %v331 = vunpack.c.l.b16 %v261
        %v332 = vunpack.c.l.b16 %v263
        %v333 = vpack.c.b16 %v302, %v301
        %v334 = vpack.c.b16 %v304, %v303
        %v335 = vpack.c.b16 %v306, %v305
        %v336 = vpack.c.b16 %v308, %v307
        %v337 = vpack.c.b16 %v310, %v309
        %v338 = vpack.c.b16 %v312, %v311
        %v339 = vpack.c.b16 %v314, %v313
        %v340 = vpack.c.b16 %v316, %v315
        %v341 = vpack.c.b16 %v318, %v317
        %v342 = vpack.c.b16 %v320, %v319
        %v343 = vpack.c.b16 %v322, %v321
        %v344 = vpack.c.b16 %v324, %v323
        %v345 = vpack.c.b16 %v326, %v325
        %v346 = vpack.c.b16 %v328, %v327
        %v347 = vpack.c.b16 %v330, %v329
        %v348 = vpack.c.b16 %v332, %v331
        %vm365 = vcmask 31744
        %366 = vst.msk [vmem:[#allocation2] sm:$0xff] %vm365, %v333
        %367 = vst.msk [vmem:[#allocation2 + $0x8] sm:$0xff] %vm365, %v334
        %368 = vst.msk [vmem:[#allocation2 + $0x10] sm:$0xff] %vm365, %v335
        %369 = vst.msk [vmem:[#allocation2 + $0x18] sm:$0xff] %vm365, %v336
        %370 = vst.msk [vmem:[#allocation2 + $0x20] sm:$0xff] %vm365, %v337
        %371 = vst.msk [vmem:[#allocation2 + $0x28] sm:$0xff] %vm365, %v338
        %372 = vst.msk [vmem:[#allocation2 + $0x30] sm:$0xff] %vm365, %v339
        %373 = vst.msk [vmem:[#allocation2 + $0x38] sm:$0xff] %vm365, %v340
        %374 = vst.msk [vmem:[#allocation2 + $0x40] sm:$0xff] %vm365, %v341
        %375 = vst.msk [vmem:[#allocation2 + $0x48] sm:$0xff] %vm365, %v342
        %376 = vst.msk [vmem:[#allocation2 + $0x50] sm:$0xff] %vm365, %v343
        %377 = vst.msk [vmem:[#allocation2 + $0x58] sm:$0xff] %vm365, %v344
        %378 = vst.msk [vmem:[#allocation2 + $0x60] sm:$0xff] %vm365, %v345
        %379 = vst.msk [vmem:[#allocation2 + $0x68] sm:$0xff] %vm365, %v346
        %380 = vst.msk [vmem:[#allocation2 + $0x70] sm:$0xff] %vm365, %v347
        %381 = vst.msk [vmem:[#allocation2 + $0x78] sm:$0xff] %vm365, %v348
        %vm382 = vsmask.f32 3328
        %vm383 = vsmask.f32 7440
        %vm384 = vmor %vm382, %vm383
        %v386 = vshrl.u32 %v189, 16
        %v388 = vrot.slane %v386, 4
        %v389 = vshll.u32 %v189, 16
        %v391 = vrot.slane %v389, 5
        %v392 = vor.u32 %v388, %v391
        %v393 = vrot.slane %v392, 4
        %v395 = vshll.u32 %v190, 16
        %v397 = vrot.slane %v395, 5
        %v398 = vsel %vm384, %v393, %v397
        %v400 = vshrl.u32 %v191, 16
        %v402 = vrot.slane %v400, 4
        %v403 = vshll.u32 %v191, 16
        %v405 = vrot.slane %v403, 5
        %v406 = vor.u32 %v402, %v405
        %v407 = vrot.slane %v406, 4
        %v409 = vshll.u32 %v192, 16
        %v411 = vrot.slane %v409, 5
        %v412 = vsel %vm384, %v407, %v411
        %v414 = vshrl.u32 %v193, 16
        %v416 = vrot.slane %v414, 4
        %v417 = vshll.u32 %v193, 16
        %v419 = vrot.slane %v417, 5
        %v420 = vor.u32 %v416, %v419
        %v421 = vrot.slane %v420, 4
        %v423 = vshll.u32 %v194, 16
        %v425 = vrot.slane %v423, 5
        %v426 = vsel %vm384, %v421, %v425
        %v428 = vshrl.u32 %v195, 16
        %v430 = vrot.slane %v428, 4
        %v431 = vshll.u32 %v195, 16
        %v433 = vrot.slane %v431, 5
        %v434 = vor.u32 %v430, %v433
        %v435 = vrot.slane %v434, 4
        %v437 = vshll.u32 %v196, 16
        %v439 = vrot.slane %v437, 5
        %v440 = vsel %vm384, %v435, %v439
        %v442 = vshrl.u32 %v197, 16
        %v444 = vrot.slane %v442, 4
        %v445 = vshll.u32 %v197, 16
        %v447 = vrot.slane %v445, 5
        %v448 = vor.u32 %v444, %v447
        %v449 = vrot.slane %v448, 4
        %v451 = vshll.u32 %v198, 16
        %v453 = vrot.slane %v451, 5
        %v454 = vsel %vm384, %v449, %v453
        %v456 = vshrl.u32 %v199, 16
        %v458 = vrot.slane %v456, 4
        %v459 = vshll.u32 %v199, 16
        %v461 = vrot.slane %v459, 5
        %v462 = vor.u32 %v458, %v461
        %v463 = vrot.slane %v462, 4
        %v465 = vshll.u32 %v200, 16
        %v467 = vrot.slane %v465, 5
        %v468 = vsel %vm384, %v463, %v467
        %v470 = vshrl.u32 %v201, 16
        %v472 = vrot.slane %v470, 4
        %v473 = vshll.u32 %v201, 16
        %v475 = vrot.slane %v473, 5
        %v476 = vor.u32 %v472, %v475
        %v477 = vrot.slane %v476, 4
        %v479 = vshll.u32 %v202, 16
        %v481 = vrot.slane %v479, 5
        %v482 = vsel %vm384, %v477, %v481
        %v484 = vshrl.u32 %v203, 16
        %v486 = vrot.slane %v484, 4
        %v487 = vshll.u32 %v203, 16
        %v489 = vrot.slane %v487, 5
        %v490 = vor.u32 %v486, %v489
        %v491 = vrot.slane %v490, 4
        %v493 = vshll.u32 %v204, 16
        %v495 = vrot.slane %v493, 5
        %v496 = vsel %vm384, %v491, %v495
        %v498 = vshrl.u32 %v209, 16
        %v500 = vrot.slane %v498, 4
        %v501 = vshll.u32 %v209, 16
        %v503 = vrot.slane %v501, 5
        %v504 = vor.u32 %v500, %v503
        %v505 = vrot.slane %v504, 4
        %v507 = vshll.u32 %v210, 16
        %v509 = vrot.slane %v507, 5
        %v510 = vsel %vm384, %v505, %v509
        %v512 = vshrl.u32 %v211, 16
        %v514 = vrot.slane %v512, 4
        %v515 = vshll.u32 %v211, 16
        %v517 = vrot.slane %v515, 5
        %v518 = vor.u32 %v514, %v517
        %v519 = vrot.slane %v518, 4
        %v521 = vshll.u32 %v212, 16
        %v523 = vrot.slane %v521, 5
        %v524 = vsel %vm384, %v519, %v523
        %v526 = vshrl.u32 %v213, 16
        %v528 = vrot.slane %v526, 4
        %v529 = vshll.u32 %v213, 16
        %v531 = vrot.slane %v529, 5
        %v532 = vor.u32 %v528, %v531
        %v533 = vrot.slane %v532, 4
        %v535 = vshll.u32 %v214, 16
        %v537 = vrot.slane %v535, 5
        %v538 = vsel %vm384, %v533, %v537
        %v540 = vshrl.u32 %v215, 16
        %v542 = vrot.slane %v540, 4
        %v543 = vshll.u32 %v215, 16
        %v545 = vrot.slane %v543, 5
        %v546 = vor.u32 %v542, %v545
        %v547 = vrot.slane %v546, 4
        %v549 = vshll.u32 %v216, 16
        %v551 = vrot.slane %v549, 5
        %v552 = vsel %vm384, %v547, %v551
        %v554 = vshrl.u32 %v217, 16
        %v556 = vrot.slane %v554, 4
        %v557 = vshll.u32 %v217, 16
        %v559 = vrot.slane %v557, 5
        %v560 = vor.u32 %v556, %v559
        %v561 = vrot.slane %v560, 4
        %v563 = vshll.u32 %v218, 16
        %v565 = vrot.slane %v563, 5
        %v566 = vsel %vm384, %v561, %v565
        %v568 = vshrl.u32 %v219, 16
        %v570 = vrot.slane %v568, 4
        %v571 = vshll.u32 %v219, 16
        %v573 = vrot.slane %v571, 5
        %v574 = vor.u32 %v570, %v573
        %v575 = vrot.slane %v574, 4
        %v577 = vshll.u32 %v220, 16
        %v579 = vrot.slane %v577, 5
        %v580 = vsel %vm384, %v575, %v579
        %v582 = vshrl.u32 %v221, 16
        %v584 = vrot.slane %v582, 4
        %v585 = vshll.u32 %v221, 16
        %v587 = vrot.slane %v585, 5
        %v588 = vor.u32 %v584, %v587
        %v589 = vrot.slane %v588, 4
        %v591 = vshll.u32 %v222, 16
        %v593 = vrot.slane %v591, 5
        %v594 = vsel %vm384, %v589, %v593
        %v596 = vshrl.u32 %v223, 16
        %v598 = vrot.slane %v596, 4
        %v599 = vshll.u32 %v223, 16
        %v601 = vrot.slane %v599, 5
        %v602 = vor.u32 %v598, %v601
        %v603 = vrot.slane %v602, 4
        %v605 = vshll.u32 %v224, 16
        %v607 = vrot.slane %v605, 5
        %v608 = vsel %vm384, %v603, %v607
        %v610 = vshrl.u32 %v229, 16
        %v612 = vrot.slane %v610, 4
        %v613 = vshll.u32 %v229, 16
        %v615 = vrot.slane %v613, 5
        %v616 = vor.u32 %v612, %v615
        %v617 = vrot.slane %v616, 4
        %v619 = vshll.u32 %v230, 16
        %v621 = vrot.slane %v619, 5
        %v622 = vsel %vm384, %v617, %v621
        %v624 = vshrl.u32 %v231, 16
        %v626 = vrot.slane %v624, 4
        %v627 = vshll.u32 %v231, 16
        %v629 = vrot.slane %v627, 5
        %v630 = vor.u32 %v626, %v629
        %v631 = vrot.slane %v630, 4
        %v633 = vshll.u32 %v232, 16
        %v635 = vrot.slane %v633, 5
        %v636 = vsel %vm384, %v631, %v635
        %v638 = vshrl.u32 %v233, 16
        %v640 = vrot.slane %v638, 4
        %v641 = vshll.u32 %v233, 16
        %v643 = vrot.slane %v641, 5
        %v644 = vor.u32 %v640, %v643
        %v645 = vrot.slane %v644, 4
        %v647 = vshll.u32 %v234, 16
        %v649 = vrot.slane %v647, 5
        %v650 = vsel %vm384, %v645, %v649
        %v652 = vshrl.u32 %v235, 16
        %v654 = vrot.slane %v652, 4
        %v655 = vshll.u32 %v235, 16
        %v657 = vrot.slane %v655, 5
        %v658 = vor.u32 %v654, %v657
        %v659 = vrot.slane %v658, 4
        %v661 = vshll.u32 %v236, 16
        %v663 = vrot.slane %v661, 5
        %v664 = vsel %vm384, %v659, %v663
        %v666 = vshrl.u32 %v237, 16
        %v668 = vrot.slane %v666, 4
        %v669 = vshll.u32 %v237, 16
        %v671 = vrot.slane %v669, 5
        %v672 = vor.u32 %v668, %v671
        %v673 = vrot.slane %v672, 4
        %v675 = vshll.u32 %v238, 16
        %v677 = vrot.slane %v675, 5
        %v678 = vsel %vm384, %v673, %v677
        %v680 = vshrl.u32 %v239, 16
        %v682 = vrot.slane %v680, 4
        %v683 = vshll.u32 %v239, 16
        %v685 = vrot.slane %v683, 5
        %v686 = vor.u32 %v682, %v685
        %v687 = vrot.slane %v686, 4
        %v689 = vshll.u32 %v240, 16
        %v691 = vrot.slane %v689, 5
        %v692 = vsel %vm384, %v687, %v691
        %v694 = vshrl.u32 %v241, 16
        %v696 = vrot.slane %v694, 4
        %v697 = vshll.u32 %v241, 16
        %v699 = vrot.slane %v697, 5
        %v700 = vor.u32 %v696, %v699
        %v701 = vrot.slane %v700, 4
        %v703 = vshll.u32 %v242, 16
        %v705 = vrot.slane %v703, 5
        %v706 = vsel %vm384, %v701, %v705
        %v708 = vshrl.u32 %v243, 16
        %v710 = vrot.slane %v708, 4
        %v711 = vshll.u32 %v243, 16
        %v713 = vrot.slane %v711, 5
        %v714 = vor.u32 %v710, %v713
        %v715 = vrot.slane %v714, 4
        %v717 = vshll.u32 %v244, 16
        %v719 = vrot.slane %v717, 5
        %v720 = vsel %vm384, %v715, %v719
        %v722 = vshrl.u32 %v249, 16
        %v724 = vrot.slane %v722, 4
        %v725 = vshll.u32 %v249, 16
        %v727 = vrot.slane %v725, 5
        %v728 = vor.u32 %v724, %v727
        %v729 = vrot.slane %v728, 4
        %v731 = vshll.u32 %v250, 16
        %v733 = vrot.slane %v731, 5
        %v734 = vsel %vm384, %v729, %v733
        %v736 = vshrl.u32 %v251, 16
        %v738 = vrot.slane %v736, 4
        %v739 = vshll.u32 %v251, 16
        %v741 = vrot.slane %v739, 5
        %v742 = vor.u32 %v738, %v741
        %v743 = vrot.slane %v742, 4
        %v745 = vshll.u32 %v252, 16
        %v747 = vrot.slane %v745, 5
        %v748 = vsel %vm384, %v743, %v747
        %v750 = vshrl.u32 %v253, 16
        %v752 = vrot.slane %v750, 4
        %v753 = vshll.u32 %v253, 16
        %v755 = vrot.slane %v753, 5
        %v756 = vor.u32 %v752, %v755
        %v757 = vrot.slane %v756, 4
        %v759 = vshll.u32 %v254, 16
        %v761 = vrot.slane %v759, 5
        %v762 = vsel %vm384, %v757, %v761
        %v764 = vshrl.u32 %v255, 16
        %v766 = vrot.slane %v764, 4
        %v767 = vshll.u32 %v255, 16
        %v769 = vrot.slane %v767, 5
        %v770 = vor.u32 %v766, %v769
        %v771 = vrot.slane %v770, 4
        %v773 = vshll.u32 %v256, 16
        %v775 = vrot.slane %v773, 5
        %v776 = vsel %vm384, %v771, %v775
        %v778 = vshrl.u32 %v257, 16
        %v780 = vrot.slane %v778, 4
        %v781 = vshll.u32 %v257, 16
        %v783 = vrot.slane %v781, 5
        %v784 = vor.u32 %v780, %v783
        %v785 = vrot.slane %v784, 4
        %v787 = vshll.u32 %v258, 16
        %v789 = vrot.slane %v787, 5
        %v790 = vsel %vm384, %v785, %v789
        %v792 = vshrl.u32 %v259, 16
        %v794 = vrot.slane %v792, 4
        %v795 = vshll.u32 %v259, 16
        %v797 = vrot.slane %v795, 5
        %v798 = vor.u32 %v794, %v797
        %v799 = vrot.slane %v798, 4
        %v801 = vshll.u32 %v260, 16
        %v803 = vrot.slane %v801, 5
        %v804 = vsel %vm384, %v799, %v803
        %v806 = vshrl.u32 %v261, 16
        %v808 = vrot.slane %v806, 4
        %v809 = vshll.u32 %v261, 16
        %v811 = vrot.slane %v809, 5
        %v812 = vor.u32 %v808, %v811
        %v813 = vrot.slane %v812, 4
        %v815 = vshll.u32 %v262, 16
        %v817 = vrot.slane %v815, 5
        %v818 = vsel %vm384, %v813, %v817
        %v820 = vshrl.u32 %v263, 16
        %v822 = vrot.slane %v820, 4
        %v823 = vshll.u32 %v263, 16
        %v825 = vrot.slane %v823, 5
        %v826 = vor.u32 %v822, %v825
        %v827 = vrot.slane %v826, 4
        %v829 = vshll.u32 %v264, 16
        %v831 = vrot.slane %v829, 5
        %v832 = vsel %vm384, %v827, %v831
        %v833 = vunpack.c.l.b16 %v398
        %v834 = vunpack.c.l.b16 %v412
        %v835 = vunpack.c.l.b16 %v426
        %v836 = vunpack.c.l.b16 %v440
        %v837 = vunpack.c.l.b16 %v454
        %v838 = vunpack.c.l.b16 %v468
        %v839 = vunpack.c.l.b16 %v482
        %v840 = vunpack.c.l.b16 %v496
        %v841 = vunpack.c.l.b16 %v510
        %v842 = vunpack.c.l.b16 %v524
        %v843 = vunpack.c.l.b16 %v538
        %v844 = vunpack.c.l.b16 %v552
        %v845 = vunpack.c.l.b16 %v566
        %v846 = vunpack.c.l.b16 %v580
        %v847 = vunpack.c.l.b16 %v594
        %v848 = vunpack.c.l.b16 %v608
        %v849 = vunpack.c.l.b16 %v622
        %v850 = vunpack.c.l.b16 %v636
        %v851 = vunpack.c.l.b16 %v650
        %v852 = vunpack.c.l.b16 %v664
        %v853 = vunpack.c.l.b16 %v678
        %v854 = vunpack.c.l.b16 %v692
        %v855 = vunpack.c.l.b16 %v706
        %v856 = vunpack.c.l.b16 %v720
        %v857 = vunpack.c.l.b16 %v734
        %v858 = vunpack.c.l.b16 %v748
        %v859 = vunpack.c.l.b16 %v762
        %v860 = vunpack.c.l.b16 %v776
        %v861 = vunpack.c.l.b16 %v790
        %v862 = vunpack.c.l.b16 %v804
        %v863 = vunpack.c.l.b16 %v818
        %v864 = vunpack.c.l.b16 %v832
        %v865 = vpack.c.b16 %v834, %v833
        %v866 = vpack.c.b16 %v836, %v835
        %v867 = vpack.c.b16 %v838, %v837
        %v868 = vpack.c.b16 %v840, %v839
        %v869 = vpack.c.b16 %v842, %v841
        %v870 = vpack.c.b16 %v844, %v843
        %v871 = vpack.c.b16 %v846, %v845
        %v872 = vpack.c.b16 %v848, %v847
        %v873 = vpack.c.b16 %v850, %v849
        %v874 = vpack.c.b16 %v852, %v851
        %v875 = vpack.c.b16 %v854, %v853
        %v876 = vpack.c.b16 %v856, %v855
        %v877 = vpack.c.b16 %v858, %v857
        %v878 = vpack.c.b16 %v860, %v859
        %v879 = vpack.c.b16 %v862, %v861
        %v880 = vpack.c.b16 %v864, %v863
        %881 = vrot.lane.b32.xlu0 %v865, 4
        %v882 = vpop.permute.xlu0 %881
        %883 = vrot.lane.b32.xlu0 %v866, 4
        %v884 = vpop.permute.xlu0 %883
        %885 = vrot.lane.b32.xlu0 %v867, 4
        %v886 = vpop.permute.xlu0 %885
        %887 = vrot.lane.b32.xlu0 %v868, 4
        %v888 = vpop.permute.xlu0 %887
        %889 = vrot.lane.b32.xlu0 %v869, 4
        %v890 = vpop.permute.xlu0 %889
        %891 = vrot.lane.b32.xlu0 %v870, 4
        %v892 = vpop.permute.xlu0 %891
        %893 = vrot.lane.b32.xlu0 %v871, 4
        %v894 = vpop.permute.xlu0 %893
        %895 = vrot.lane.b32.xlu0 %v872, 4
        %v896 = vpop.permute.xlu0 %895
        %897 = vrot.lane.b32.xlu0 %v873, 4
        %v898 = vpop.permute.xlu0 %897
        %899 = vrot.lane.b32.xlu0 %v874, 4
        %v900 = vpop.permute.xlu0 %899
        %901 = vrot.lane.b32.xlu0 %v875, 4
        %v902 = vpop.permute.xlu0 %901
        %903 = vrot.lane.b32.xlu0 %v876, 4
        %v904 = vpop.permute.xlu0 %903
        %905 = vrot.lane.b32.xlu0 %v877, 4
        %v906 = vpop.permute.xlu0 %905
        %907 = vrot.lane.b32.xlu0 %v878, 4
        %v908 = vpop.permute.xlu0 %907
        %909 = vrot.lane.b32.xlu0 %v879, 4
        %v910 = vpop.permute.xlu0 %909
        %911 = vrot.lane.b32.xlu0 %v880, 4
        %v912 = vpop.permute.xlu0 %911
        %vm929 = vcmask 64544
        %930 = vst.msk [vmem:[#allocation2] sm:$0xff] %vm929, %v882
        %931 = vst.msk [vmem:[#allocation2 + $0x8] sm:$0xff] %vm929, %v884
        %932 = vst.msk [vmem:[#allocation2 + $0x10] sm:$0xff] %vm929, %v886
        %933 = vst.msk [vmem:[#allocation2 + $0x18] sm:$0xff] %vm929, %v888
        %934 = vst.msk [vmem:[#allocation2 + $0x20] sm:$0xff] %vm929, %v890
        %935 = vst.msk [vmem:[#allocation2 + $0x28] sm:$0xff] %vm929, %v892
        %936 = vst.msk [vmem:[#allocation2 + $0x30] sm:$0xff] %vm929, %v894
        %937 = vst.msk [vmem:[#allocation2 + $0x38] sm:$0xff] %vm929, %v896
        %938 = vst.msk [vmem:[#allocation2 + $0x40] sm:$0xff] %vm929, %v898
        %939 = vst.msk [vmem:[#allocation2 + $0x48] sm:$0xff] %vm929, %v900
        %940 = vst.msk [vmem:[#allocation2 + $0x50] sm:$0xff] %vm929, %v902
        %941 = vst.msk [vmem:[#allocation2 + $0x58] sm:$0xff] %vm929, %v904
        %942 = vst.msk [vmem:[#allocation2 + $0x60] sm:$0xff] %vm929, %v906
        %943 = vst.msk [vmem:[#allocation2 + $0x68] sm:$0xff] %vm929, %v908
        %944 = vst.msk [vmem:[#allocation2 + $0x70] sm:$0xff] %vm929, %v910
        %945 = vst.msk [vmem:[#allocation2 + $0x78] sm:$0xff] %vm929, %v912
        %vm978 = vcmask 1042432
        %vm979 = vcmask 1046532
        %vm980 = vmor %vm978, %vm979
        %v981 = vrot.slane %v189, 5
        %v982 = vrot.slane %v981, 4
        %v983 = vrot.slane %v190, 5
        %v984 = vsel %vm980, %v982, %v983
        %v985 = vrot.slane %v191, 5
        %v986 = vrot.slane %v985, 4
        %v987 = vrot.slane %v192, 5
        %v988 = vsel %vm980, %v986, %v987
        %v989 = vrot.slane %v193, 5
        %v990 = vrot.slane %v989, 4
        %v991 = vrot.slane %v194, 5
        %v992 = vsel %vm980, %v990, %v991
        %v993 = vrot.slane %v195, 5
        %v994 = vrot.slane %v993, 4
        %v995 = vrot.slane %v196, 5
        %v996 = vsel %vm980, %v994, %v995
        %v997 = vrot.slane %v197, 5
        %v998 = vrot.slane %v997, 4
        %v999 = vrot.slane %v198, 5
        %v1000 = vsel %vm980, %v998, %v999
        %v1001 = vrot.slane %v199, 5
        %v1002 = vrot.slane %v1001, 4
        %v1003 = vrot.slane %v200, 5
        %v1004 = vsel %vm980, %v1002, %v1003
        %v1005 = vrot.slane %v201, 5
        %v1006 = vrot.slane %v1005, 4
        %v1007 = vrot.slane %v202, 5
        %v1008 = vsel %vm980, %v1006, %v1007
        %v1009 = vrot.slane %v203, 5
        %v1010 = vrot.slane %v1009, 4
        %v1011 = vrot.slane %v204, 5
        %v1012 = vsel %vm980, %v1010, %v1011
        %v1013 = vrot.slane %v209, 5
        %v1014 = vrot.slane %v1013, 4
        %v1015 = vrot.slane %v210, 5
        %v1016 = vsel %vm980, %v1014, %v1015
        %v1017 = vrot.slane %v211, 5
        %v1018 = vrot.slane %v1017, 4
        %v1019 = vrot.slane %v212, 5
        %v1020 = vsel %vm980, %v1018, %v1019
        %v1021 = vrot.slane %v213, 5
        %v1022 = vrot.slane %v1021, 4
        %v1023 = vrot.slane %v214, 5
        %v1024 = vsel %vm980, %v1022, %v1023
        %v1025 = vrot.slane %v215, 5
        %v1026 = vrot.slane %v1025, 4
        %v1027 = vrot.slane %v216, 5
        %v1028 = vsel %vm980, %v1026, %v1027
        %v1029 = vrot.slane %v217, 5
        %v1030 = vrot.slane %v1029, 4
        %v1031 = vrot.slane %v218, 5
        %v1032 = vsel %vm980, %v1030, %v1031
        %v1033 = vrot.slane %v219, 5
        %v1034 = vrot.slane %v1033, 4
        %v1035 = vrot.slane %v220, 5
        %v1036 = vsel %vm980, %v1034, %v1035
        %v1037 = vrot.slane %v221, 5
        %v1038 = vrot.slane %v1037, 4
        %v1039 = vrot.slane %v222, 5
        %v1040 = vsel %vm980, %v1038, %v1039
        %v1041 = vrot.slane %v223, 5
        %v1042 = vrot.slane %v1041, 4
        %v1043 = vrot.slane %v224, 5
        %v1044 = vsel %vm980, %v1042, %v1043
        %v1045 = vrot.slane %v229, 5
        %v1046 = vrot.slane %v1045, 4
        %v1047 = vrot.slane %v230, 5
        %v1048 = vsel %vm980, %v1046, %v1047
        %v1049 = vrot.slane %v231, 5
        %v1050 = vrot.slane %v1049, 4
        %v1051 = vrot.slane %v232, 5
        %v1052 = vsel %vm980, %v1050, %v1051
        %v1053 = vrot.slane %v233, 5
        %v1054 = vrot.slane %v1053, 4
        %v1055 = vrot.slane %v234, 5
        %v1056 = vsel %vm980, %v1054, %v1055
        %v1057 = vrot.slane %v235, 5
        %v1058 = vrot.slane %v1057, 4
        %v1059 = vrot.slane %v236, 5
        %v1060 = vsel %vm980, %v1058, %v1059
        %v1061 = vrot.slane %v237, 5
        %v1062 = vrot.slane %v1061, 4
        %v1063 = vrot.slane %v238, 5
        %v1064 = vsel %vm980, %v1062, %v1063
        %v1065 = vrot.slane %v239, 5
        %v1066 = vrot.slane %v1065, 4
        %v1067 = vrot.slane %v240, 5
        %v1068 = vsel %vm980, %v1066, %v1067
        %v1069 = vrot.slane %v241, 5
        %v1070 = vrot.slane %v1069, 4
        %v1071 = vrot.slane %v242, 5
        %v1072 = vsel %vm980, %v1070, %v1071
        %v1073 = vrot.slane %v243, 5
        %v1074 = vrot.slane %v1073, 4
        %v1075 = vrot.slane %v244, 5
        %v1076 = vsel %vm980, %v1074, %v1075
        %v1077 = vrot.slane %v249, 5
        %v1078 = vrot.slane %v1077, 4
        %v1079 = vrot.slane %v250, 5
        %v1080 = vsel %vm980, %v1078, %v1079
        %v1081 = vrot.slane %v251, 5
        %v1082 = vrot.slane %v1081, 4
        %v1083 = vrot.slane %v252, 5
        %v1084 = vsel %vm980, %v1082, %v1083
        %v1085 = vrot.slane %v253, 5
        %v1086 = vrot.slane %v1085, 4
        %v1087 = vrot.slane %v254, 5
        %v1088 = vsel %vm980, %v1086, %v1087
        %v1089 = vrot.slane %v255, 5
        %v1090 = vrot.slane %v1089, 4
        %v1091 = vrot.slane %v256, 5
        %v1092 = vsel %vm980, %v1090, %v1091
        %v1093 = vrot.slane %v257, 5
        %v1094 = vrot.slane %v1093, 4
        %v1095 = vrot.slane %v258, 5
        %v1096 = vsel %vm980, %v1094, %v1095
        %v1097 = vrot.slane %v259, 5
        %v1098 = vrot.slane %v1097, 4
        %v1099 = vrot.slane %v260, 5
        %v1100 = vsel %vm980, %v1098, %v1099
        %v1101 = vrot.slane %v261, 5
        %v1102 = vrot.slane %v1101, 4
        %v1103 = vrot.slane %v262, 5
        %v1104 = vsel %vm980, %v1102, %v1103
        %v1105 = vrot.slane %v263, 5
        %v1106 = vrot.slane %v1105, 4
        %v1107 = vrot.slane %v264, 5
        %v1108 = vsel %vm980, %v1106, %v1107
        %v1109 = vunpack.c.l.b16 %v984
        %v1110 = vunpack.c.l.b16 %v988
        %v1111 = vunpack.c.l.b16 %v992
        %v1112 = vunpack.c.l.b16 %v996
        %v1113 = vunpack.c.l.b16 %v1000
        %v1114 = vunpack.c.l.b16 %v1004
        %v1115 = vunpack.c.l.b16 %v1008
        %v1116 = vunpack.c.l.b16 %v1012
        %v1117 = vunpack.c.l.b16 %v1016
        %v1118 = vunpack.c.l.b16 %v1020
        %v1119 = vunpack.c.l.b16 %v1024
        %v1120 = vunpack.c.l.b16 %v1028
        %v1121 = vunpack.c.l.b16 %v1032
        %v1122 = vunpack.c.l.b16 %v1036
        %v1123 = vunpack.c.l.b16 %v1040
        %v1124 = vunpack.c.l.b16 %v1044
        %v1125 = vunpack.c.l.b16 %v1048
        %v1126 = vunpack.c.l.b16 %v1052
        %v1127 = vunpack.c.l.b16 %v1056
        %v1128 = vunpack.c.l.b16 %v1060
        %v1129 = vunpack.c.l.b16 %v1064
        %v1130 = vunpack.c.l.b16 %v1068
        %v1131 = vunpack.c.l.b16 %v1072
        %v1132 = vunpack.c.l.b16 %v1076
        %v1133 = vunpack.c.l.b16 %v1080
        %v1134 = vunpack.c.l.b16 %v1084
        %v1135 = vunpack.c.l.b16 %v1088
        %v1136 = vunpack.c.l.b16 %v1092
        %v1137 = vunpack.c.l.b16 %v1096
        %v1138 = vunpack.c.l.b16 %v1100
        %v1139 = vunpack.c.l.b16 %v1104
        %v1140 = vunpack.c.l.b16 %v1108
        %v1141 = vpack.c.b16 %v1110, %v1109
        %v1142 = vpack.c.b16 %v1112, %v1111
        %v1143 = vpack.c.b16 %v1114, %v1113
        %v1144 = vpack.c.b16 %v1116, %v1115
        %v1145 = vpack.c.b16 %v1118, %v1117
        %v1146 = vpack.c.b16 %v1120, %v1119
        %v1147 = vpack.c.b16 %v1122, %v1121
        %v1148 = vpack.c.b16 %v1124, %v1123
        %v1149 = vpack.c.b16 %v1126, %v1125
        %v1150 = vpack.c.b16 %v1128, %v1127
        %v1151 = vpack.c.b16 %v1130, %v1129
        %v1152 = vpack.c.b16 %v1132, %v1131
        %v1153 = vpack.c.b16 %v1134, %v1133
        %v1154 = vpack.c.b16 %v1136, %v1135
        %v1155 = vpack.c.b16 %v1138, %v1137
        %v1156 = vpack.c.b16 %v1140, %v1139
        %1157 = vrot.lane.b32.xlu0 %v1141, 8
        %v1158 = vpop.permute.xlu0 %1157
        %1159 = vrot.lane.b32.xlu0 %v1142, 8
        %v1160 = vpop.permute.xlu0 %1159
        %1161 = vrot.lane.b32.xlu0 %v1143, 8
        %v1162 = vpop.permute.xlu0 %1161
        %1163 = vrot.lane.b32.xlu0 %v1144, 8
        %v1164 = vpop.permute.xlu0 %1163
        %1165 = vrot.lane.b32.xlu0 %v1145, 8
        %v1166 = vpop.permute.xlu0 %1165
        %1167 = vrot.lane.b32.xlu0 %v1146, 8
        %v1168 = vpop.permute.xlu0 %1167
        %1169 = vrot.lane.b32.xlu0 %v1147, 8
        %v1170 = vpop.permute.xlu0 %1169
        %1171 = vrot.lane.b32.xlu0 %v1148, 8
        %v1172 = vpop.permute.xlu0 %1171
        %1173 = vrot.lane.b32.xlu0 %v1149, 8
        %v1174 = vpop.permute.xlu0 %1173
        %1175 = vrot.lane.b32.xlu0 %v1150, 8
        %v1176 = vpop.permute.xlu0 %1175
        %1177 = vrot.lane.b32.xlu0 %v1151, 8
        %v1178 = vpop.permute.xlu0 %1177
        %1179 = vrot.lane.b32.xlu0 %v1152, 8
        %v1180 = vpop.permute.xlu0 %1179
        %1181 = vrot.lane.b32.xlu0 %v1153, 8
        %v1182 = vpop.permute.xlu0 %1181
        %1183 = vrot.lane.b32.xlu0 %v1154, 8
        %v1184 = vpop.permute.xlu0 %1183
        %1185 = vrot.lane.b32.xlu0 %v1155, 8
        %v1186 = vpop.permute.xlu0 %1185
        %1187 = vrot.lane.b32.xlu0 %v1156, 8
        %v1188 = vpop.permute.xlu0 %1187
        %vm1205 = vcmask 97344
        %1206 = vst.msk [vmem:[#allocation2] sm:$0xff] %vm1205, %v1158
        %1207 = vst.msk [vmem:[#allocation2 + $0x8] sm:$0xff] %vm1205, %v1160
        %1208 = vst.msk [vmem:[#allocation2 + $0x10] sm:$0xff] %vm1205, %v1162
        %1209 = vst.msk [vmem:[#allocation2 + $0x18] sm:$0xff] %vm1205, %v1164
        %1210 = vst.msk [vmem:[#allocation2 + $0x20] sm:$0xff] %vm1205, %v1166
        %1211 = vst.msk [vmem:[#allocation2 + $0x28] sm:$0xff] %vm1205, %v1168
        %1212 = vst.msk [vmem:[#allocation2 + $0x30] sm:$0xff] %vm1205, %v1170
        %1213 = vst.msk [vmem:[#allocation2 + $0x38] sm:$0xff] %vm1205, %v1172
        %1214 = vst.msk [vmem:[#allocation2 + $0x40] sm:$0xff] %vm1205, %v1174
        %1215 = vst.msk [vmem:[#allocation2 + $0x48] sm:$0xff] %vm1205, %v1176
        %1216 = vst.msk [vmem:[#allocation2 + $0x50] sm:$0xff] %vm1205, %v1178
        %1217 = vst.msk [vmem:[#allocation2 + $0x58] sm:$0xff] %vm1205, %v1180
        %1218 = vst.msk [vmem:[#allocation2 + $0x60] sm:$0xff] %vm1205, %v1182
        %1219 = vst.msk [vmem:[#allocation2 + $0x68] sm:$0xff] %vm1205, %v1184
        %1220 = vst.msk [vmem:[#allocation2 + $0x70] sm:$0xff] %vm1205, %v1186
        %1221 = vst.msk [vmem:[#allocation2 + $0x78] sm:$0xff] %vm1205, %v1188
        %v1226 = vunpack.c.l.b16 %v205
        %v1227 = vunpack.c.l.b16 %v225
        %v1228 = vunpack.c.l.b16 %v245
        %v1229 = vunpack.c.l.b16 %v265
        %v1230 = vpack.c.b16 %v303, %v302
        %v1231 = vpack.c.b16 %v305, %v304
        %v1232 = vpack.c.b16 %v307, %v306
        %v1233 = vpack.c.b16 %v1226, %v308
        %v1234 = vpack.c.b16 %v311, %v310
        %v1235 = vpack.c.b16 %v313, %v312
        %v1236 = vpack.c.b16 %v315, %v314
        %v1237 = vpack.c.b16 %v1227, %v316
        %v1238 = vpack.c.b16 %v319, %v318
        %v1239 = vpack.c.b16 %v321, %v320
        %v1240 = vpack.c.b16 %v323, %v322
        %v1241 = vpack.c.b16 %v1228, %v324
        %v1242 = vpack.c.b16 %v327, %v326
        %v1243 = vpack.c.b16 %v329, %v328
        %v1244 = vpack.c.b16 %v331, %v330
        %v1245 = vpack.c.b16 %v1229, %v332
        %1246 = vrot.lane.b32.xlu0 %v1230, 12
        %v1247 = vpop.permute.xlu0 %1246
        %1248 = vrot.lane.b32.xlu0 %v1231, 12
        %v1249 = vpop.permute.xlu0 %1248
        %1250 = vrot.lane.b32.xlu0 %v1232, 12
        %v1251 = vpop.permute.xlu0 %1250
        %1252 = vrot.lane.b32.xlu0 %v1233, 12
        %v1253 = vpop.permute.xlu0 %1252
        %1254 = vrot.lane.b32.xlu0 %v1234, 12
        %v1255 = vpop.permute.xlu0 %1254
        %1256 = vrot.lane.b32.xlu0 %v1235, 12
        %v1257 = vpop.permute.xlu0 %1256
        %1258 = vrot.lane.b32.xlu0 %v1236, 12
        %v1259 = vpop.permute.xlu0 %1258
        %1260 = vrot.lane.b32.xlu0 %v1237, 12
        %v1261 = vpop.permute.xlu0 %1260
        %1262 = vrot.lane.b32.xlu0 %v1238, 12
        %v1263 = vpop.permute.xlu0 %1262
        %1264 = vrot.lane.b32.xlu0 %v1239, 12
        %v1265 = vpop.permute.xlu0 %1264
        %1266 = vrot.lane.b32.xlu0 %v1240, 12
        %v1267 = vpop.permute.xlu0 %1266
        %1268 = vrot.lane.b32.xlu0 %v1241, 12
        %v1269 = vpop.permute.xlu0 %1268
        %1270 = vrot.lane.b32.xlu0 %v1242, 12
        %v1271 = vpop.permute.xlu0 %1270
        %1272 = vrot.lane.b32.xlu0 %v1243, 12
        %v1273 = vpop.permute.xlu0 %1272
        %1274 = vrot.lane.b32.xlu0 %v1244, 12
        %v1275 = vpop.permute.xlu0 %1274
        %1276 = vrot.lane.b32.xlu0 %v1245, 12
        %v1277 = vpop.permute.xlu0 %1276
        %vm1294 = vcmask 130144
        %1295 = vst.msk [vmem:[#allocation2] sm:$0xff] %vm1294, %v1247
        %1296 = vst.msk [vmem:[#allocation2 + $0x8] sm:$0xff] %vm1294, %v1249
        %1297 = vst.msk [vmem:[#allocation2 + $0x10] sm:$0xff] %vm1294, %v1251
        %1298 = vst.msk [vmem:[#allocation2 + $0x18] sm:$0xff] %vm1294, %v1253
        %1299 = vst.msk [vmem:[#allocation2 + $0x20] sm:$0xff] %vm1294, %v1255
        %1300 = vst.msk [vmem:[#allocation2 + $0x28] sm:$0xff] %vm1294, %v1257
        %1301 = vst.msk [vmem:[#allocation2 + $0x30] sm:$0xff] %vm1294, %v1259
        %1302 = vst.msk [vmem:[#allocation2 + $0x38] sm:$0xff] %vm1294, %v1261
        %1303 = vst.msk [vmem:[#allocation2 + $0x40] sm:$0xff] %vm1294, %v1263
        %1304 = vst.msk [vmem:[#allocation2 + $0x48] sm:$0xff] %vm1294, %v1265
        %1305 = vst.msk [vmem:[#allocation2 + $0x50] sm:$0xff] %vm1294, %v1267
        %1306 = vst.msk [vmem:[#allocation2 + $0x58] sm:$0xff] %vm1294, %v1269
        %1307 = vst.msk [vmem:[#allocation2 + $0x60] sm:$0xff] %vm1294, %v1271
        %1308 = vst.msk [vmem:[#allocation2 + $0x68] sm:$0xff] %vm1294, %v1273
        %1309 = vst.msk [vmem:[#allocation2 + $0x70] sm:$0xff] %vm1294, %v1275
        %1310 = vst.msk [vmem:[#allocation2 + $0x78] sm:$0xff] %vm1294, %v1277
        %v1312 = vshrl.u32 %v205, 16
        %v1314 = vrot.slane %v1312, 4
        %v1315 = vshll.u32 %v205, 16
        %v1317 = vrot.slane %v1315, 5
        %v1318 = vor.u32 %v1314, %v1317
        %v1319 = vrot.slane %v1318, 4
        %v1321 = vshll.u32 %v206, 16
        %v1323 = vrot.slane %v1321, 5
        %v1324 = vsel %vm384, %v1319, %v1323
        %v1326 = vshrl.u32 %v225, 16
        %v1328 = vrot.slane %v1326, 4
        %v1329 = vshll.u32 %v225, 16
        %v1331 = vrot.slane %v1329, 5
        %v1332 = vor.u32 %v1328, %v1331
        %v1333 = vrot.slane %v1332, 4
        %v1335 = vshll.u32 %v226, 16
        %v1337 = vrot.slane %v1335, 5
        %v1338 = vsel %vm384, %v1333, %v1337
        %v1340 = vshrl.u32 %v245, 16
        %v1342 = vrot.slane %v1340, 4
        %v1343 = vshll.u32 %v245, 16
        %v1345 = vrot.slane %v1343, 5
        %v1346 = vor.u32 %v1342, %v1345
        %v1347 = vrot.slane %v1346, 4
        %v1349 = vshll.u32 %v246, 16
        %v1351 = vrot.slane %v1349, 5
        %v1352 = vsel %vm384, %v1347, %v1351
        %v1354 = vshrl.u32 %v265, 16
        %v1356 = vrot.slane %v1354, 4
        %v1357 = vshll.u32 %v265, 16
        %v1359 = vrot.slane %v1357, 5
        %v1360 = vor.u32 %v1356, %v1359
        %v1361 = vrot.slane %v1360, 4
        %v1363 = vshll.u32 %v266, 16
        %v1365 = vrot.slane %v1363, 5
        %v1366 = vsel %vm384, %v1361, %v1365
        %v1367 = vunpack.c.l.b16 %v1324
        %v1368 = vunpack.c.l.b16 %v1338
        %v1369 = vunpack.c.l.b16 %v1352
        %v1370 = vunpack.c.l.b16 %v1366
        %v1371 = vpack.c.b16 %v835, %v834
        %v1372 = vpack.c.b16 %v837, %v836
        %v1373 = vpack.c.b16 %v839, %v838
        %v1374 = vpack.c.b16 %v1367, %v840
        %v1375 = vpack.c.b16 %v843, %v842
        %v1376 = vpack.c.b16 %v845, %v844
        %v1377 = vpack.c.b16 %v847, %v846
        %v1378 = vpack.c.b16 %v1368, %v848
        %v1379 = vpack.c.b16 %v851, %v850
        %v1380 = vpack.c.b16 %v853, %v852
        %v1381 = vpack.c.b16 %v855, %v854
        %v1382 = vpack.c.b16 %v1369, %v856
        %v1383 = vpack.c.b16 %v859, %v858
        %v1384 = vpack.c.b16 %v861, %v860
        %v1385 = vpack.c.b16 %v863, %v862
        %v1386 = vpack.c.b16 %v1370, %v864
        %1387 = vrot.lane.b32.xlu0 %v1371, 16
        %v1388 = vpop.permute.xlu0 %1387
        %1389 = vrot.lane.b32.xlu0 %v1372, 16
        %v1390 = vpop.permute.xlu0 %1389
        %1391 = vrot.lane.b32.xlu0 %v1373, 16
        %v1392 = vpop.permute.xlu0 %1391
        %1393 = vrot.lane.b32.xlu0 %v1374, 16
        %v1394 = vpop.permute.xlu0 %1393
        %1395 = vrot.lane.b32.xlu0 %v1375, 16
        %v1396 = vpop.permute.xlu0 %1395
        %1397 = vrot.lane.b32.xlu0 %v1376, 16
        %v1398 = vpop.permute.xlu0 %1397
        %1399 = vrot.lane.b32.xlu0 %v1377, 16
        %v1400 = vpop.permute.xlu0 %1399
        %1401 = vrot.lane.b32.xlu0 %v1378, 16
        %v1402 = vpop.permute.xlu0 %1401
        %1403 = vrot.lane.b32.xlu0 %v1379, 16
        %v1404 = vpop.permute.xlu0 %1403
        %1405 = vrot.lane.b32.xlu0 %v1380, 16
        %v1406 = vpop.permute.xlu0 %1405
        %1407 = vrot.lane.b32.xlu0 %v1381, 16
        %v1408 = vpop.permute.xlu0 %1407
        %1409 = vrot.lane.b32.xlu0 %v1382, 16
        %v1410 = vpop.permute.xlu0 %1409
        %1411 = vrot.lane.b32.xlu0 %v1383, 16
        %v1412 = vpop.permute.xlu0 %1411
        %1413 = vrot.lane.b32.xlu0 %v1384, 16
        %v1414 = vpop.permute.xlu0 %1413
        %1415 = vrot.lane.b32.xlu0 %v1385, 16
        %v1416 = vpop.permute.xlu0 %1415
        %1417 = vrot.lane.b32.xlu0 %v1386, 16
        %v1418 = vpop.permute.xlu0 %1417
        %vm1435 = vcmask 162944
        %1436 = vst.msk [vmem:[#allocation2] sm:$0xff] %vm1435, %v1388
        %1437 = vst.msk [vmem:[#allocation2 + $0x8] sm:$0xff] %vm1435, %v1390
        %1438 = vst.msk [vmem:[#allocation2 + $0x10] sm:$0xff] %vm1435, %v1392
        %1439 = vst.msk [vmem:[#allocation2 + $0x18] sm:$0xff] %vm1435, %v1394
        %1440 = vst.msk [vmem:[#allocation2 + $0x20] sm:$0xff] %vm1435, %v1396
        %1441 = vst.msk [vmem:[#allocation2 + $0x28] sm:$0xff] %vm1435, %v1398
        %1442 = vst.msk [vmem:[#allocation2 + $0x30] sm:$0xff] %vm1435, %v1400
        %1443 = vst.msk [vmem:[#allocation2 + $0x38] sm:$0xff] %vm1435, %v1402
        %1444 = vst.msk [vmem:[#allocation2 + $0x40] sm:$0xff] %vm1435, %v1404
        %1445 = vst.msk [vmem:[#allocation2 + $0x48] sm:$0xff] %vm1435, %v1406
        %1446 = vst.msk [vmem:[#allocation2 + $0x50] sm:$0xff] %vm1435, %v1408
        %1447 = vst.msk [vmem:[#allocation2 + $0x58] sm:$0xff] %vm1435, %v1410
        %1448 = vst.msk [vmem:[#allocation2 + $0x60] sm:$0xff] %vm1435, %v1412
        %1449 = vst.msk [vmem:[#allocation2 + $0x68] sm:$0xff] %vm1435, %v1414
        %1450 = vst.msk [vmem:[#allocation2 + $0x70] sm:$0xff] %vm1435, %v1416
        %1451 = vst.msk [vmem:[#allocation2 + $0x78] sm:$0xff] %vm1435, %v1418
        %v1456 = vrot.slane %v205, 5
        %v1457 = vrot.slane %v1456, 4
        %v1458 = vrot.slane %v206, 5
        %v1459 = vsel %vm980, %v1457, %v1458
        %v1460 = vrot.slane %v225, 5
        %v1461 = vrot.slane %v1460, 4
        %v1462 = vrot.slane %v226, 5
        %v1463 = vsel %vm980, %v1461, %v1462
        %v1464 = vrot.slane %v245, 5
        %v1465 = vrot.slane %v1464, 4
        %v1466 = vrot.slane %v246, 5
        %v1467 = vsel %vm980, %v1465, %v1466
        %v1468 = vrot.slane %v265, 5
        %v1469 = vrot.slane %v1468, 4
        %v1470 = vrot.slane %v266, 5
        %v1471 = vsel %vm980, %v1469, %v1470
        %v1472 = vunpack.c.l.b16 %v1459
        %v1473 = vunpack.c.l.b16 %v1463
        %v1474 = vunpack.c.l.b16 %v1467
        %v1475 = vunpack.c.l.b16 %v1471
        %v1476 = vpack.c.b16 %v1111, %v1110
        %v1477 = vpack.c.b16 %v1113, %v1112
        %v1478 = vpack.c.b16 %v1115, %v1114
        %v1479 = vpack.c.b16 %v1472, %v1116
        %v1480 = vpack.c.b16 %v1119, %v1118
        %v1481 = vpack.c.b16 %v1121, %v1120
        %v1482 = vpack.c.b16 %v1123, %v1122
        %v1483 = vpack.c.b16 %v1473, %v1124
        %v1484 = vpack.c.b16 %v1127, %v1126
        %v1485 = vpack.c.b16 %v1129, %v1128
        %v1486 = vpack.c.b16 %v1131, %v1130
        %v1487 = vpack.c.b16 %v1474, %v1132
        %v1488 = vpack.c.b16 %v1135, %v1134
        %v1489 = vpack.c.b16 %v1137, %v1136
        %v1490 = vpack.c.b16 %v1139, %v1138
        %v1491 = vpack.c.b16 %v1475, %v1140
        %1492 = vrot.lane.b32.xlu0 %v1476, 20
        %v1493 = vpop.permute.xlu0 %1492
        %1494 = vrot.lane.b32.xlu0 %v1477, 20
        %v1495 = vpop.permute.xlu0 %1494
        %1496 = vrot.lane.b32.xlu0 %v1478, 20
        %v1497 = vpop.permute.xlu0 %1496
        %1498 = vrot.lane.b32.xlu0 %v1479, 20
        %v1499 = vpop.permute.xlu0 %1498
        %1500 = vrot.lane.b32.xlu0 %v1480, 20
        %v1501 = vpop.permute.xlu0 %1500
        %1502 = vrot.lane.b32.xlu0 %v1481, 20
        %v1503 = vpop.permute.xlu0 %1502
        %1504 = vrot.lane.b32.xlu0 %v1482, 20
        %v1505 = vpop.permute.xlu0 %1504
        %1506 = vrot.lane.b32.xlu0 %v1483, 20
        %v1507 = vpop.permute.xlu0 %1506
        %1508 = vrot.lane.b32.xlu0 %v1484, 20
        %v1509 = vpop.permute.xlu0 %1508
        %1510 = vrot.lane.b32.xlu0 %v1485, 20
        %v1511 = vpop.permute.xlu0 %1510
        %1512 = vrot.lane.b32.xlu0 %v1486, 20
        %v1513 = vpop.permute.xlu0 %1512
        %1514 = vrot.lane.b32.xlu0 %v1487, 20
        %v1515 = vpop.permute.xlu0 %1514
        %1516 = vrot.lane.b32.xlu0 %v1488, 20
        %v1517 = vpop.permute.xlu0 %1516
        %1518 = vrot.lane.b32.xlu0 %v1489, 20
        %v1519 = vpop.permute.xlu0 %1518
        %1520 = vrot.lane.b32.xlu0 %v1490, 20
        %v1521 = vpop.permute.xlu0 %1520
        %1522 = vrot.lane.b32.xlu0 %v1491, 20
        %v1523 = vpop.permute.xlu0 %1522
        %vm1540 = vcmask 195744
        %1541 = vst.msk [vmem:[#allocation2] sm:$0xff] %vm1540, %v1493
        %1542 = vst.msk [vmem:[#allocation2 + $0x8] sm:$0xff] %vm1540, %v1495
        %1543 = vst.msk [vmem:[#allocation2 + $0x10] sm:$0xff] %vm1540, %v1497
        %1544 = vst.msk [vmem:[#allocation2 + $0x18] sm:$0xff] %vm1540, %v1499
        %1545 = vst.msk [vmem:[#allocation2 + $0x20] sm:$0xff] %vm1540, %v1501
        %1546 = vst.msk [vmem:[#allocation2 + $0x28] sm:$0xff] %vm1540, %v1503
        %1547 = vst.msk [vmem:[#allocation2 + $0x30] sm:$0xff] %vm1540, %v1505
        %1548 = vst.msk [vmem:[#allocation2 + $0x38] sm:$0xff] %vm1540, %v1507
        %1549 = vst.msk [vmem:[#allocation2 + $0x40] sm:$0xff] %vm1540, %v1509
        %1550 = vst.msk [vmem:[#allocation2 + $0x48] sm:$0xff] %vm1540, %v1511
        %1551 = vst.msk [vmem:[#allocation2 + $0x50] sm:$0xff] %vm1540, %v1513
        %1552 = vst.msk [vmem:[#allocation2 + $0x58] sm:$0xff] %vm1540, %v1515
        %1553 = vst.msk [vmem:[#allocation2 + $0x60] sm:$0xff] %vm1540, %v1517
        %1554 = vst.msk [vmem:[#allocation2 + $0x68] sm:$0xff] %vm1540, %v1519
        %1555 = vst.msk [vmem:[#allocation2 + $0x70] sm:$0xff] %vm1540, %v1521
        %1556 = vst.msk [vmem:[#allocation2 + $0x78] sm:$0xff] %vm1540, %v1523
        %v1561 = vunpack.c.l.b16 %v207
        %v1562 = vunpack.c.l.b16 %v227
        %v1563 = vunpack.c.l.b16 %v247
        %v1564 = vunpack.c.l.b16 %v267
        %v1565 = vpack.c.b16 %v1561, %v1226
        %v1566 = vpack.c.b16 %v1562, %v1227
        %v1567 = vpack.c.b16 %v1563, %v1228
        %v1568 = vpack.c.b16 %v1564, %v1229
        %1569 = vrot.lane.b32.xlu0 %v334, 24
        %v1570 = vpop.permute.xlu0 %1569
        %1571 = vrot.lane.b32.xlu0 %v335, 24
        %v1572 = vpop.permute.xlu0 %1571
        %1573 = vrot.lane.b32.xlu0 %v336, 24
        %v1574 = vpop.permute.xlu0 %1573
        %1575 = vrot.lane.b32.xlu0 %v1565, 24
        %v1576 = vpop.permute.xlu0 %1575
        %1577 = vrot.lane.b32.xlu0 %v338, 24
        %v1578 = vpop.permute.xlu0 %1577
        %1579 = vrot.lane.b32.xlu0 %v339, 24
        %v1580 = vpop.permute.xlu0 %1579
        %1581 = vrot.lane.b32.xlu0 %v340, 24
        %v1582 = vpop.permute.xlu0 %1581
        %1583 = vrot.lane.b32.xlu0 %v1566, 24
        %v1584 = vpop.permute.xlu0 %1583
        %1585 = vrot.lane.b32.xlu0 %v342, 24
        %v1586 = vpop.permute.xlu0 %1585
        %1587 = vrot.lane.b32.xlu0 %v343, 24
        %v1588 = vpop.permute.xlu0 %1587
        %1589 = vrot.lane.b32.xlu0 %v344, 24
        %v1590 = vpop.permute.xlu0 %1589
        %1591 = vrot.lane.b32.xlu0 %v1567, 24
        %v1592 = vpop.permute.xlu0 %1591
        %1593 = vrot.lane.b32.xlu0 %v346, 24
        %v1594 = vpop.permute.xlu0 %1593
        %1595 = vrot.lane.b32.xlu0 %v347, 24
        %v1596 = vpop.permute.xlu0 %1595
        %1597 = vrot.lane.b32.xlu0 %v348, 24
        %v1598 = vpop.permute.xlu0 %1597
        %1599 = vrot.lane.b32.xlu0 %v1568, 24
        %v1600 = vpop.permute.xlu0 %1599
        %vm1617 = vcmask 228544
        %1618 = vst.msk [vmem:[#allocation2] sm:$0xff] %vm1617, %v1570
        %1619 = vst.msk [vmem:[#allocation2 + $0x8] sm:$0xff] %vm1617, %v1572
        %1620 = vst.msk [vmem:[#allocation2 + $0x10] sm:$0xff] %vm1617, %v1574
        %1621 = vst.msk [vmem:[#allocation2 + $0x18] sm:$0xff] %vm1617, %v1576
        %1622 = vst.msk [vmem:[#allocation2 + $0x20] sm:$0xff] %vm1617, %v1578
        %1623 = vst.msk [vmem:[#allocation2 + $0x28] sm:$0xff] %vm1617, %v1580
        %1624 = vst.msk [vmem:[#allocation2 + $0x30] sm:$0xff] %vm1617, %v1582
        %1625 = vst.msk [vmem:[#allocation2 + $0x38] sm:$0xff] %vm1617, %v1584
        %1626 = vst.msk [vmem:[#allocation2 + $0x40] sm:$0xff] %vm1617, %v1586
        %1627 = vst.msk [vmem:[#allocation2 + $0x48] sm:$0xff] %vm1617, %v1588
        %1628 = vst.msk [vmem:[#allocation2 + $0x50] sm:$0xff] %vm1617, %v1590
        %1629 = vst.msk [vmem:[#allocation2 + $0x58] sm:$0xff] %vm1617, %v1592
        %1630 = vst.msk [vmem:[#allocation2 + $0x60] sm:$0xff] %vm1617, %v1594
        %1631 = vst.msk [vmem:[#allocation2 + $0x68] sm:$0xff] %vm1617, %v1596
        %1632 = vst.msk [vmem:[#allocation2 + $0x70] sm:$0xff] %vm1617, %v1598
        %1633 = vst.msk [vmem:[#allocation2 + $0x78] sm:$0xff] %vm1617, %v1600
        %v1635 = vshrl.u32 %v207, 16
        %v1637 = vrot.slane %v1635, 4
        %v1638 = vshll.u32 %v207, 16
        %v1640 = vrot.slane %v1638, 5
        %v1641 = vor.u32 %v1637, %v1640
        %v1642 = vrot.slane %v1641, 4
        %v1644 = vshll.u32 %v208, 16
        %v1646 = vrot.slane %v1644, 5
        %v1647 = vsel %vm384, %v1642, %v1646
        %v1649 = vshrl.u32 %v227, 16
        %v1651 = vrot.slane %v1649, 4
        %v1652 = vshll.u32 %v227, 16
        %v1654 = vrot.slane %v1652, 5
        %v1655 = vor.u32 %v1651, %v1654
        %v1656 = vrot.slane %v1655, 4
        %v1658 = vshll.u32 %v228, 16
        %v1660 = vrot.slane %v1658, 5
        %v1661 = vsel %vm384, %v1656, %v1660
        %v1663 = vshrl.u32 %v247, 16
        %v1665 = vrot.slane %v1663, 4
        %v1666 = vshll.u32 %v247, 16
        %v1668 = vrot.slane %v1666, 5
        %v1669 = vor.u32 %v1665, %v1668
        %v1670 = vrot.slane %v1669, 4
        %v1672 = vshll.u32 %v248, 16
        %v1674 = vrot.slane %v1672, 5
        %v1675 = vsel %vm384, %v1670, %v1674
        %v1677 = vshrl.u32 %v267, 16
        %v1679 = vrot.slane %v1677, 4
        %v1680 = vshll.u32 %v267, 16
        %v1682 = vrot.slane %v1680, 5
        %v1683 = vor.u32 %v1679, %v1682
        %v1684 = vrot.slane %v1683, 4
        %v1686 = vshll.u32 %v268, 16
        %v1688 = vrot.slane %v1686, 5
        %v1689 = vsel %vm384, %v1684, %v1688
        %v1690 = vunpack.c.l.b16 %v1647
        %v1691 = vunpack.c.l.b16 %v1661
        %v1692 = vunpack.c.l.b16 %v1675
        %v1693 = vunpack.c.l.b16 %v1689
        %v1694 = vpack.c.b16 %v1690, %v1367
        %v1695 = vpack.c.b16 %v1691, %v1368
        %v1696 = vpack.c.b16 %v1692, %v1369
        %v1697 = vpack.c.b16 %v1693, %v1370
        %1698 = vrot.lane.b32.xlu0 %v866, 28
        %v1699 = vpop.permute.xlu0 %1698
        %1700 = vrot.lane.b32.xlu0 %v867, 28
        %v1701 = vpop.permute.xlu0 %1700
        %1702 = vrot.lane.b32.xlu0 %v868, 28
        %v1703 = vpop.permute.xlu0 %1702
        %1704 = vrot.lane.b32.xlu0 %v1694, 28
        %v1705 = vpop.permute.xlu0 %1704
        %1706 = vrot.lane.b32.xlu0 %v870, 28
        %v1707 = vpop.permute.xlu0 %1706
        %1708 = vrot.lane.b32.xlu0 %v871, 28
        %v1709 = vpop.permute.xlu0 %1708
        %1710 = vrot.lane.b32.xlu0 %v872, 28
        %v1711 = vpop.permute.xlu0 %1710
        %1712 = vrot.lane.b32.xlu0 %v1695, 28
        %v1713 = vpop.permute.xlu0 %1712
        %1714 = vrot.lane.b32.xlu0 %v874, 28
        %v1715 = vpop.permute.xlu0 %1714
        %1716 = vrot.lane.b32.xlu0 %v875, 28
        %v1717 = vpop.permute.xlu0 %1716
        %1718 = vrot.lane.b32.xlu0 %v876, 28
        %v1719 = vpop.permute.xlu0 %1718
        %1720 = vrot.lane.b32.xlu0 %v1696, 28
        %v1721 = vpop.permute.xlu0 %1720
        %1722 = vrot.lane.b32.xlu0 %v878, 28
        %v1723 = vpop.permute.xlu0 %1722
        %1724 = vrot.lane.b32.xlu0 %v879, 28
        %v1725 = vpop.permute.xlu0 %1724
        %1726 = vrot.lane.b32.xlu0 %v880, 28
        %v1727 = vpop.permute.xlu0 %1726
        %1728 = vrot.lane.b32.xlu0 %v1697, 28
        %v1729 = vpop.permute.xlu0 %1728
        %vm1746 = vcmask 261344
        %1747 = vst.msk [vmem:[#allocation2] sm:$0xff] %vm1746, %v1699
        %1748 = vst.msk [vmem:[#allocation2 + $0x8] sm:$0xff] %vm1746, %v1701
        %1749 = vst.msk [vmem:[#allocation2 + $0x10] sm:$0xff] %vm1746, %v1703
        %1750 = vst.msk [vmem:[#allocation2 + $0x18] sm:$0xff] %vm1746, %v1705
        %1751 = vst.msk [vmem:[#allocation2 + $0x20] sm:$0xff] %vm1746, %v1707
        %1752 = vst.msk [vmem:[#allocation2 + $0x28] sm:$0xff] %vm1746, %v1709
        %1753 = vst.msk [vmem:[#allocation2 + $0x30] sm:$0xff] %vm1746, %v1711
        %1754 = vst.msk [vmem:[#allocation2 + $0x38] sm:$0xff] %vm1746, %v1713
        %1755 = vst.msk [vmem:[#allocation2 + $0x40] sm:$0xff] %vm1746, %v1715
        %1756 = vst.msk [vmem:[#allocation2 + $0x48] sm:$0xff] %vm1746, %v1717
        %1757 = vst.msk [vmem:[#allocation2 + $0x50] sm:$0xff] %vm1746, %v1719
        %1758 = vst.msk [vmem:[#allocation2 + $0x58] sm:$0xff] %vm1746, %v1721
        %1759 = vst.msk [vmem:[#allocation2 + $0x60] sm:$0xff] %vm1746, %v1723
        %1760 = vst.msk [vmem:[#allocation2 + $0x68] sm:$0xff] %vm1746, %v1725
        %1761 = vst.msk [vmem:[#allocation2 + $0x70] sm:$0xff] %vm1746, %v1727
        %1762 = vst.msk [vmem:[#allocation2 + $0x78] sm:$0xff] %vm1746, %v1729
        %v1767 = vrot.slane %v207, 5
        %v1768 = vrot.slane %v1767, 4
        %v1769 = vrot.slane %v208, 5
        %v1770 = vsel %vm980, %v1768, %v1769
        %v1771 = vrot.slane %v227, 5
        %v1772 = vrot.slane %v1771, 4
        %v1773 = vrot.slane %v228, 5
        %v1774 = vsel %vm980, %v1772, %v1773
        %v1775 = vrot.slane %v247, 5
        %v1776 = vrot.slane %v1775, 4
        %v1777 = vrot.slane %v248, 5
        %v1778 = vsel %vm980, %v1776, %v1777
        %v1779 = vrot.slane %v267, 5
        %v1780 = vrot.slane %v1779, 4
        %v1781 = vrot.slane %v268, 5
        %v1782 = vsel %vm980, %v1780, %v1781
        %v1783 = vunpack.c.l.b16 %v1770
        %v1784 = vunpack.c.l.b16 %v1774
        %v1785 = vunpack.c.l.b16 %v1778
        %v1786 = vunpack.c.l.b16 %v1782
        %v1787 = vpack.c.b16 %v1783, %v1472
        %v1788 = vpack.c.b16 %v1784, %v1473
        %v1789 = vpack.c.b16 %v1785, %v1474
        %v1790 = vpack.c.b16 %v1786, %v1475
        %1791 = vrot.lane.b32.xlu0 %v1142, 32
        %v1792 = vpop.permute.xlu0 %1791
        %1793 = vrot.lane.b32.xlu0 %v1143, 32
        %v1794 = vpop.permute.xlu0 %1793
        %1795 = vrot.lane.b32.xlu0 %v1144, 32
        %v1796 = vpop.permute.xlu0 %1795
        %1797 = vrot.lane.b32.xlu0 %v1787, 32
        %v1798 = vpop.permute.xlu0 %1797
        %1799 = vrot.lane.b32.xlu0 %v1146, 32
        %v1800 = vpop.permute.xlu0 %1799
        %1801 = vrot.lane.b32.xlu0 %v1147, 32
        %v1802 = vpop.permute.xlu0 %1801
        %1803 = vrot.lane.b32.xlu0 %v1148, 32
        %v1804 = vpop.permute.xlu0 %1803
        %1805 = vrot.lane.b32.xlu0 %v1788, 32
        %v1806 = vpop.permute.xlu0 %1805
        %1807 = vrot.lane.b32.xlu0 %v1150, 32
        %v1808 = vpop.permute.xlu0 %1807
        %1809 = vrot.lane.b32.xlu0 %v1151, 32
        %v1810 = vpop.permute.xlu0 %1809
        %1811 = vrot.lane.b32.xlu0 %v1152, 32
        %v1812 = vpop.permute.xlu0 %1811
        %1813 = vrot.lane.b32.xlu0 %v1789, 32
        %v1814 = vpop.permute.xlu0 %1813
        %1815 = vrot.lane.b32.xlu0 %v1154, 32
        %v1816 = vpop.permute.xlu0 %1815
        %1817 = vrot.lane.b32.xlu0 %v1155, 32
        %v1818 = vpop.permute.xlu0 %1817
        %1819 = vrot.lane.b32.xlu0 %v1156, 32
        %v1820 = vpop.permute.xlu0 %1819
        %1821 = vrot.lane.b32.xlu0 %v1790, 32
        %v1822 = vpop.permute.xlu0 %1821
        %vm1839 = vcmask 294144
        %1840 = vst.msk [vmem:[#allocation2] sm:$0xff] %vm1839, %v1792
        %1841 = vst.msk [vmem:[#allocation2 + $0x8] sm:$0xff] %vm1839, %v1794
        %1842 = vst.msk [vmem:[#allocation2 + $0x10] sm:$0xff] %vm1839, %v1796
        %1843 = vst.msk [vmem:[#allocation2 + $0x18] sm:$0xff] %vm1839, %v1798
        %1844 = vst.msk [vmem:[#allocation2 + $0x20] sm:$0xff] %vm1839, %v1800
        %1845 = vst.msk [vmem:[#allocation2 + $0x28] sm:$0xff] %vm1839, %v1802
        %1846 = vst.msk [vmem:[#allocation2 + $0x30] sm:$0xff] %vm1839, %v1804
        %1847 = vst.msk [vmem:[#allocation2 + $0x38] sm:$0xff] %vm1839, %v1806
        %1848 = vst.msk [vmem:[#allocation2 + $0x40] sm:$0xff] %vm1839, %v1808
        %1849 = vst.msk [vmem:[#allocation2 + $0x48] sm:$0xff] %vm1839, %v1810
        %1850 = vst.msk [vmem:[#allocation2 + $0x50] sm:$0xff] %vm1839, %v1812
        %1851 = vst.msk [vmem:[#allocation2 + $0x58] sm:$0xff] %vm1839, %v1814
        %1852 = vst.msk [vmem:[#allocation2 + $0x60] sm:$0xff] %vm1839, %v1816
        %1853 = vst.msk [vmem:[#allocation2 + $0x68] sm:$0xff] %vm1839, %v1818
        %1854 = vst.msk [vmem:[#allocation2 + $0x70] sm:$0xff] %vm1839, %v1820
        %1855 = vst.msk [vmem:[#allocation2 + $0x78] sm:$0xff] %vm1839, %v1822
        %s1856 = sadd.s32 %s185, 1
        %s1857 = smul.u32 %s1856, 20
        %s1858 = smul.addr %s1857, 4
        %s1859 = scalar_lea.vmem %s182, %s1858
        %v1860 = vld [vmem:[%s1859] sm:$0xf]
        %v1861 = vld [vmem:[%s1859 + $0x4] sm:$0x1]
        %v1862 = vld [vmem:[%s1859 + $0x8] sm:$0xf]
        %v1863 = vld [vmem:[%s1859 + $0xc] sm:$0x1]
        %v1864 = vld [vmem:[%s1859 + $0x10] sm:$0xf]
        %v1865 = vld [vmem:[%s1859 + $0x14] sm:$0x1]
        %v1866 = vld [vmem:[%s1859 + $0x18] sm:$0xf]
        %v1867 = vld [vmem:[%s1859 + $0x1c] sm:$0x1]
        %v1868 = vld [vmem:[%s1859 + $0x20] sm:$0xf]
        %v1869 = vld [vmem:[%s1859 + $0x24] sm:$0x1]
        %v1870 = vld [vmem:[%s1859 + $0x28] sm:$0xf]
        %v1871 = vld [vmem:[%s1859 + $0x2c] sm:$0x1]
        %v1872 = vld [vmem:[%s1859 + $0x30] sm:$0xf]
        %v1873 = vld [vmem:[%s1859 + $0x34] sm:$0x1]
        %v1874 = vld [vmem:[%s1859 + $0x38] sm:$0xf]
        %v1875 = vld [vmem:[%s1859 + $0x3c] sm:$0x1]
        %v1876 = vld [vmem:[%s1859 + $0x40] sm:$0xf]
        %v1877 = vld [vmem:[%s1859 + $0x44] sm:$0x1]
        %v1878 = vld [vmem:[%s1859 + $0x48] sm:$0xf]
        %v1879 = vld [vmem:[%s1859 + $0x4c] sm:$0x1]
        %v1880 = vld [vmem:[%s1859 + $0x50] sm:$0xf]
        %v1881 = vld [vmem:[%s1859 + $0x54] sm:$0x1]
        %v1882 = vld [vmem:[%s1859 + $0x58] sm:$0xf]
        %v1883 = vld [vmem:[%s1859 + $0x5c] sm:$0x1]
        %v1884 = vld [vmem:[%s1859 + $0x60] sm:$0xf]
        %v1885 = vld [vmem:[%s1859 + $0x64] sm:$0x1]
        %v1886 = vld [vmem:[%s1859 + $0x68] sm:$0xf]
        %v1887 = vld [vmem:[%s1859 + $0x6c] sm:$0x1]
        %v1888 = vld [vmem:[%s1859 + $0x70] sm:$0xf]
        %v1889 = vld [vmem:[%s1859 + $0x74] sm:$0x1]
        %v1890 = vld [vmem:[%s1859 + $0x78] sm:$0xf]
        %v1891 = vld [vmem:[%s1859 + $0x7c] sm:$0x1]
        %v1892 = vld [vmem:[%s1859 + $0x80] sm:$0xf]
        %v1893 = vld [vmem:[%s1859 + $0x84] sm:$0x1]
        %v1894 = vld [vmem:[%s1859 + $0x88] sm:$0xf]
        %v1895 = vld [vmem:[%s1859 + $0x8c] sm:$0x1]
        %v1896 = vld [vmem:[%s1859 + $0x90] sm:$0xf]
        %v1897 = vld [vmem:[%s1859 + $0x94] sm:$0x1]
        %v1898 = vld [vmem:[%s1859 + $0x98] sm:$0xf]
        %v1899 = vld [vmem:[%s1859 + $0x9c] sm:$0x1]
        %v1900 = vld [vmem:[%s1859 + $0xa0] sm:$0xf]
        %v1901 = vld [vmem:[%s1859 + $0xa4] sm:$0x1]
        %v1902 = vld [vmem:[%s1859 + $0xa8] sm:$0xf]
        %v1903 = vld [vmem:[%s1859 + $0xac] sm:$0x1]
        %v1904 = vld [vmem:[%s1859 + $0xb0] sm:$0xf]
        %v1905 = vld [vmem:[%s1859 + $0xb4] sm:$0x1]
        %v1906 = vld [vmem:[%s1859 + $0xb8] sm:$0xf]
        %v1907 = vld [vmem:[%s1859 + $0xbc] sm:$0x1]
        %v1908 = vld [vmem:[%s1859 + $0xc0] sm:$0xf]
        %v1909 = vld [vmem:[%s1859 + $0xc4] sm:$0x1]
        %v1910 = vld [vmem:[%s1859 + $0xc8] sm:$0xf]
        %v1911 = vld [vmem:[%s1859 + $0xcc] sm:$0x1]
        %v1912 = vld [vmem:[%s1859 + $0xd0] sm:$0xf]
        %v1913 = vld [vmem:[%s1859 + $0xd4] sm:$0x1]
        %v1914 = vld [vmem:[%s1859 + $0xd8] sm:$0xf]
        %v1915 = vld [vmem:[%s1859 + $0xdc] sm:$0x1]
        %v1916 = vld [vmem:[%s1859 + $0xe0] sm:$0xf]
        %v1917 = vld [vmem:[%s1859 + $0xe4] sm:$0x1]
        %v1918 = vld [vmem:[%s1859 + $0xe8] sm:$0xf]
        %v1919 = vld [vmem:[%s1859 + $0xec] sm:$0x1]
        %v1920 = vld [vmem:[%s1859 + $0xf0] sm:$0xf]
        %v1921 = vld [vmem:[%s1859 + $0xf4] sm:$0x1]
        %v1922 = vld [vmem:[%s1859 + $0xf8] sm:$0xf]
        %v1923 = vld [vmem:[%s1859 + $0xfc] sm:$0x1]
        %v1924 = vld [vmem:[%s1859 + $0x100] sm:$0xf]
        %v1925 = vld [vmem:[%s1859 + $0x104] sm:$0x1]
        %v1926 = vld [vmem:[%s1859 + $0x108] sm:$0xf]
        %v1927 = vld [vmem:[%s1859 + $0x10c] sm:$0x1]
        %v1928 = vld [vmem:[%s1859 + $0x110] sm:$0xf]
        %v1929 = vld [vmem:[%s1859 + $0x114] sm:$0x1]
        %v1930 = vld [vmem:[%s1859 + $0x118] sm:$0xf]
        %v1931 = vld [vmem:[%s1859 + $0x11c] sm:$0x1]
        %v1932 = vld [vmem:[%s1859 + $0x120] sm:$0xf]
        %v1933 = vld [vmem:[%s1859 + $0x124] sm:$0x1]
        %v1934 = vld [vmem:[%s1859 + $0x128] sm:$0xf]
        %v1935 = vld [vmem:[%s1859 + $0x12c] sm:$0x1]
        %v1936 = vld [vmem:[%s1859 + $0x130] sm:$0xf]
        %v1937 = vld [vmem:[%s1859 + $0x134] sm:$0x1]
        %v1938 = vld [vmem:[%s1859 + $0x138] sm:$0xf]
        %v1939 = vld [vmem:[%s1859 + $0x13c] sm:$0x1]
        %v1972 = vunpack.c.l.b16 %v1860
        %v1973 = vunpack.c.l.b16 %v1862
        %v1974 = vunpack.c.l.b16 %v1864
        %v1975 = vunpack.c.l.b16 %v1866
        %v1976 = vunpack.c.l.b16 %v1868
        %v1977 = vunpack.c.l.b16 %v1870
        %v1978 = vunpack.c.l.b16 %v1872
        %v1979 = vunpack.c.l.b16 %v1874
        %v1980 = vunpack.c.l.b16 %v1880
        %v1981 = vunpack.c.l.b16 %v1882
        %v1982 = vunpack.c.l.b16 %v1884
        %v1983 = vunpack.c.l.b16 %v1886
        %v1984 = vunpack.c.l.b16 %v1888
        %v1985 = vunpack.c.l.b16 %v1890
        %v1986 = vunpack.c.l.b16 %v1892
        %v1987 = vunpack.c.l.b16 %v1894
        %v1988 = vunpack.c.l.b16 %v1900
        %v1989 = vunpack.c.l.b16 %v1902
        %v1990 = vunpack.c.l.b16 %v1904
        %v1991 = vunpack.c.l.b16 %v1906
        %v1992 = vunpack.c.l.b16 %v1908
        %v1993 = vunpack.c.l.b16 %v1910
        %v1994 = vunpack.c.l.b16 %v1912
        %v1995 = vunpack.c.l.b16 %v1914
        %v1996 = vunpack.c.l.b16 %v1920
        %v1997 = vunpack.c.l.b16 %v1922
        %v1998 = vunpack.c.l.b16 %v1924
        %v1999 = vunpack.c.l.b16 %v1926
        %v2000 = vunpack.c.l.b16 %v1928
        %v2001 = vunpack.c.l.b16 %v1930
        %v2002 = vunpack.c.l.b16 %v1932
        %v2003 = vunpack.c.l.b16 %v1934
        %v2004 = vpack.c.b16 %v1973, %v1972
        %v2005 = vpack.c.b16 %v1975, %v1974
        %v2006 = vpack.c.b16 %v1977, %v1976
        %v2007 = vpack.c.b16 %v1979, %v1978
        %v2008 = vpack.c.b16 %v1981, %v1980
        %v2009 = vpack.c.b16 %v1983, %v1982
        %v2010 = vpack.c.b16 %v1985, %v1984
        %v2011 = vpack.c.b16 %v1987, %v1986
        %v2012 = vpack.c.b16 %v1989, %v1988
        %v2013 = vpack.c.b16 %v1991, %v1990
        %v2014 = vpack.c.b16 %v1993, %v1992
        %v2015 = vpack.c.b16 %v1995, %v1994
        %v2016 = vpack.c.b16 %v1997, %v1996
        %v2017 = vpack.c.b16 %v1999, %v1998
        %v2018 = vpack.c.b16 %v2001, %v2000
        %v2019 = vpack.c.b16 %v2003, %v2002
        %2020 = vrot.lane.b32.xlu0 %v2004, 36
        %v2021 = vpop.permute.xlu0 %2020
        %2022 = vrot.lane.b32.xlu0 %v2005, 36
        %v2023 = vpop.permute.xlu0 %2022
        %2024 = vrot.lane.b32.xlu0 %v2006, 36
        %v2025 = vpop.permute.xlu0 %2024
        %2026 = vrot.lane.b32.xlu0 %v2007, 36
        %v2027 = vpop.permute.xlu0 %2026
        %2028 = vrot.lane.b32.xlu0 %v2008, 36
        %v2029 = vpop.permute.xlu0 %2028
        %2030 = vrot.lane.b32.xlu0 %v2009, 36
        %v2031 = vpop.permute.xlu0 %2030
        %2032 = vrot.lane.b32.xlu0 %v2010, 36
        %v2033 = vpop.permute.xlu0 %2032
        %2034 = vrot.lane.b32.xlu0 %v2011, 36
        %v2035 = vpop.permute.xlu0 %2034
        %2036 = vrot.lane.b32.xlu0 %v2012, 36
        %v2037 = vpop.permute.xlu0 %2036
        %2038 = vrot.lane.b32.xlu0 %v2013, 36
        %v2039 = vpop.permute.xlu0 %2038
        %2040 = vrot.lane.b32.xlu0 %v2014, 36
        %v2041 = vpop.permute.xlu0 %2040
        %2042 = vrot.lane.b32.xlu0 %v2015, 36
        %v2043 = vpop.permute.xlu0 %2042
        %2044 = vrot.lane.b32.xlu0 %v2016, 36
        %v2045 = vpop.permute.xlu0 %2044
        %2046 = vrot.lane.b32.xlu0 %v2017, 36
        %v2047 = vpop.permute.xlu0 %2046
        %2048 = vrot.lane.b32.xlu0 %v2018, 36
        %v2049 = vpop.permute.xlu0 %2048
        %2050 = vrot.lane.b32.xlu0 %v2019, 36
        %v2051 = vpop.permute.xlu0 %2050
        %vm2068 = vcmask 326944
        %2069 = vst.msk [vmem:[#allocation2] sm:$0xff] %vm2068, %v2021
        %2070 = vst.msk [vmem:[#allocation2 + $0x8] sm:$0xff] %vm2068, %v2023
        %2071 = vst.msk [vmem:[#allocation2 + $0x10] sm:$0xff] %vm2068, %v2025
        %2072 = vst.msk [vmem:[#allocation2 + $0x18] sm:$0xff] %vm2068, %v2027
        %2073 = vst.msk [vmem:[#allocation2 + $0x20] sm:$0xff] %vm2068, %v2029
        %2074 = vst.msk [vmem:[#allocation2 + $0x28] sm:$0xff] %vm2068, %v2031
        %2075 = vst.msk [vmem:[#allocation2 + $0x30] sm:$0xff] %vm2068, %v2033
        %2076 = vst.msk [vmem:[#allocation2 + $0x38] sm:$0xff] %vm2068, %v2035
        %2077 = vst.msk [vmem:[#allocation2 + $0x40] sm:$0xff] %vm2068, %v2037
        %2078 = vst.msk [vmem:[#allocation2 + $0x48] sm:$0xff] %vm2068, %v2039
        %2079 = vst.msk [vmem:[#allocation2 + $0x50] sm:$0xff] %vm2068, %v2041
        %2080 = vst.msk [vmem:[#allocation2 + $0x58] sm:$0xff] %vm2068, %v2043
        %2081 = vst.msk [vmem:[#allocation2 + $0x60] sm:$0xff] %vm2068, %v2045
        %2082 = vst.msk [vmem:[#allocation2 + $0x68] sm:$0xff] %vm2068, %v2047
        %2083 = vst.msk [vmem:[#allocation2 + $0x70] sm:$0xff] %vm2068, %v2049
        %2084 = vst.msk [vmem:[#allocation2 + $0x78] sm:$0xff] %vm2068, %v2051
        %v2086 = vshrl.u32 %v1860, 16
        %v2088 = vrot.slane %v2086, 4
        %v2089 = vshll.u32 %v1860, 16
        %v2091 = vrot.slane %v2089, 5
        %v2092 = vor.u32 %v2088, %v2091
        %v2093 = vrot.slane %v2092, 4
        %v2095 = vshll.u32 %v1861, 16
        %v2097 = vrot.slane %v2095, 5
        %v2098 = vsel %vm384, %v2093, %v2097
        %v2100 = vshrl.u32 %v1862, 16
        %v2102 = vrot.slane %v2100, 4
        %v2103 = vshll.u32 %v1862, 16
        %v2105 = vrot.slane %v2103, 5
        %v2106 = vor.u32 %v2102, %v2105
        %v2107 = vrot.slane %v2106, 4
        %v2109 = vshll.u32 %v1863, 16
        %v2111 = vrot.slane %v2109, 5
        %v2112 = vsel %vm384, %v2107, %v2111
        %v2114 = vshrl.u32 %v1864, 16
        %v2116 = vrot.slane %v2114, 4
        %v2117 = vshll.u32 %v1864, 16
        %v2119 = vrot.slane %v2117, 5
        %v2120 = vor.u32 %v2116, %v2119
        %v2121 = vrot.slane %v2120, 4
        %v2123 = vshll.u32 %v1865, 16
        %v2125 = vrot.slane %v2123, 5
        %v2126 = vsel %vm384, %v2121, %v2125
        %v2128 = vshrl.u32 %v1866, 16
        %v2130 = vrot.slane %v2128, 4
        %v2131 = vshll.u32 %v1866, 16
        %v2133 = vrot.slane %v2131, 5
        %v2134 = vor.u32 %v2130, %v2133
        %v2135 = vrot.slane %v2134, 4
        %v2137 = vshll.u32 %v1867, 16
        %v2139 = vrot.slane %v2137, 5
        %v2140 = vsel %vm384, %v2135, %v2139
        %v2142 = vshrl.u32 %v1868, 16
        %v2144 = vrot.slane %v2142, 4
        %v2145 = vshll.u32 %v1868, 16
        %v2147 = vrot.slane %v2145, 5
        %v2148 = vor.u32 %v2144, %v2147
        %v2149 = vrot.slane %v2148, 4
        %v2151 = vshll.u32 %v1869, 16
        %v2153 = vrot.slane %v2151, 5
        %v2154 = vsel %vm384, %v2149, %v2153
        %v2156 = vshrl.u32 %v1870, 16
        %v2158 = vrot.slane %v2156, 4
        %v2159 = vshll.u32 %v1870, 16
        %v2161 = vrot.slane %v2159, 5
        %v2162 = vor.u32 %v2158, %v2161
        %v2163 = vrot.slane %v2162, 4
        %v2165 = vshll.u32 %v1871, 16
        %v2167 = vrot.slane %v2165, 5
        %v2168 = vsel %vm384, %v2163, %v2167
        %v2170 = vshrl.u32 %v1872, 16
        %v2172 = vrot.slane %v2170, 4
        %v2173 = vshll.u32 %v1872, 16
        %v2175 = vrot.slane %v2173, 5
        %v2176 = vor.u32 %v2172, %v2175
        %v2177 = vrot.slane %v2176, 4
        %v2179 = vshll.u32 %v1873, 16
        %v2181 = vrot.slane %v2179, 5
        %v2182 = vsel %vm384, %v2177, %v2181
        %v2184 = vshrl.u32 %v1874, 16
        %v2186 = vrot.slane %v2184, 4
        %v2187 = vshll.u32 %v1874, 16
        %v2189 = vrot.slane %v2187, 5
        %v2190 = vor.u32 %v2186, %v2189
        %v2191 = vrot.slane %v2190, 4
        %v2193 = vshll.u32 %v1875, 16
        %v2195 = vrot.slane %v2193, 5
        %v2196 = vsel %vm384, %v2191, %v2195
        %v2198 = vshrl.u32 %v1880, 16
        %v2200 = vrot.slane %v2198, 4
        %v2201 = vshll.u32 %v1880, 16
        %v2203 = vrot.slane %v2201, 5
        %v2204 = vor.u32 %v2200, %v2203
        %v2205 = vrot.slane %v2204, 4
        %v2207 = vshll.u32 %v1881, 16
        %v2209 = vrot.slane %v2207, 5
        %v2210 = vsel %vm384, %v2205, %v2209
        %v2212 = vshrl.u32 %v1882, 16
        %v2214 = vrot.slane %v2212, 4
        %v2215 = vshll.u32 %v1882, 16
        %v2217 = vrot.slane %v2215, 5
        %v2218 = vor.u32 %v2214, %v2217
        %v2219 = vrot.slane %v2218, 4
        %v2221 = vshll.u32 %v1883, 16
        %v2223 = vrot.slane %v2221, 5
        %v2224 = vsel %vm384, %v2219, %v2223
        %v2226 = vshrl.u32 %v1884, 16
        %v2228 = vrot.slane %v2226, 4
        %v2229 = vshll.u32 %v1884, 16
        %v2231 = vrot.slane %v2229, 5
        %v2232 = vor.u32 %v2228, %v2231
        %v2233 = vrot.slane %v2232, 4
        %v2235 = vshll.u32 %v1885, 16
        %v2237 = vrot.slane %v2235, 5
        %v2238 = vsel %vm384, %v2233, %v2237
        %v2240 = vshrl.u32 %v1886, 16
        %v2242 = vrot.slane %v2240, 4
        %v2243 = vshll.u32 %v1886, 16
        %v2245 = vrot.slane %v2243, 5
        %v2246 = vor.u32 %v2242, %v2245
        %v2247 = vrot.slane %v2246, 4
        %v2249 = vshll.u32 %v1887, 16
        %v2251 = vrot.slane %v2249, 5
        %v2252 = vsel %vm384, %v2247, %v2251
        %v2254 = vshrl.u32 %v1888, 16
        %v2256 = vrot.slane %v2254, 4
        %v2257 = vshll.u32 %v1888, 16
        %v2259 = vrot.slane %v2257, 5
        %v2260 = vor.u32 %v2256, %v2259
        %v2261 = vrot.slane %v2260, 4
        %v2263 = vshll.u32 %v1889, 16
        %v2265 = vrot.slane %v2263, 5
        %v2266 = vsel %vm384, %v2261, %v2265
        %v2268 = vshrl.u32 %v1890, 16
        %v2270 = vrot.slane %v2268, 4
        %v2271 = vshll.u32 %v1890, 16
        %v2273 = vrot.slane %v2271, 5
        %v2274 = vor.u32 %v2270, %v2273
        %v2275 = vrot.slane %v2274, 4
        %v2277 = vshll.u32 %v1891, 16
        %v2279 = vrot.slane %v2277, 5
        %v2280 = vsel %vm384, %v2275, %v2279
        %v2282 = vshrl.u32 %v1892, 16
        %v2284 = vrot.slane %v2282, 4
        %v2285 = vshll.u32 %v1892, 16
        %v2287 = vrot.slane %v2285, 5
        %v2288 = vor.u32 %v2284, %v2287
        %v2289 = vrot.slane %v2288, 4
        %v2291 = vshll.u32 %v1893, 16
        %v2293 = vrot.slane %v2291, 5
        %v2294 = vsel %vm384, %v2289, %v2293
        %v2296 = vshrl.u32 %v1894, 16
        %v2298 = vrot.slane %v2296, 4
        %v2299 = vshll.u32 %v1894, 16
        %v2301 = vrot.slane %v2299, 5
        %v2302 = vor.u32 %v2298, %v2301
        %v2303 = vrot.slane %v2302, 4
        %v2305 = vshll.u32 %v1895, 16
        %v2307 = vrot.slane %v2305, 5
        %v2308 = vsel %vm384, %v2303, %v2307
        %v2310 = vshrl.u32 %v1900, 16
        %v2312 = vrot.slane %v2310, 4
        %v2313 = vshll.u32 %v1900, 16
        %v2315 = vrot.slane %v2313, 5
        %v2316 = vor.u32 %v2312, %v2315
        %v2317 = vrot.slane %v2316, 4
        %v2319 = vshll.u32 %v1901, 16
        %v2321 = vrot.slane %v2319, 5
        %v2322 = vsel %vm384, %v2317, %v2321
        %v2324 = vshrl.u32 %v1902, 16
        %v2326 = vrot.slane %v2324, 4
        %v2327 = vshll.u32 %v1902, 16
        %v2329 = vrot.slane %v2327, 5
        %v2330 = vor.u32 %v2326, %v2329
        %v2331 = vrot.slane %v2330, 4
        %v2333 = vshll.u32 %v1903, 16
        %v2335 = vrot.slane %v2333, 5
        %v2336 = vsel %vm384, %v2331, %v2335
        %v2338 = vshrl.u32 %v1904, 16
        %v2340 = vrot.slane %v2338, 4
        %v2341 = vshll.u32 %v1904, 16
        %v2343 = vrot.slane %v2341, 5
        %v2344 = vor.u32 %v2340, %v2343
        %v2345 = vrot.slane %v2344, 4
        %v2347 = vshll.u32 %v1905, 16
        %v2349 = vrot.slane %v2347, 5
        %v2350 = vsel %vm384, %v2345, %v2349
        %v2352 = vshrl.u32 %v1906, 16
        %v2354 = vrot.slane %v2352, 4
        %v2355 = vshll.u32 %v1906, 16
        %v2357 = vrot.slane %v2355, 5
        %v2358 = vor.u32 %v2354, %v2357
        %v2359 = vrot.slane %v2358, 4
        %v2361 = vshll.u32 %v1907, 16
        %v2363 = vrot.slane %v2361, 5
        %v2364 = vsel %vm384, %v2359, %v2363
        %v2366 = vshrl.u32 %v1908, 16
        %v2368 = vrot.slane %v2366, 4
        %v2369 = vshll.u32 %v1908, 16
        %v2371 = vrot.slane %v2369, 5
        %v2372 = vor.u32 %v2368, %v2371
        %v2373 = vrot.slane %v2372, 4
        %v2375 = vshll.u32 %v1909, 16
        %v2377 = vrot.slane %v2375, 5
        %v2378 = vsel %vm384, %v2373, %v2377
        %v2380 = vshrl.u32 %v1910, 16
        %v2382 = vrot.slane %v2380, 4
        %v2383 = vshll.u32 %v1910, 16
        %v2385 = vrot.slane %v2383, 5
        %v2386 = vor.u32 %v2382, %v2385
        %v2387 = vrot.slane %v2386, 4
        %v2389 = vshll.u32 %v1911, 16
        %v2391 = vrot.slane %v2389, 5
        %v2392 = vsel %vm384, %v2387, %v2391
        %v2394 = vshrl.u32 %v1912, 16
        %v2396 = vrot.slane %v2394, 4
        %v2397 = vshll.u32 %v1912, 16
        %v2399 = vrot.slane %v2397, 5
        %v2400 = vor.u32 %v2396, %v2399
        %v2401 = vrot.slane %v2400, 4
        %v2403 = vshll.u32 %v1913, 16
        %v2405 = vrot.slane %v2403, 5
        %v2406 = vsel %vm384, %v2401, %v2405
        %v2408 = vshrl.u32 %v1914, 16
        %v2410 = vrot.slane %v2408, 4
        %v2411 = vshll.u32 %v1914, 16
        %v2413 = vrot.slane %v2411, 5
        %v2414 = vor.u32 %v2410, %v2413
        %v2415 = vrot.slane %v2414, 4
        %v2417 = vshll.u32 %v1915, 16
        %v2419 = vrot.slane %v2417, 5
        %v2420 = vsel %vm384, %v2415, %v2419
        %v2422 = vshrl.u32 %v1920, 16
        %v2424 = vrot.slane %v2422, 4
        %v2425 = vshll.u32 %v1920, 16
        %v2427 = vrot.slane %v2425, 5
        %v2428 = vor.u32 %v2424, %v2427
        %v2429 = vrot.slane %v2428, 4
        %v2431 = vshll.u32 %v1921, 16
        %v2433 = vrot.slane %v2431, 5
        %v2434 = vsel %vm384, %v2429, %v2433
        %v2436 = vshrl.u32 %v1922, 16
        %v2438 = vrot.slane %v2436, 4
        %v2439 = vshll.u32 %v1922, 16
        %v2441 = vrot.slane %v2439, 5
        %v2442 = vor.u32 %v2438, %v2441
        %v2443 = vrot.slane %v2442, 4
        %v2445 = vshll.u32 %v1923, 16
        %v2447 = vrot.slane %v2445, 5
        %v2448 = vsel %vm384, %v2443, %v2447
        %v2450 = vshrl.u32 %v1924, 16
        %v2452 = vrot.slane %v2450, 4
        %v2453 = vshll.u32 %v1924, 16
        %v2455 = vrot.slane %v2453, 5
        %v2456 = vor.u32 %v2452, %v2455
        %v2457 = vrot.slane %v2456, 4
        %v2459 = vshll.u32 %v1925, 16
        %v2461 = vrot.slane %v2459, 5
        %v2462 = vsel %vm384, %v2457, %v2461
        %v2464 = vshrl.u32 %v1926, 16
        %v2466 = vrot.slane %v2464, 4
        %v2467 = vshll.u32 %v1926, 16
        %v2469 = vrot.slane %v2467, 5
        %v2470 = vor.u32 %v2466, %v2469
        %v2471 = vrot.slane %v2470, 4
        %v2473 = vshll.u32 %v1927, 16
        %v2475 = vrot.slane %v2473, 5
        %v2476 = vsel %vm384, %v2471, %v2475
        %v2478 = vshrl.u32 %v1928, 16
        %v2480 = vrot.slane %v2478, 4
        %v2481 = vshll.u32 %v1928, 16
        %v2483 = vrot.slane %v2481, 5
        %v2484 = vor.u32 %v2480, %v2483
        %v2485 = vrot.slane %v2484, 4
        %v2487 = vshll.u32 %v1929, 16
        %v2489 = vrot.slane %v2487, 5
        %v2490 = vsel %vm384, %v2485, %v2489
        %v2492 = vshrl.u32 %v1930, 16
        %v2494 = vrot.slane %v2492, 4
        %v2495 = vshll.u32 %v1930, 16
        %v2497 = vrot.slane %v2495, 5
        %v2498 = vor.u32 %v2494, %v2497
        %v2499 = vrot.slane %v2498, 4
        %v2501 = vshll.u32 %v1931, 16
        %v2503 = vrot.slane %v2501, 5
        %v2504 = vsel %vm384, %v2499, %v2503
        %v2506 = vshrl.u32 %v1932, 16
        %v2508 = vrot.slane %v2506, 4
        %v2509 = vshll.u32 %v1932, 16
        %v2511 = vrot.slane %v2509, 5
        %v2512 = vor.u32 %v2508, %v2511
        %v2513 = vrot.slane %v2512, 4
        %v2515 = vshll.u32 %v1933, 16
        %v2517 = vrot.slane %v2515, 5
        %v2518 = vsel %vm384, %v2513, %v2517
        %v2520 = vshrl.u32 %v1934, 16
        %v2522 = vrot.slane %v2520, 4
        %v2523 = vshll.u32 %v1934, 16
        %v2525 = vrot.slane %v2523, 5
        %v2526 = vor.u32 %v2522, %v2525
        %v2527 = vrot.slane %v2526, 4
        %v2529 = vshll.u32 %v1935, 16
        %v2531 = vrot.slane %v2529, 5
        %v2532 = vsel %vm384, %v2527, %v2531
        %v2533 = vunpack.c.l.b16 %v2098
        %v2534 = vunpack.c.l.b16 %v2112
        %v2535 = vunpack.c.l.b16 %v2126
        %v2536 = vunpack.c.l.b16 %v2140
        %v2537 = vunpack.c.l.b16 %v2154
        %v2538 = vunpack.c.l.b16 %v2168
        %v2539 = vunpack.c.l.b16 %v2182
        %v2540 = vunpack.c.l.b16 %v2196
        %v2541 = vunpack.c.l.b16 %v2210
        %v2542 = vunpack.c.l.b16 %v2224
        %v2543 = vunpack.c.l.b16 %v2238
        %v2544 = vunpack.c.l.b16 %v2252
        %v2545 = vunpack.c.l.b16 %v2266
        %v2546 = vunpack.c.l.b16 %v2280
        %v2547 = vunpack.c.l.b16 %v2294
        %v2548 = vunpack.c.l.b16 %v2308
        %v2549 = vunpack.c.l.b16 %v2322
        %v2550 = vunpack.c.l.b16 %v2336
        %v2551 = vunpack.c.l.b16 %v2350
        %v2552 = vunpack.c.l.b16 %v2364
        %v2553 = vunpack.c.l.b16 %v2378
        %v2554 = vunpack.c.l.b16 %v2392
        %v2555 = vunpack.c.l.b16 %v2406
        %v2556 = vunpack.c.l.b16 %v2420
        %v2557 = vunpack.c.l.b16 %v2434
        %v2558 = vunpack.c.l.b16 %v2448
        %v2559 = vunpack.c.l.b16 %v2462
        %v2560 = vunpack.c.l.b16 %v2476
        %v2561 = vunpack.c.l.b16 %v2490
        %v2562 = vunpack.c.l.b16 %v2504
        %v2563 = vunpack.c.l.b16 %v2518
        %v2564 = vunpack.c.l.b16 %v2532
        %v2565 = vpack.c.b16 %v2534, %v2533
        %v2566 = vpack.c.b16 %v2536, %v2535
        %v2567 = vpack.c.b16 %v2538, %v2537
        %v2568 = vpack.c.b16 %v2540, %v2539
        %v2569 = vpack.c.b16 %v2542, %v2541
        %v2570 = vpack.c.b16 %v2544, %v2543
        %v2571 = vpack.c.b16 %v2546, %v2545
        %v2572 = vpack.c.b16 %v2548, %v2547
        %v2573 = vpack.c.b16 %v2550, %v2549
        %v2574 = vpack.c.b16 %v2552, %v2551
        %v2575 = vpack.c.b16 %v2554, %v2553
        %v2576 = vpack.c.b16 %v2556, %v2555
        %v2577 = vpack.c.b16 %v2558, %v2557
        %v2578 = vpack.c.b16 %v2560, %v2559
        %v2579 = vpack.c.b16 %v2562, %v2561
        %v2580 = vpack.c.b16 %v2564, %v2563
        %2581 = vrot.lane.b32.xlu0 %v2565, 40
        %v2582 = vpop.permute.xlu0 %2581
        %2583 = vrot.lane.b32.xlu0 %v2566, 40
        %v2584 = vpop.permute.xlu0 %2583
        %2585 = vrot.lane.b32.xlu0 %v2567, 40
        %v2586 = vpop.permute.xlu0 %2585
        %2587 = vrot.lane.b32.xlu0 %v2568, 40
        %v2588 = vpop.permute.xlu0 %2587
        %2589 = vrot.lane.b32.xlu0 %v2569, 40
        %v2590 = vpop.permute.xlu0 %2589
        %2591 = vrot.lane.b32.xlu0 %v2570, 40
        %v2592 = vpop.permute.xlu0 %2591
        %2593 = vrot.lane.b32.xlu0 %v2571, 40
        %v2594 = vpop.permute.xlu0 %2593
        %2595 = vrot.lane.b32.xlu0 %v2572, 40
        %v2596 = vpop.permute.xlu0 %2595
        %2597 = vrot.lane.b32.xlu0 %v2573, 40
        %v2598 = vpop.permute.xlu0 %2597
        %2599 = vrot.lane.b32.xlu0 %v2574, 40
        %v2600 = vpop.permute.xlu0 %2599
        %2601 = vrot.lane.b32.xlu0 %v2575, 40
        %v2602 = vpop.permute.xlu0 %2601
        %2603 = vrot.lane.b32.xlu0 %v2576, 40
        %v2604 = vpop.permute.xlu0 %2603
        %2605 = vrot.lane.b32.xlu0 %v2577, 40
        %v2606 = vpop.permute.xlu0 %2605
        %2607 = vrot.lane.b32.xlu0 %v2578, 40
        %v2608 = vpop.permute.xlu0 %2607
        %2609 = vrot.lane.b32.xlu0 %v2579, 40
        %v2610 = vpop.permute.xlu0 %2609
        %2611 = vrot.lane.b32.xlu0 %v2580, 40
        %v2612 = vpop.permute.xlu0 %2611
        %vm2629 = vcmask 359744
        %2630 = vst.msk [vmem:[#allocation2] sm:$0xff] %vm2629, %v2582
        %2631 = vst.msk [vmem:[#allocation2 + $0x8] sm:$0xff] %vm2629, %v2584
        %2632 = vst.msk [vmem:[#allocation2 + $0x10] sm:$0xff] %vm2629, %v2586
        %2633 = vst.msk [vmem:[#allocation2 + $0x18] sm:$0xff] %vm2629, %v2588
        %2634 = vst.msk [vmem:[#allocation2 + $0x20] sm:$0xff] %vm2629, %v2590
        %2635 = vst.msk [vmem:[#allocation2 + $0x28] sm:$0xff] %vm2629, %v2592
        %2636 = vst.msk [vmem:[#allocation2 + $0x30] sm:$0xff] %vm2629, %v2594
        %2637 = vst.msk [vmem:[#allocation2 + $0x38] sm:$0xff] %vm2629, %v2596
        %2638 = vst.msk [vmem:[#allocation2 + $0x40] sm:$0xff] %vm2629, %v2598
        %2639 = vst.msk [vmem:[#allocation2 + $0x48] sm:$0xff] %vm2629, %v2600
        %2640 = vst.msk [vmem:[#allocation2 + $0x50] sm:$0xff] %vm2629, %v2602
        %2641 = vst.msk [vmem:[#allocation2 + $0x58] sm:$0xff] %vm2629, %v2604
        %2642 = vst.msk [vmem:[#allocation2 + $0x60] sm:$0xff] %vm2629, %v2606
        %2643 = vst.msk [vmem:[#allocation2 + $0x68] sm:$0xff] %vm2629, %v2608
        %2644 = vst.msk [vmem:[#allocation2 + $0x70] sm:$0xff] %vm2629, %v2610
        %2645 = vst.msk [vmem:[#allocation2 + $0x78] sm:$0xff] %vm2629, %v2612
        %v2678 = vrot.slane %v1860, 5
        %v2679 = vrot.slane %v2678, 4
        %v2680 = vrot.slane %v1861, 5
        %v2681 = vsel %vm980, %v2679, %v2680
        %v2682 = vrot.slane %v1862, 5
        %v2683 = vrot.slane %v2682, 4
        %v2684 = vrot.slane %v1863, 5
        %v2685 = vsel %vm980, %v2683, %v2684
        %v2686 = vrot.slane %v1864, 5
        %v2687 = vrot.slane %v2686, 4
        %v2688 = vrot.slane %v1865, 5
        %v2689 = vsel %vm980, %v2687, %v2688
        %v2690 = vrot.slane %v1866, 5
        %v2691 = vrot.slane %v2690, 4
        %v2692 = vrot.slane %v1867, 5
        %v2693 = vsel %vm980, %v2691, %v2692
        %v2694 = vrot.slane %v1868, 5
        %v2695 = vrot.slane %v2694, 4
        %v2696 = vrot.slane %v1869, 5
        %v2697 = vsel %vm980, %v2695, %v2696
        %v2698 = vrot.slane %v1870, 5
        %v2699 = vrot.slane %v2698, 4
        %v2700 = vrot.slane %v1871, 5
        %v2701 = vsel %vm980, %v2699, %v2700
        %v2702 = vrot.slane %v1872, 5
        %v2703 = vrot.slane %v2702, 4
        %v2704 = vrot.slane %v1873, 5
        %v2705 = vsel %vm980, %v2703, %v2704
        %v2706 = vrot.slane %v1874, 5
        %v2707 = vrot.slane %v2706, 4
        %v2708 = vrot.slane %v1875, 5
        %v2709 = vsel %vm980, %v2707, %v2708
        %v2710 = vrot.slane %v1880, 5
        %v2711 = vrot.slane %v2710, 4
        %v2712 = vrot.slane %v1881, 5
        %v2713 = vsel %vm980, %v2711, %v2712
        %v2714 = vrot.slane %v1882, 5
        %v2715 = vrot.slane %v2714, 4
        %v2716 = vrot.slane %v1883, 5
        %v2717 = vsel %vm980, %v2715, %v2716
        %v2718 = vrot.slane %v1884, 5
        %v2719 = vrot.slane %v2718, 4
        %v2720 = vrot.slane %v1885, 5
        %v2721 = vsel %vm980, %v2719, %v2720
        %v2722 = vrot.slane %v1886, 5
        %v2723 = vrot.slane %v2722, 4
        %v2724 = vrot.slane %v1887, 5
        %v2725 = vsel %vm980, %v2723, %v2724
        %v2726 = vrot.slane %v1888, 5
        %v2727 = vrot.slane %v2726, 4
        %v2728 = vrot.slane %v1889, 5
        %v2729 = vsel %vm980, %v2727, %v2728
        %v2730 = vrot.slane %v1890, 5
        %v2731 = vrot.slane %v2730, 4
        %v2732 = vrot.slane %v1891, 5
        %v2733 = vsel %vm980, %v2731, %v2732
        %v2734 = vrot.slane %v1892, 5
        %v2735 = vrot.slane %v2734, 4
        %v2736 = vrot.slane %v1893, 5
        %v2737 = vsel %vm980, %v2735, %v2736
        %v2738 = vrot.slane %v1894, 5
        %v2739 = vrot.slane %v2738, 4
        %v2740 = vrot.slane %v1895, 5
        %v2741 = vsel %vm980, %v2739, %v2740
        %v2742 = vrot.slane %v1900, 5
        %v2743 = vrot.slane %v2742, 4
        %v2744 = vrot.slane %v1901, 5
        %v2745 = vsel %vm980, %v2743, %v2744
        %v2746 = vrot.slane %v1902, 5
        %v2747 = vrot.slane %v2746, 4
        %v2748 = vrot.slane %v1903, 5
        %v2749 = vsel %vm980, %v2747, %v2748
        %v2750 = vrot.slane %v1904, 5
        %v2751 = vrot.slane %v2750, 4
        %v2752 = vrot.slane %v1905, 5
        %v2753 = vsel %vm980, %v2751, %v2752
        %v2754 = vrot.slane %v1906, 5
        %v2755 = vrot.slane %v2754, 4
        %v2756 = vrot.slane %v1907, 5
        %v2757 = vsel %vm980, %v2755, %v2756
        %v2758 = vrot.slane %v1908, 5
        %v2759 = vrot.slane %v2758, 4
        %v2760 = vrot.slane %v1909, 5
        %v2761 = vsel %vm980, %v2759, %v2760
        %v2762 = vrot.slane %v1910, 5
        %v2763 = vrot.slane %v2762, 4
        %v2764 = vrot.slane %v1911, 5
        %v2765 = vsel %vm980, %v2763, %v2764
        %v2766 = vrot.slane %v1912, 5
        %v2767 = vrot.slane %v2766, 4
        %v2768 = vrot.slane %v1913, 5
        %v2769 = vsel %vm980, %v2767, %v2768
        %v2770 = vrot.slane %v1914, 5
        %v2771 = vrot.slane %v2770, 4
        %v2772 = vrot.slane %v1915, 5
        %v2773 = vsel %vm980, %v2771, %v2772
        %v2774 = vrot.slane %v1920, 5
        %v2775 = vrot.slane %v2774, 4
        %v2776 = vrot.slane %v1921, 5
        %v2777 = vsel %vm980, %v2775, %v2776
        %v2778 = vrot.slane %v1922, 5
        %v2779 = vrot.slane %v2778, 4
        %v2780 = vrot.slane %v1923, 5
        %v2781 = vsel %vm980, %v2779, %v2780
        %v2782 = vrot.slane %v1924, 5
        %v2783 = vrot.slane %v2782, 4
        %v2784 = vrot.slane %v1925, 5
        %v2785 = vsel %vm980, %v2783, %v2784
        %v2786 = vrot.slane %v1926, 5
        %v2787 = vrot.slane %v2786, 4
        %v2788 = vrot.slane %v1927, 5
        %v2789 = vsel %vm980, %v2787, %v2788
        %v2790 = vrot.slane %v1928, 5
        %v2791 = vrot.slane %v2790, 4
        %v2792 = vrot.slane %v1929, 5
        %v2793 = vsel %vm980, %v2791, %v2792
        %v2794 = vrot.slane %v1930, 5
        %v2795 = vrot.slane %v2794, 4
        %v2796 = vrot.slane %v1931, 5
        %v2797 = vsel %vm980, %v2795, %v2796
        %v2798 = vrot.slane %v1932, 5
        %v2799 = vrot.slane %v2798, 4
        %v2800 = vrot.slane %v1933, 5
        %v2801 = vsel %vm980, %v2799, %v2800
        %v2802 = vrot.slane %v1934, 5
        %v2803 = vrot.slane %v2802, 4
        %v2804 = vrot.slane %v1935, 5
        %v2805 = vsel %vm980, %v2803, %v2804
        %v2806 = vunpack.c.l.b16 %v2681
        %v2807 = vunpack.c.l.b16 %v2685
        %v2808 = vunpack.c.l.b16 %v2689
        %v2809 = vunpack.c.l.b16 %v2693
        %v2810 = vunpack.c.l.b16 %v2697
        %v2811 = vunpack.c.l.b16 %v2701
        %v2812 = vunpack.c.l.b16 %v2705
        %v2813 = vunpack.c.l.b16 %v2709
        %v2814 = vunpack.c.l.b16 %v2713
        %v2815 = vunpack.c.l.b16 %v2717
        %v2816 = vunpack.c.l.b16 %v2721
        %v2817 = vunpack.c.l.b16 %v2725
        %v2818 = vunpack.c.l.b16 %v2729
        %v2819 = vunpack.c.l.b16 %v2733
        %v2820 = vunpack.c.l.b16 %v2737
        %v2821 = vunpack.c.l.b16 %v2741
        %v2822 = vunpack.c.l.b16 %v2745
        %v2823 = vunpack.c.l.b16 %v2749
        %v2824 = vunpack.c.l.b16 %v2753
        %v2825 = vunpack.c.l.b16 %v2757
        %v2826 = vunpack.c.l.b16 %v2761
        %v2827 = vunpack.c.l.b16 %v2765
        %v2828 = vunpack.c.l.b16 %v2769
        %v2829 = vunpack.c.l.b16 %v2773
        %v2830 = vunpack.c.l.b16 %v2777
        %v2831 = vunpack.c.l.b16 %v2781
        %v2832 = vunpack.c.l.b16 %v2785
        %v2833 = vunpack.c.l.b16 %v2789
        %v2834 = vunpack.c.l.b16 %v2793
        %v2835 = vunpack.c.l.b16 %v2797
        %v2836 = vunpack.c.l.b16 %v2801
        %v2837 = vunpack.c.l.b16 %v2805
        %v2838 = vpack.c.b16 %v2807, %v2806
        %v2839 = vpack.c.b16 %v2809, %v2808
        %v2840 = vpack.c.b16 %v2811, %v2810
        %v2841 = vpack.c.b16 %v2813, %v2812
        %v2842 = vpack.c.b16 %v2815, %v2814
        %v2843 = vpack.c.b16 %v2817, %v2816
        %v2844 = vpack.c.b16 %v2819, %v2818
        %v2845 = vpack.c.b16 %v2821, %v2820
        %v2846 = vpack.c.b16 %v2823, %v2822
        %v2847 = vpack.c.b16 %v2825, %v2824
        %v2848 = vpack.c.b16 %v2827, %v2826
        %v2849 = vpack.c.b16 %v2829, %v2828
        %v2850 = vpack.c.b16 %v2831, %v2830
        %v2851 = vpack.c.b16 %v2833, %v2832
        %v2852 = vpack.c.b16 %v2835, %v2834
        %v2853 = vpack.c.b16 %v2837, %v2836
        %2854 = vrot.lane.b32.xlu0 %v2838, 44
        %v2855 = vpop.permute.xlu0 %2854
        %2856 = vrot.lane.b32.xlu0 %v2839, 44
        %v2857 = vpop.permute.xlu0 %2856
        %2858 = vrot.lane.b32.xlu0 %v2840, 44
        %v2859 = vpop.permute.xlu0 %2858
        %2860 = vrot.lane.b32.xlu0 %v2841, 44
        %v2861 = vpop.permute.xlu0 %2860
        %2862 = vrot.lane.b32.xlu0 %v2842, 44
        %v2863 = vpop.permute.xlu0 %2862
        %2864 = vrot.lane.b32.xlu0 %v2843, 44
        %v2865 = vpop.permute.xlu0 %2864
        %2866 = vrot.lane.b32.xlu0 %v2844, 44
        %v2867 = vpop.permute.xlu0 %2866
        %2868 = vrot.lane.b32.xlu0 %v2845, 44
        %v2869 = vpop.permute.xlu0 %2868
        %2870 = vrot.lane.b32.xlu0 %v2846, 44
        %v2871 = vpop.permute.xlu0 %2870
        %2872 = vrot.lane.b32.xlu0 %v2847, 44
        %v2873 = vpop.permute.xlu0 %2872
        %2874 = vrot.lane.b32.xlu0 %v2848, 44
        %v2875 = vpop.permute.xlu0 %2874
        %2876 = vrot.lane.b32.xlu0 %v2849, 44
        %v2877 = vpop.permute.xlu0 %2876
        %2878 = vrot.lane.b32.xlu0 %v2850, 44
        %v2879 = vpop.permute.xlu0 %2878
        %2880 = vrot.lane.b32.xlu0 %v2851, 44
        %v2881 = vpop.permute.xlu0 %2880
        %2882 = vrot.lane.b32.xlu0 %v2852, 44
        %v2883 = vpop.permute.xlu0 %2882
        %2884 = vrot.lane.b32.xlu0 %v2853, 44
        %v2885 = vpop.permute.xlu0 %2884
        %vm2902 = vcmask 392544
        %2903 = vst.msk [vmem:[#allocation2] sm:$0xff] %vm2902, %v2855
        %2904 = vst.msk [vmem:[#allocation2 + $0x8] sm:$0xff] %vm2902, %v2857
        %2905 = vst.msk [vmem:[#allocation2 + $0x10] sm:$0xff] %vm2902, %v2859
        %2906 = vst.msk [vmem:[#allocation2 + $0x18] sm:$0xff] %vm2902, %v2861
        %2907 = vst.msk [vmem:[#allocation2 + $0x20] sm:$0xff] %vm2902, %v2863
        %2908 = vst.msk [vmem:[#allocation2 + $0x28] sm:$0xff] %vm2902, %v2865
        %2909 = vst.msk [vmem:[#allocation2 + $0x30] sm:$0xff] %vm2902, %v2867
        %2910 = vst.msk [vmem:[#allocation2 + $0x38] sm:$0xff] %vm2902, %v2869
        %2911 = vst.msk [vmem:[#allocation2 + $0x40] sm:$0xff] %vm2902, %v2871
        %2912 = vst.msk [vmem:[#allocation2 + $0x48] sm:$0xff] %vm2902, %v2873
        %2913 = vst.msk [vmem:[#allocation2 + $0x50] sm:$0xff] %vm2902, %v2875
        %2914 = vst.msk [vmem:[#allocation2 + $0x58] sm:$0xff] %vm2902, %v2877
        %2915 = vst.msk [vmem:[#allocation2 + $0x60] sm:$0xff] %vm2902, %v2879
        %2916 = vst.msk [vmem:[#allocation2 + $0x68] sm:$0xff] %vm2902, %v2881
        %2917 = vst.msk [vmem:[#allocation2 + $0x70] sm:$0xff] %vm2902, %v2883
        %2918 = vst.msk [vmem:[#allocation2 + $0x78] sm:$0xff] %vm2902, %v2885
        %v2923 = vunpack.c.l.b16 %v1876
        %v2924 = vunpack.c.l.b16 %v1896
        %v2925 = vunpack.c.l.b16 %v1916
        %v2926 = vunpack.c.l.b16 %v1936
        %v2927 = vpack.c.b16 %v1974, %v1973
        %v2928 = vpack.c.b16 %v1976, %v1975
        %v2929 = vpack.c.b16 %v1978, %v1977
        %v2930 = vpack.c.b16 %v2923, %v1979
        %v2931 = vpack.c.b16 %v1982, %v1981
        %v2932 = vpack.c.b16 %v1984, %v1983
        %v2933 = vpack.c.b16 %v1986, %v1985
        %v2934 = vpack.c.b16 %v2924, %v1987
        %v2935 = vpack.c.b16 %v1990, %v1989
        %v2936 = vpack.c.b16 %v1992, %v1991
        %v2937 = vpack.c.b16 %v1994, %v1993
        %v2938 = vpack.c.b16 %v2925, %v1995
        %v2939 = vpack.c.b16 %v1998, %v1997
        %v2940 = vpack.c.b16 %v2000, %v1999
        %v2941 = vpack.c.b16 %v2002, %v2001
        %v2942 = vpack.c.b16 %v2926, %v2003
        %2943 = vrot.lane.b32.xlu0 %v2927, 48
        %v2944 = vpop.permute.xlu0 %2943
        %2945 = vrot.lane.b32.xlu0 %v2928, 48
        %v2946 = vpop.permute.xlu0 %2945
        %2947 = vrot.lane.b32.xlu0 %v2929, 48
        %v2948 = vpop.permute.xlu0 %2947
        %2949 = vrot.lane.b32.xlu0 %v2930, 48
        %v2950 = vpop.permute.xlu0 %2949
        %2951 = vrot.lane.b32.xlu0 %v2931, 48
        %v2952 = vpop.permute.xlu0 %2951
        %2953 = vrot.lane.b32.xlu0 %v2932, 48
        %v2954 = vpop.permute.xlu0 %2953
        %2955 = vrot.lane.b32.xlu0 %v2933, 48
        %v2956 = vpop.permute.xlu0 %2955
        %2957 = vrot.lane.b32.xlu0 %v2934, 48
        %v2958 = vpop.permute.xlu0 %2957
        %2959 = vrot.lane.b32.xlu0 %v2935, 48
        %v2960 = vpop.permute.xlu0 %2959
        %2961 = vrot.lane.b32.xlu0 %v2936, 48
        %v2962 = vpop.permute.xlu0 %2961
        %2963 = vrot.lane.b32.xlu0 %v2937, 48
        %v2964 = vpop.permute.xlu0 %2963
        %2965 = vrot.lane.b32.xlu0 %v2938, 48
        %v2966 = vpop.permute.xlu0 %2965
        %2967 = vrot.lane.b32.xlu0 %v2939, 48
        %v2968 = vpop.permute.xlu0 %2967
        %2969 = vrot.lane.b32.xlu0 %v2940, 48
        %v2970 = vpop.permute.xlu0 %2969
        %2971 = vrot.lane.b32.xlu0 %v2941, 48
        %v2972 = vpop.permute.xlu0 %2971
        %2973 = vrot.lane.b32.xlu0 %v2942, 48
        %v2974 = vpop.permute.xlu0 %2973
        %vm2991 = vcmask 425344
        %2992 = vst.msk [vmem:[#allocation2] sm:$0xff] %vm2991, %v2944
        %2993 = vst.msk [vmem:[#allocation2 + $0x8] sm:$0xff] %vm2991, %v2946
        %2994 = vst.msk [vmem:[#allocation2 + $0x10] sm:$0xff] %vm2991, %v2948
        %2995 = vst.msk [vmem:[#allocation2 + $0x18] sm:$0xff] %vm2991, %v2950
        %2996 = vst.msk [vmem:[#allocation2 + $0x20] sm:$0xff] %vm2991, %v2952
        %2997 = vst.msk [vmem:[#allocation2 + $0x28] sm:$0xff] %vm2991, %v2954
        %2998 = vst.msk [vmem:[#allocation2 + $0x30] sm:$0xff] %vm2991, %v2956
        %2999 = vst.msk [vmem:[#allocation2 + $0x38] sm:$0xff] %vm2991, %v2958
        %3000 = vst.msk [vmem:[#allocation2 + $0x40] sm:$0xff] %vm2991, %v2960
        %3001 = vst.msk [vmem:[#allocation2 + $0x48] sm:$0xff] %vm2991, %v2962
        %3002 = vst.msk [vmem:[#allocation2 + $0x50] sm:$0xff] %vm2991, %v2964
        %3003 = vst.msk [vmem:[#allocation2 + $0x58] sm:$0xff] %vm2991, %v2966
        %3004 = vst.msk [vmem:[#allocation2 + $0x60] sm:$0xff] %vm2991, %v2968
        %3005 = vst.msk [vmem:[#allocation2 + $0x68] sm:$0xff] %vm2991, %v2970
        %3006 = vst.msk [vmem:[#allocation2 + $0x70] sm:$0xff] %vm2991, %v2972
        %3007 = vst.msk [vmem:[#allocation2 + $0x78] sm:$0xff] %vm2991, %v2974
        %v3009 = vshrl.u32 %v1876, 16
        %v3011 = vrot.slane %v3009, 4
        %v3012 = vshll.u32 %v1876, 16
        %v3014 = vrot.slane %v3012, 5
        %v3015 = vor.u32 %v3011, %v3014
        %v3016 = vrot.slane %v3015, 4
        %v3018 = vshll.u32 %v1877, 16
        %v3020 = vrot.slane %v3018, 5
        %v3021 = vsel %vm384, %v3016, %v3020
        %v3023 = vshrl.u32 %v1896, 16
        %v3025 = vrot.slane %v3023, 4
        %v3026 = vshll.u32 %v1896, 16
        %v3028 = vrot.slane %v3026, 5
        %v3029 = vor.u32 %v3025, %v3028
        %v3030 = vrot.slane %v3029, 4
        %v3032 = vshll.u32 %v1897, 16
        %v3034 = vrot.slane %v3032, 5
        %v3035 = vsel %vm384, %v3030, %v3034
        %v3037 = vshrl.u32 %v1916, 16
        %v3039 = vrot.slane %v3037, 4
        %v3040 = vshll.u32 %v1916, 16
        %v3042 = vrot.slane %v3040, 5
        %v3043 = vor.u32 %v3039, %v3042
        %v3044 = vrot.slane %v3043, 4
        %v3046 = vshll.u32 %v1917, 16
        %v3048 = vrot.slane %v3046, 5
        %v3049 = vsel %vm384, %v3044, %v3048
        %v3051 = vshrl.u32 %v1936, 16
        %v3053 = vrot.slane %v3051, 4
        %v3054 = vshll.u32 %v1936, 16
        %v3056 = vrot.slane %v3054, 5
        %v3057 = vor.u32 %v3053, %v3056
        %v3058 = vrot.slane %v3057, 4
        %v3060 = vshll.u32 %v1937, 16
        %v3062 = vrot.slane %v3060, 5
        %v3063 = vsel %vm384, %v3058, %v3062
        %v3064 = vunpack.c.l.b16 %v3021
        %v3065 = vunpack.c.l.b16 %v3035
        %v3066 = vunpack.c.l.b16 %v3049
        %v3067 = vunpack.c.l.b16 %v3063
        %v3068 = vpack.c.b16 %v2535, %v2534
        %v3069 = vpack.c.b16 %v2537, %v2536
        %v3070 = vpack.c.b16 %v2539, %v2538
        %v3071 = vpack.c.b16 %v3064, %v2540
        %v3072 = vpack.c.b16 %v2543, %v2542
        %v3073 = vpack.c.b16 %v2545, %v2544
        %v3074 = vpack.c.b16 %v2547, %v2546
        %v3075 = vpack.c.b16 %v3065, %v2548
        %v3076 = vpack.c.b16 %v2551, %v2550
        %v3077 = vpack.c.b16 %v2553, %v2552
        %v3078 = vpack.c.b16 %v2555, %v2554
        %v3079 = vpack.c.b16 %v3066, %v2556
        %v3080 = vpack.c.b16 %v2559, %v2558
        %v3081 = vpack.c.b16 %v2561, %v2560
        %v3082 = vpack.c.b16 %v2563, %v2562
        %v3083 = vpack.c.b16 %v3067, %v2564
        %3084 = vrot.lane.b32.xlu0 %v3068, 52
        %v3085 = vpop.permute.xlu0 %3084
        %3086 = vrot.lane.b32.xlu0 %v3069, 52
        %v3087 = vpop.permute.xlu0 %3086
        %3088 = vrot.lane.b32.xlu0 %v3070, 52
        %v3089 = vpop.permute.xlu0 %3088
        %3090 = vrot.lane.b32.xlu0 %v3071, 52
        %v3091 = vpop.permute.xlu0 %3090
        %3092 = vrot.lane.b32.xlu0 %v3072, 52
        %v3093 = vpop.permute.xlu0 %3092
        %3094 = vrot.lane.b32.xlu0 %v3073, 52
        %v3095 = vpop.permute.xlu0 %3094
        %3096 = vrot.lane.b32.xlu0 %v3074, 52
        %v3097 = vpop.permute.xlu0 %3096
        %3098 = vrot.lane.b32.xlu0 %v3075, 52
        %v3099 = vpop.permute.xlu0 %3098
        %3100 = vrot.lane.b32.xlu0 %v3076, 52
        %v3101 = vpop.permute.xlu0 %3100
        %3102 = vrot.lane.b32.xlu0 %v3077, 52
        %v3103 = vpop.permute.xlu0 %3102
        %3104 = vrot.lane.b32.xlu0 %v3078, 52
        %v3105 = vpop.permute.xlu0 %3104
        %3106 = vrot.lane.b32.xlu0 %v3079, 52
        %v3107 = vpop.permute.xlu0 %3106
        %3108 = vrot.lane.b32.xlu0 %v3080, 52
        %v3109 = vpop.permute.xlu0 %3108
        %3110 = vrot.lane.b32.xlu0 %v3081, 52
        %v3111 = vpop.permute.xlu0 %3110
        %3112 = vrot.lane.b32.xlu0 %v3082, 52
        %v3113 = vpop.permute.xlu0 %3112
        %3114 = vrot.lane.b32.xlu0 %v3083, 52
        %v3115 = vpop.permute.xlu0 %3114
        %vm3132 = vcmask 458144
        %3133 = vst.msk [vmem:[#allocation2] sm:$0xff] %vm3132, %v3085
        %3134 = vst.msk [vmem:[#allocation2 + $0x8] sm:$0xff] %vm3132, %v3087
        %3135 = vst.msk [vmem:[#allocation2 + $0x10] sm:$0xff] %vm3132, %v3089
        %3136 = vst.msk [vmem:[#allocation2 + $0x18] sm:$0xff] %vm3132, %v3091
        %3137 = vst.msk [vmem:[#allocation2 + $0x20] sm:$0xff] %vm3132, %v3093
        %3138 = vst.msk [vmem:[#allocation2 + $0x28] sm:$0xff] %vm3132, %v3095
        %3139 = vst.msk [vmem:[#allocation2 + $0x30] sm:$0xff] %vm3132, %v3097
        %3140 = vst.msk [vmem:[#allocation2 + $0x38] sm:$0xff] %vm3132, %v3099
        %3141 = vst.msk [vmem:[#allocation2 + $0x40] sm:$0xff] %vm3132, %v3101
        %3142 = vst.msk [vmem:[#allocation2 + $0x48] sm:$0xff] %vm3132, %v3103
        %3143 = vst.msk [vmem:[#allocation2 + $0x50] sm:$0xff] %vm3132, %v3105
        %3144 = vst.msk [vmem:[#allocation2 + $0x58] sm:$0xff] %vm3132, %v3107
        %3145 = vst.msk [vmem:[#allocation2 + $0x60] sm:$0xff] %vm3132, %v3109
        %3146 = vst.msk [vmem:[#allocation2 + $0x68] sm:$0xff] %vm3132, %v3111
        %3147 = vst.msk [vmem:[#allocation2 + $0x70] sm:$0xff] %vm3132, %v3113
        %3148 = vst.msk [vmem:[#allocation2 + $0x78] sm:$0xff] %vm3132, %v3115
        %v3153 = vrot.slane %v1876, 5
        %v3154 = vrot.slane %v3153, 4
        %v3155 = vrot.slane %v1877, 5
        %v3156 = vsel %vm980, %v3154, %v3155
        %v3157 = vrot.slane %v1896, 5
        %v3158 = vrot.slane %v3157, 4
        %v3159 = vrot.slane %v1897, 5
        %v3160 = vsel %vm980, %v3158, %v3159
        %v3161 = vrot.slane %v1916, 5
        %v3162 = vrot.slane %v3161, 4
        %v3163 = vrot.slane %v1917, 5
        %v3164 = vsel %vm980, %v3162, %v3163
        %v3165 = vrot.slane %v1936, 5
        %v3166 = vrot.slane %v3165, 4
        %v3167 = vrot.slane %v1937, 5
        %v3168 = vsel %vm980, %v3166, %v3167
        %v3169 = vunpack.c.l.b16 %v3156
        %v3170 = vunpack.c.l.b16 %v3160
        %v3171 = vunpack.c.l.b16 %v3164
        %v3172 = vunpack.c.l.b16 %v3168
        %v3173 = vpack.c.b16 %v2808, %v2807
        %v3174 = vpack.c.b16 %v2810, %v2809
        %v3175 = vpack.c.b16 %v2812, %v2811
        %v3176 = vpack.c.b16 %v3169, %v2813
        %v3177 = vpack.c.b16 %v2816, %v2815
        %v3178 = vpack.c.b16 %v2818, %v2817
        %v3179 = vpack.c.b16 %v2820, %v2819
        %v3180 = vpack.c.b16 %v3170, %v2821
        %v3181 = vpack.c.b16 %v2824, %v2823
        %v3182 = vpack.c.b16 %v2826, %v2825
        %v3183 = vpack.c.b16 %v2828, %v2827
        %v3184 = vpack.c.b16 %v3171, %v2829
        %v3185 = vpack.c.b16 %v2832, %v2831
        %v3186 = vpack.c.b16 %v2834, %v2833
        %v3187 = vpack.c.b16 %v2836, %v2835
        %v3188 = vpack.c.b16 %v3172, %v2837
        %3189 = vrot.lane.b32.xlu0 %v3173, 56
        %v3190 = vpop.permute.xlu0 %3189
        %3191 = vrot.lane.b32.xlu0 %v3174, 56
        %v3192 = vpop.permute.xlu0 %3191
        %3193 = vrot.lane.b32.xlu0 %v3175, 56
        %v3194 = vpop.permute.xlu0 %3193
        %3195 = vrot.lane.b32.xlu0 %v3176, 56
        %v3196 = vpop.permute.xlu0 %3195
        %3197 = vrot.lane.b32.xlu0 %v3177, 56
        %v3198 = vpop.permute.xlu0 %3197
        %3199 = vrot.lane.b32.xlu0 %v3178, 56
        %v3200 = vpop.permute.xlu0 %3199
        %3201 = vrot.lane.b32.xlu0 %v3179, 56
        %v3202 = vpop.permute.xlu0 %3201
        %3203 = vrot.lane.b32.xlu0 %v3180, 56
        %v3204 = vpop.permute.xlu0 %3203
        %3205 = vrot.lane.b32.xlu0 %v3181, 56
        %v3206 = vpop.permute.xlu0 %3205
        %3207 = vrot.lane.b32.xlu0 %v3182, 56
        %v3208 = vpop.permute.xlu0 %3207
        %3209 = vrot.lane.b32.xlu0 %v3183, 56
        %v3210 = vpop.permute.xlu0 %3209
        %3211 = vrot.lane.b32.xlu0 %v3184, 56
        %v3212 = vpop.permute.xlu0 %3211
        %3213 = vrot.lane.b32.xlu0 %v3185, 56
        %v3214 = vpop.permute.xlu0 %3213
        %3215 = vrot.lane.b32.xlu0 %v3186, 56
        %v3216 = vpop.permute.xlu0 %3215
        %3217 = vrot.lane.b32.xlu0 %v3187, 56
        %v3218 = vpop.permute.xlu0 %3217
        %3219 = vrot.lane.b32.xlu0 %v3188, 56
        %v3220 = vpop.permute.xlu0 %3219
        %vm3237 = vcmask 490944
        %3238 = vst.msk [vmem:[#allocation2] sm:$0xff] %vm3237, %v3190
        %3239 = vst.msk [vmem:[#allocation2 + $0x8] sm:$0xff] %vm3237, %v3192
        %3240 = vst.msk [vmem:[#allocation2 + $0x10] sm:$0xff] %vm3237, %v3194
        %3241 = vst.msk [vmem:[#allocation2 + $0x18] sm:$0xff] %vm3237, %v3196
        %3242 = vst.msk [vmem:[#allocation2 + $0x20] sm:$0xff] %vm3237, %v3198
        %3243 = vst.msk [vmem:[#allocation2 + $0x28] sm:$0xff] %vm3237, %v3200
        %3244 = vst.msk [vmem:[#allocation2 + $0x30] sm:$0xff] %vm3237, %v3202
        %3245 = vst.msk [vmem:[#allocation2 + $0x38] sm:$0xff] %vm3237, %v3204
        %3246 = vst.msk [vmem:[#allocation2 + $0x40] sm:$0xff] %vm3237, %v3206
        %3247 = vst.msk [vmem:[#allocation2 + $0x48] sm:$0xff] %vm3237, %v3208
        %3248 = vst.msk [vmem:[#allocation2 + $0x50] sm:$0xff] %vm3237, %v3210
        %3249 = vst.msk [vmem:[#allocation2 + $0x58] sm:$0xff] %vm3237, %v3212
        %3250 = vst.msk [vmem:[#allocation2 + $0x60] sm:$0xff] %vm3237, %v3214
        %3251 = vst.msk [vmem:[#allocation2 + $0x68] sm:$0xff] %vm3237, %v3216
        %3252 = vst.msk [vmem:[#allocation2 + $0x70] sm:$0xff] %vm3237, %v3218
        %3253 = vst.msk [vmem:[#allocation2 + $0x78] sm:$0xff] %vm3237, %v3220
        %v3258 = vunpack.c.l.b16 %v1878
        %v3259 = vunpack.c.l.b16 %v1898
        %v3260 = vunpack.c.l.b16 %v1918
        %v3261 = vunpack.c.l.b16 %v1938
        %v3262 = vpack.c.b16 %v3258, %v2923
        %v3263 = vpack.c.b16 %v3259, %v2924
        %v3264 = vpack.c.b16 %v3260, %v2925
        %v3265 = vpack.c.b16 %v3261, %v2926
        %3266 = vrot.lane.b32.xlu0 %v2005, 60
        %v3267 = vpop.permute.xlu0 %3266
        %3268 = vrot.lane.b32.xlu0 %v2006, 60
        %v3269 = vpop.permute.xlu0 %3268
        %3270 = vrot.lane.b32.xlu0 %v2007, 60
        %v3271 = vpop.permute.xlu0 %3270
        %3272 = vrot.lane.b32.xlu0 %v3262, 60
        %v3273 = vpop.permute.xlu0 %3272
        %3274 = vrot.lane.b32.xlu0 %v2009, 60
        %v3275 = vpop.permute.xlu0 %3274
        %3276 = vrot.lane.b32.xlu0 %v2010, 60
        %v3277 = vpop.permute.xlu0 %3276
        %3278 = vrot.lane.b32.xlu0 %v2011, 60
        %v3279 = vpop.permute.xlu0 %3278
        %3280 = vrot.lane.b32.xlu0 %v3263, 60
        %v3281 = vpop.permute.xlu0 %3280
        %3282 = vrot.lane.b32.xlu0 %v2013, 60
        %v3283 = vpop.permute.xlu0 %3282
        %3284 = vrot.lane.b32.xlu0 %v2014, 60
        %v3285 = vpop.permute.xlu0 %3284
        %3286 = vrot.lane.b32.xlu0 %v2015, 60
        %v3287 = vpop.permute.xlu0 %3286
        %3288 = vrot.lane.b32.xlu0 %v3264, 60
        %v3289 = vpop.permute.xlu0 %3288
        %3290 = vrot.lane.b32.xlu0 %v2017, 60
        %v3291 = vpop.permute.xlu0 %3290
        %3292 = vrot.lane.b32.xlu0 %v2018, 60
        %v3293 = vpop.permute.xlu0 %3292
        %3294 = vrot.lane.b32.xlu0 %v2019, 60
        %v3295 = vpop.permute.xlu0 %3294
        %3296 = vrot.lane.b32.xlu0 %v3265, 60
        %v3297 = vpop.permute.xlu0 %3296
        %vm3314 = vcmask 523744
        %3315 = vst.msk [vmem:[#allocation2] sm:$0xff] %vm3314, %v3267
        %3316 = vst.msk [vmem:[#allocation2 + $0x8] sm:$0xff] %vm3314, %v3269
        %3317 = vst.msk [vmem:[#allocation2 + $0x10] sm:$0xff] %vm3314, %v3271
        %3318 = vst.msk [vmem:[#allocation2 + $0x18] sm:$0xff] %vm3314, %v3273
        %3319 = vst.msk [vmem:[#allocation2 + $0x20] sm:$0xff] %vm3314, %v3275
        %3320 = vst.msk [vmem:[#allocation2 + $0x28] sm:$0xff] %vm3314, %v3277
        %3321 = vst.msk [vmem:[#allocation2 + $0x30] sm:$0xff] %vm3314, %v3279
        %3322 = vst.msk [vmem:[#allocation2 + $0x38] sm:$0xff] %vm3314, %v3281
        %3323 = vst.msk [vmem:[#allocation2 + $0x40] sm:$0xff] %vm3314, %v3283
        %3324 = vst.msk [vmem:[#allocation2 + $0x48] sm:$0xff] %vm3314, %v3285
        %3325 = vst.msk [vmem:[#allocation2 + $0x50] sm:$0xff] %vm3314, %v3287
        %3326 = vst.msk [vmem:[#allocation2 + $0x58] sm:$0xff] %vm3314, %v3289
        %3327 = vst.msk [vmem:[#allocation2 + $0x60] sm:$0xff] %vm3314, %v3291
        %3328 = vst.msk [vmem:[#allocation2 + $0x68] sm:$0xff] %vm3314, %v3293
        %3329 = vst.msk [vmem:[#allocation2 + $0x70] sm:$0xff] %vm3314, %v3295
        %3330 = vst.msk [vmem:[#allocation2 + $0x78] sm:$0xff] %vm3314, %v3297
        %v3332 = vshrl.u32 %v1878, 16
        %v3334 = vrot.slane %v3332, 4
        %v3335 = vshll.u32 %v1878, 16
        %v3337 = vrot.slane %v3335, 5
        %v3338 = vor.u32 %v3334, %v3337
        %v3339 = vrot.slane %v3338, 4
        %v3341 = vshll.u32 %v1879, 16
        %v3343 = vrot.slane %v3341, 5
        %v3344 = vsel %vm384, %v3339, %v3343
        %v3346 = vshrl.u32 %v1898, 16
        %v3348 = vrot.slane %v3346, 4
        %v3349 = vshll.u32 %v1898, 16
        %v3351 = vrot.slane %v3349, 5
        %v3352 = vor.u32 %v3348, %v3351
        %v3353 = vrot.slane %v3352, 4
        %v3355 = vshll.u32 %v1899, 16
        %v3357 = vrot.slane %v3355, 5
        %v3358 = vsel %vm384, %v3353, %v3357
        %v3360 = vshrl.u32 %v1918, 16
        %v3362 = vrot.slane %v3360, 4
        %v3363 = vshll.u32 %v1918, 16
        %v3365 = vrot.slane %v3363, 5
        %v3366 = vor.u32 %v3362, %v3365
        %v3367 = vrot.slane %v3366, 4
        %v3369 = vshll.u32 %v1919, 16
        %v3371 = vrot.slane %v3369, 5
        %v3372 = vsel %vm384, %v3367, %v3371
        %v3374 = vshrl.u32 %v1938, 16
        %v3376 = vrot.slane %v3374, 4
        %v3377 = vshll.u32 %v1938, 16
        %v3379 = vrot.slane %v3377, 5
        %v3380 = vor.u32 %v3376, %v3379
        %v3381 = vrot.slane %v3380, 4
        %v3383 = vshll.u32 %v1939, 16
        %v3385 = vrot.slane %v3383, 5
        %v3386 = vsel %vm384, %v3381, %v3385
        %v3387 = vunpack.c.l.b16 %v3344
        %v3388 = vunpack.c.l.b16 %v3358
        %v3389 = vunpack.c.l.b16 %v3372
        %v3390 = vunpack.c.l.b16 %v3386
        %v3391 = vpack.c.b16 %v3387, %v3064
        %v3392 = vpack.c.b16 %v3388, %v3065
        %v3393 = vpack.c.b16 %v3389, %v3066
        %v3394 = vpack.c.b16 %v3390, %v3067
        %3395 = vrot.lane.b32.xlu0 %v2566, 64
        %v3396 = vpop.permute.xlu0 %3395
        %3397 = vrot.lane.b32.xlu0 %v2567, 64
        %v3398 = vpop.permute.xlu0 %3397
        %3399 = vrot.lane.b32.xlu0 %v2568, 64
        %v3400 = vpop.permute.xlu0 %3399
        %3401 = vrot.lane.b32.xlu0 %v3391, 64
        %v3402 = vpop.permute.xlu0 %3401
        %3403 = vrot.lane.b32.xlu0 %v2570, 64
        %v3404 = vpop.permute.xlu0 %3403
        %3405 = vrot.lane.b32.xlu0 %v2571, 64
        %v3406 = vpop.permute.xlu0 %3405
        %3407 = vrot.lane.b32.xlu0 %v2572, 64
        %v3408 = vpop.permute.xlu0 %3407
        %3409 = vrot.lane.b32.xlu0 %v3392, 64
        %v3410 = vpop.permute.xlu0 %3409
        %3411 = vrot.lane.b32.xlu0 %v2574, 64
        %v3412 = vpop.permute.xlu0 %3411
        %3413 = vrot.lane.b32.xlu0 %v2575, 64
        %v3414 = vpop.permute.xlu0 %3413
        %3415 = vrot.lane.b32.xlu0 %v2576, 64
        %v3416 = vpop.permute.xlu0 %3415
        %3417 = vrot.lane.b32.xlu0 %v3393, 64
        %v3418 = vpop.permute.xlu0 %3417
        %3419 = vrot.lane.b32.xlu0 %v2578, 64
        %v3420 = vpop.permute.xlu0 %3419
        %3421 = vrot.lane.b32.xlu0 %v2579, 64
        %v3422 = vpop.permute.xlu0 %3421
        %3423 = vrot.lane.b32.xlu0 %v2580, 64
        %v3424 = vpop.permute.xlu0 %3423
        %3425 = vrot.lane.b32.xlu0 %v3394, 64
        %v3426 = vpop.permute.xlu0 %3425
        %vm3443 = vcmask 556544
        %3444 = vst.msk [vmem:[#allocation2] sm:$0xff] %vm3443, %v3396
        %3445 = vst.msk [vmem:[#allocation2 + $0x8] sm:$0xff] %vm3443, %v3398
        %3446 = vst.msk [vmem:[#allocation2 + $0x10] sm:$0xff] %vm3443, %v3400
        %3447 = vst.msk [vmem:[#allocation2 + $0x18] sm:$0xff] %vm3443, %v3402
        %3448 = vst.msk [vmem:[#allocation2 + $0x20] sm:$0xff] %vm3443, %v3404
        %3449 = vst.msk [vmem:[#allocation2 + $0x28] sm:$0xff] %vm3443, %v3406
        %3450 = vst.msk [vmem:[#allocation2 + $0x30] sm:$0xff] %vm3443, %v3408
        %3451 = vst.msk [vmem:[#allocation2 + $0x38] sm:$0xff] %vm3443, %v3410
        %3452 = vst.msk [vmem:[#allocation2 + $0x40] sm:$0xff] %vm3443, %v3412
        %3453 = vst.msk [vmem:[#allocation2 + $0x48] sm:$0xff] %vm3443, %v3414
        %3454 = vst.msk [vmem:[#allocation2 + $0x50] sm:$0xff] %vm3443, %v3416
        %3455 = vst.msk [vmem:[#allocation2 + $0x58] sm:$0xff] %vm3443, %v3418
        %3456 = vst.msk [vmem:[#allocation2 + $0x60] sm:$0xff] %vm3443, %v3420
        %3457 = vst.msk [vmem:[#allocation2 + $0x68] sm:$0xff] %vm3443, %v3422
        %3458 = vst.msk [vmem:[#allocation2 + $0x70] sm:$0xff] %vm3443, %v3424
        %3459 = vst.msk [vmem:[#allocation2 + $0x78] sm:$0xff] %vm3443, %v3426
        %v3464 = vrot.slane %v1878, 5
        %v3465 = vrot.slane %v3464, 4
        %v3466 = vrot.slane %v1879, 5
        %v3467 = vsel %vm980, %v3465, %v3466
        %v3468 = vrot.slane %v1898, 5
        %v3469 = vrot.slane %v3468, 4
        %v3470 = vrot.slane %v1899, 5
        %v3471 = vsel %vm980, %v3469, %v3470
        %v3472 = vrot.slane %v1918, 5
        %v3473 = vrot.slane %v3472, 4
        %v3474 = vrot.slane %v1919, 5
        %v3475 = vsel %vm980, %v3473, %v3474
        %v3476 = vrot.slane %v1938, 5
        %v3477 = vrot.slane %v3476, 4
        %v3478 = vrot.slane %v1939, 5
        %v3479 = vsel %vm980, %v3477, %v3478
        %v3480 = vunpack.c.l.b16 %v3467
        %v3481 = vunpack.c.l.b16 %v3471
        %v3482 = vunpack.c.l.b16 %v3475
        %v3483 = vunpack.c.l.b16 %v3479
        %v3484 = vpack.c.b16 %v3480, %v3169
        %v3485 = vpack.c.b16 %v3481, %v3170
        %v3486 = vpack.c.b16 %v3482, %v3171
        %v3487 = vpack.c.b16 %v3483, %v3172
        %3488 = vrot.lane.b32.xlu0 %v2839, 68
        %v3489 = vpop.permute.xlu0 %3488
        %3490 = vrot.lane.b32.xlu0 %v2840, 68
        %v3491 = vpop.permute.xlu0 %3490
        %3492 = vrot.lane.b32.xlu0 %v2841, 68
        %v3493 = vpop.permute.xlu0 %3492
        %3494 = vrot.lane.b32.xlu0 %v3484, 68
        %v3495 = vpop.permute.xlu0 %3494
        %3496 = vrot.lane.b32.xlu0 %v2843, 68
        %v3497 = vpop.permute.xlu0 %3496
        %3498 = vrot.lane.b32.xlu0 %v2844, 68
        %v3499 = vpop.permute.xlu0 %3498
        %3500 = vrot.lane.b32.xlu0 %v2845, 68
        %v3501 = vpop.permute.xlu0 %3500
        %3502 = vrot.lane.b32.xlu0 %v3485, 68
        %v3503 = vpop.permute.xlu0 %3502
        %3504 = vrot.lane.b32.xlu0 %v2847, 68
        %v3505 = vpop.permute.xlu0 %3504
        %3506 = vrot.lane.b32.xlu0 %v2848, 68
        %v3507 = vpop.permute.xlu0 %3506
        %3508 = vrot.lane.b32.xlu0 %v2849, 68
        %v3509 = vpop.permute.xlu0 %3508
        %3510 = vrot.lane.b32.xlu0 %v3486, 68
        %v3511 = vpop.permute.xlu0 %3510
        %3512 = vrot.lane.b32.xlu0 %v2851, 68
        %v3513 = vpop.permute.xlu0 %3512
        %3514 = vrot.lane.b32.xlu0 %v2852, 68
        %v3515 = vpop.permute.xlu0 %3514
        %3516 = vrot.lane.b32.xlu0 %v2853, 68
        %v3517 = vpop.permute.xlu0 %3516
        %3518 = vrot.lane.b32.xlu0 %v3487, 68
        %v3519 = vpop.permute.xlu0 %3518
        %vm3536 = vcmask 589344
        %3537 = vst.msk [vmem:[#allocation2] sm:$0xff] %vm3536, %v3489
        %3538 = vst.msk [vmem:[#allocation2 + $0x8] sm:$0xff] %vm3536, %v3491
        %3539 = vst.msk [vmem:[#allocation2 + $0x10] sm:$0xff] %vm3536, %v3493
        %3540 = vst.msk [vmem:[#allocation2 + $0x18] sm:$0xff] %vm3536, %v3495
        %3541 = vst.msk [vmem:[#allocation2 + $0x20] sm:$0xff] %vm3536, %v3497
        %3542 = vst.msk [vmem:[#allocation2 + $0x28] sm:$0xff] %vm3536, %v3499
        %3543 = vst.msk [vmem:[#allocation2 + $0x30] sm:$0xff] %vm3536, %v3501
        %3544 = vst.msk [vmem:[#allocation2 + $0x38] sm:$0xff] %vm3536, %v3503
        %3545 = vst.msk [vmem:[#allocation2 + $0x40] sm:$0xff] %vm3536, %v3505
        %3546 = vst.msk [vmem:[#allocation2 + $0x48] sm:$0xff] %vm3536, %v3507
        %3547 = vst.msk [vmem:[#allocation2 + $0x50] sm:$0xff] %vm3536, %v3509
        %3548 = vst.msk [vmem:[#allocation2 + $0x58] sm:$0xff] %vm3536, %v3511
        %3549 = vst.msk [vmem:[#allocation2 + $0x60] sm:$0xff] %vm3536, %v3513
        %3550 = vst.msk [vmem:[#allocation2 + $0x68] sm:$0xff] %vm3536, %v3515
        %3551 = vst.msk [vmem:[#allocation2 + $0x70] sm:$0xff] %vm3536, %v3517
        %3552 = vst.msk [vmem:[#allocation2 + $0x78] sm:$0xff] %vm3536, %v3519
        %s3553 = sadd.s32 %s185, 2
        %s3554 = smul.u32 %s3553, 20
        %s3555 = smul.addr %s3554, 4
        %s3556 = scalar_lea.vmem %s182, %s3555
        %v3557 = vld [vmem:[%s3556] sm:$0xf]
        %v3558 = vld [vmem:[%s3556 + $0x4] sm:$0x1]
        %v3559 = vld [vmem:[%s3556 + $0x8] sm:$0xf]
        %v3560 = vld [vmem:[%s3556 + $0xc] sm:$0x1]
        %v3561 = vld [vmem:[%s3556 + $0x10] sm:$0xf]
        %v3562 = vld [vmem:[%s3556 + $0x14] sm:$0x1]
        %v3563 = vld [vmem:[%s3556 + $0x18] sm:$0xf]
        %v3564 = vld [vmem:[%s3556 + $0x1c] sm:$0x1]
        %v3565 = vld [vmem:[%s3556 + $0x20] sm:$0xf]
        %v3566 = vld [vmem:[%s3556 + $0x24] sm:$0x1]
        %v3567 = vld [vmem:[%s3556 + $0x28] sm:$0xf]
        %v3568 = vld [vmem:[%s3556 + $0x2c] sm:$0x1]
        %v3569 = vld [vmem:[%s3556 + $0x30] sm:$0xf]
        %v3570 = vld [vmem:[%s3556 + $0x34] sm:$0x1]
        %v3571 = vld [vmem:[%s3556 + $0x38] sm:$0xf]
        %v3572 = vld [vmem:[%s3556 + $0x3c] sm:$0x1]
        %v3573 = vld [vmem:[%s3556 + $0x40] sm:$0xf]
        %v3574 = vld [vmem:[%s3556 + $0x44] sm:$0x1]
        %v3575 = vld [vmem:[%s3556 + $0x48] sm:$0xf]
        %v3576 = vld [vmem:[%s3556 + $0x4c] sm:$0x1]
        %v3577 = vld [vmem:[%s3556 + $0x50] sm:$0xf]
        %v3578 = vld [vmem:[%s3556 + $0x54] sm:$0x1]
        %v3579 = vld [vmem:[%s3556 + $0x58] sm:$0xf]
        %v3580 = vld [vmem:[%s3556 + $0x5c] sm:$0x1]
        %v3581 = vld [vmem:[%s3556 + $0x60] sm:$0xf]
        %v3582 = vld [vmem:[%s3556 + $0x64] sm:$0x1]
        %v3583 = vld [vmem:[%s3556 + $0x68] sm:$0xf]
        %v3584 = vld [vmem:[%s3556 + $0x6c] sm:$0x1]
        %v3585 = vld [vmem:[%s3556 + $0x70] sm:$0xf]
        %v3586 = vld [vmem:[%s3556 + $0x74] sm:$0x1]
        %v3587 = vld [vmem:[%s3556 + $0x78] sm:$0xf]
        %v3588 = vld [vmem:[%s3556 + $0x7c] sm:$0x1]
        %v3589 = vld [vmem:[%s3556 + $0x80] sm:$0xf]
        %v3590 = vld [vmem:[%s3556 + $0x84] sm:$0x1]
        %v3591 = vld [vmem:[%s3556 + $0x88] sm:$0xf]
        %v3592 = vld [vmem:[%s3556 + $0x8c] sm:$0x1]
        %v3593 = vld [vmem:[%s3556 + $0x90] sm:$0xf]
        %v3594 = vld [vmem:[%s3556 + $0x94] sm:$0x1]
        %v3595 = vld [vmem:[%s3556 + $0x98] sm:$0xf]
        %v3596 = vld [vmem:[%s3556 + $0x9c] sm:$0x1]
        %v3597 = vld [vmem:[%s3556 + $0xa0] sm:$0xf]
        %v3598 = vld [vmem:[%s3556 + $0xa4] sm:$0x1]
        %v3599 = vld [vmem:[%s3556 + $0xa8] sm:$0xf]
        %v3600 = vld [vmem:[%s3556 + $0xac] sm:$0x1]
        %v3601 = vld [vmem:[%s3556 + $0xb0] sm:$0xf]
        %v3602 = vld [vmem:[%s3556 + $0xb4] sm:$0x1]
        %v3603 = vld [vmem:[%s3556 + $0xb8] sm:$0xf]
        %v3604 = vld [vmem:[%s3556 + $0xbc] sm:$0x1]
        %v3605 = vld [vmem:[%s3556 + $0xc0] sm:$0xf]
        %v3606 = vld [vmem:[%s3556 + $0xc4] sm:$0x1]
        %v3607 = vld [vmem:[%s3556 + $0xc8] sm:$0xf]
        %v3608 = vld [vmem:[%s3556 + $0xcc] sm:$0x1]
        %v3609 = vld [vmem:[%s3556 + $0xd0] sm:$0xf]
        %v3610 = vld [vmem:[%s3556 + $0xd4] sm:$0x1]
        %v3611 = vld [vmem:[%s3556 + $0xd8] sm:$0xf]
        %v3612 = vld [vmem:[%s3556 + $0xdc] sm:$0x1]
        %v3613 = vld [vmem:[%s3556 + $0xe0] sm:$0xf]
        %v3614 = vld [vmem:[%s3556 + $0xe4] sm:$0x1]
        %v3615 = vld [vmem:[%s3556 + $0xe8] sm:$0xf]
        %v3616 = vld [vmem:[%s3556 + $0xec] sm:$0x1]
        %v3617 = vld [vmem:[%s3556 + $0xf0] sm:$0xf]
        %v3618 = vld [vmem:[%s3556 + $0xf4] sm:$0x1]
        %v3619 = vld [vmem:[%s3556 + $0xf8] sm:$0xf]
        %v3620 = vld [vmem:[%s3556 + $0xfc] sm:$0x1]
        %v3621 = vld [vmem:[%s3556 + $0x100] sm:$0xf]
        %v3622 = vld [vmem:[%s3556 + $0x104] sm:$0x1]
        %v3623 = vld [vmem:[%s3556 + $0x108] sm:$0xf]
        %v3624 = vld [vmem:[%s3556 + $0x10c] sm:$0x1]
        %v3625 = vld [vmem:[%s3556 + $0x110] sm:$0xf]
        %v3626 = vld [vmem:[%s3556 + $0x114] sm:$0x1]
        %v3627 = vld [vmem:[%s3556 + $0x118] sm:$0xf]
        %v3628 = vld [vmem:[%s3556 + $0x11c] sm:$0x1]
        %v3629 = vld [vmem:[%s3556 + $0x120] sm:$0xf]
        %v3630 = vld [vmem:[%s3556 + $0x124] sm:$0x1]
        %v3631 = vld [vmem:[%s3556 + $0x128] sm:$0xf]
        %v3632 = vld [vmem:[%s3556 + $0x12c] sm:$0x1]
        %v3633 = vld [vmem:[%s3556 + $0x130] sm:$0xf]
        %v3634 = vld [vmem:[%s3556 + $0x134] sm:$0x1]
        %v3635 = vld [vmem:[%s3556 + $0x138] sm:$0xf]
        %v3636 = vld [vmem:[%s3556 + $0x13c] sm:$0x1]
        %v3669 = vunpack.c.l.b16 %v3557
        %v3670 = vunpack.c.l.b16 %v3559
        %v3671 = vunpack.c.l.b16 %v3561
        %v3672 = vunpack.c.l.b16 %v3563
        %v3673 = vunpack.c.l.b16 %v3565
        %v3674 = vunpack.c.l.b16 %v3567
        %v3675 = vunpack.c.l.b16 %v3569
        %v3676 = vunpack.c.l.b16 %v3571
        %v3677 = vunpack.c.l.b16 %v3577
        %v3678 = vunpack.c.l.b16 %v3579
        %v3679 = vunpack.c.l.b16 %v3581
        %v3680 = vunpack.c.l.b16 %v3583
        %v3681 = vunpack.c.l.b16 %v3585
        %v3682 = vunpack.c.l.b16 %v3587
        %v3683 = vunpack.c.l.b16 %v3589
        %v3684 = vunpack.c.l.b16 %v3591
        %v3685 = vunpack.c.l.b16 %v3597
        %v3686 = vunpack.c.l.b16 %v3599
        %v3687 = vunpack.c.l.b16 %v3601
        %v3688 = vunpack.c.l.b16 %v3603
        %v3689 = vunpack.c.l.b16 %v3605
        %v3690 = vunpack.c.l.b16 %v3607
        %v3691 = vunpack.c.l.b16 %v3609
        %v3692 = vunpack.c.l.b16 %v3611
        %v3693 = vunpack.c.l.b16 %v3617
        %v3694 = vunpack.c.l.b16 %v3619
        %v3695 = vunpack.c.l.b16 %v3621
        %v3696 = vunpack.c.l.b16 %v3623
        %v3697 = vunpack.c.l.b16 %v3625
        %v3698 = vunpack.c.l.b16 %v3627
        %v3699 = vunpack.c.l.b16 %v3629
        %v3700 = vunpack.c.l.b16 %v3631
        %v3701 = vpack.c.b16 %v3670, %v3669
        %v3702 = vpack.c.b16 %v3672, %v3671
        %v3703 = vpack.c.b16 %v3674, %v3673
        %v3704 = vpack.c.b16 %v3676, %v3675
        %v3705 = vpack.c.b16 %v3678, %v3677
        %v3706 = vpack.c.b16 %v3680, %v3679
        %v3707 = vpack.c.b16 %v3682, %v3681
        %v3708 = vpack.c.b16 %v3684, %v3683
        %v3709 = vpack.c.b16 %v3686, %v3685
        %v3710 = vpack.c.b16 %v3688, %v3687
        %v3711 = vpack.c.b16 %v3690, %v3689
        %v3712 = vpack.c.b16 %v3692, %v3691
        %v3713 = vpack.c.b16 %v3694, %v3693
        %v3714 = vpack.c.b16 %v3696, %v3695
        %v3715 = vpack.c.b16 %v3698, %v3697
        %v3716 = vpack.c.b16 %v3700, %v3699
        %3717 = vrot.lane.b32.xlu0 %v3701, 72
        %v3718 = vpop.permute.xlu0 %3717
        %3719 = vrot.lane.b32.xlu0 %v3702, 72
        %v3720 = vpop.permute.xlu0 %3719
        %3721 = vrot.lane.b32.xlu0 %v3703, 72
        %v3722 = vpop.permute.xlu0 %3721
        %3723 = vrot.lane.b32.xlu0 %v3704, 72
        %v3724 = vpop.permute.xlu0 %3723
        %3725 = vrot.lane.b32.xlu0 %v3705, 72
        %v3726 = vpop.permute.xlu0 %3725
        %3727 = vrot.lane.b32.xlu0 %v3706, 72
        %v3728 = vpop.permute.xlu0 %3727
        %3729 = vrot.lane.b32.xlu0 %v3707, 72
        %v3730 = vpop.permute.xlu0 %3729
        %3731 = vrot.lane.b32.xlu0 %v3708, 72
        %v3732 = vpop.permute.xlu0 %3731
        %3733 = vrot.lane.b32.xlu0 %v3709, 72
        %v3734 = vpop.permute.xlu0 %3733
        %3735 = vrot.lane.b32.xlu0 %v3710, 72
        %v3736 = vpop.permute.xlu0 %3735
        %3737 = vrot.lane.b32.xlu0 %v3711, 72
        %v3738 = vpop.permute.xlu0 %3737
        %3739 = vrot.lane.b32.xlu0 %v3712, 72
        %v3740 = vpop.permute.xlu0 %3739
        %3741 = vrot.lane.b32.xlu0 %v3713, 72
        %v3742 = vpop.permute.xlu0 %3741
        %3743 = vrot.lane.b32.xlu0 %v3714, 72
        %v3744 = vpop.permute.xlu0 %3743
        %3745 = vrot.lane.b32.xlu0 %v3715, 72
        %v3746 = vpop.permute.xlu0 %3745
        %3747 = vrot.lane.b32.xlu0 %v3716, 72
        %v3748 = vpop.permute.xlu0 %3747
        %vm3765 = vcmask 622144
        %3766 = vst.msk [vmem:[#allocation2] sm:$0xff] %vm3765, %v3718
        %3767 = vst.msk [vmem:[#allocation2 + $0x8] sm:$0xff] %vm3765, %v3720
        %3768 = vst.msk [vmem:[#allocation2 + $0x10] sm:$0xff] %vm3765, %v3722
        %3769 = vst.msk [vmem:[#allocation2 + $0x18] sm:$0xff] %vm3765, %v3724
        %3770 = vst.msk [vmem:[#allocation2 + $0x20] sm:$0xff] %vm3765, %v3726
        %3771 = vst.msk [vmem:[#allocation2 + $0x28] sm:$0xff] %vm3765, %v3728
        %3772 = vst.msk [vmem:[#allocation2 + $0x30] sm:$0xff] %vm3765, %v3730
        %3773 = vst.msk [vmem:[#allocation2 + $0x38] sm:$0xff] %vm3765, %v3732
        %3774 = vst.msk [vmem:[#allocation2 + $0x40] sm:$0xff] %vm3765, %v3734
        %3775 = vst.msk [vmem:[#allocation2 + $0x48] sm:$0xff] %vm3765, %v3736
        %3776 = vst.msk [vmem:[#allocation2 + $0x50] sm:$0xff] %vm3765, %v3738
        %3777 = vst.msk [vmem:[#allocation2 + $0x58] sm:$0xff] %vm3765, %v3740
        %3778 = vst.msk [vmem:[#allocation2 + $0x60] sm:$0xff] %vm3765, %v3742
        %3779 = vst.msk [vmem:[#allocation2 + $0x68] sm:$0xff] %vm3765, %v3744
        %3780 = vst.msk [vmem:[#allocation2 + $0x70] sm:$0xff] %vm3765, %v3746
        %3781 = vst.msk [vmem:[#allocation2 + $0x78] sm:$0xff] %vm3765, %v3748
        %v3783 = vshrl.u32 %v3557, 16
        %v3785 = vrot.slane %v3783, 4
        %v3786 = vshll.u32 %v3557, 16
        %v3788 = vrot.slane %v3786, 5
        %v3789 = vor.u32 %v3785, %v3788
        %v3790 = vrot.slane %v3789, 4
        %v3792 = vshll.u32 %v3558, 16
        %v3794 = vrot.slane %v3792, 5
        %v3795 = vsel %vm384, %v3790, %v3794
        %v3797 = vshrl.u32 %v3559, 16
        %v3799 = vrot.slane %v3797, 4
        %v3800 = vshll.u32 %v3559, 16
        %v3802 = vrot.slane %v3800, 5
        %v3803 = vor.u32 %v3799, %v3802
        %v3804 = vrot.slane %v3803, 4
        %v3806 = vshll.u32 %v3560, 16
        %v3808 = vrot.slane %v3806, 5
        %v3809 = vsel %vm384, %v3804, %v3808
        %v3811 = vshrl.u32 %v3561, 16
        %v3813 = vrot.slane %v3811, 4
        %v3814 = vshll.u32 %v3561, 16
        %v3816 = vrot.slane %v3814, 5
        %v3817 = vor.u32 %v3813, %v3816
        %v3818 = vrot.slane %v3817, 4
        %v3820 = vshll.u32 %v3562, 16
        %v3822 = vrot.slane %v3820, 5
        %v3823 = vsel %vm384, %v3818, %v3822
        %v3825 = vshrl.u32 %v3563, 16
        %v3827 = vrot.slane %v3825, 4
        %v3828 = vshll.u32 %v3563, 16
        %v3830 = vrot.slane %v3828, 5
        %v3831 = vor.u32 %v3827, %v3830
        %v3832 = vrot.slane %v3831, 4
        %v3834 = vshll.u32 %v3564, 16
        %v3836 = vrot.slane %v3834, 5
        %v3837 = vsel %vm384, %v3832, %v3836
        %v3839 = vshrl.u32 %v3565, 16
        %v3841 = vrot.slane %v3839, 4
        %v3842 = vshll.u32 %v3565, 16
        %v3844 = vrot.slane %v3842, 5
        %v3845 = vor.u32 %v3841, %v3844
        %v3846 = vrot.slane %v3845, 4
        %v3848 = vshll.u32 %v3566, 16
        %v3850 = vrot.slane %v3848, 5
        %v3851 = vsel %vm384, %v3846, %v3850
        %v3853 = vshrl.u32 %v3567, 16
        %v3855 = vrot.slane %v3853, 4
        %v3856 = vshll.u32 %v3567, 16
        %v3858 = vrot.slane %v3856, 5
        %v3859 = vor.u32 %v3855, %v3858
        %v3860 = vrot.slane %v3859, 4
        %v3862 = vshll.u32 %v3568, 16
        %v3864 = vrot.slane %v3862, 5
        %v3865 = vsel %vm384, %v3860, %v3864
        %v3867 = vshrl.u32 %v3569, 16
        %v3869 = vrot.slane %v3867, 4
        %v3870 = vshll.u32 %v3569, 16
        %v3872 = vrot.slane %v3870, 5
        %v3873 = vor.u32 %v3869, %v3872
        %v3874 = vrot.slane %v3873, 4
        %v3876 = vshll.u32 %v3570, 16
        %v3878 = vrot.slane %v3876, 5
        %v3879 = vsel %vm384, %v3874, %v3878
        %v3881 = vshrl.u32 %v3571, 16
        %v3883 = vrot.slane %v3881, 4
        %v3884 = vshll.u32 %v3571, 16
        %v3886 = vrot.slane %v3884, 5
        %v3887 = vor.u32 %v3883, %v3886
        %v3888 = vrot.slane %v3887, 4
        %v3890 = vshll.u32 %v3572, 16
        %v3892 = vrot.slane %v3890, 5
        %v3893 = vsel %vm384, %v3888, %v3892
        %v3895 = vshrl.u32 %v3577, 16
        %v3897 = vrot.slane %v3895, 4
        %v3898 = vshll.u32 %v3577, 16
        %v3900 = vrot.slane %v3898, 5
        %v3901 = vor.u32 %v3897, %v3900
        %v3902 = vrot.slane %v3901, 4
        %v3904 = vshll.u32 %v3578, 16
        %v3906 = vrot.slane %v3904, 5
        %v3907 = vsel %vm384, %v3902, %v3906
        %v3909 = vshrl.u32 %v3579, 16
        %v3911 = vrot.slane %v3909, 4
        %v3912 = vshll.u32 %v3579, 16
        %v3914 = vrot.slane %v3912, 5
        %v3915 = vor.u32 %v3911, %v3914
        %v3916 = vrot.slane %v3915, 4
        %v3918 = vshll.u32 %v3580, 16
        %v3920 = vrot.slane %v3918, 5
        %v3921 = vsel %vm384, %v3916, %v3920
        %v3923 = vshrl.u32 %v3581, 16
        %v3925 = vrot.slane %v3923, 4
        %v3926 = vshll.u32 %v3581, 16
        %v3928 = vrot.slane %v3926, 5
        %v3929 = vor.u32 %v3925, %v3928
        %v3930 = vrot.slane %v3929, 4
        %v3932 = vshll.u32 %v3582, 16
        %v3934 = vrot.slane %v3932, 5
        %v3935 = vsel %vm384, %v3930, %v3934
        %v3937 = vshrl.u32 %v3583, 16
        %v3939 = vrot.slane %v3937, 4
        %v3940 = vshll.u32 %v3583, 16
        %v3942 = vrot.slane %v3940, 5
        %v3943 = vor.u32 %v3939, %v3942
        %v3944 = vrot.slane %v3943, 4
        %v3946 = vshll.u32 %v3584, 16
        %v3948 = vrot.slane %v3946, 5
        %v3949 = vsel %vm384, %v3944, %v3948
        %v3951 = vshrl.u32 %v3585, 16
        %v3953 = vrot.slane %v3951, 4
        %v3954 = vshll.u32 %v3585, 16
        %v3956 = vrot.slane %v3954, 5
        %v3957 = vor.u32 %v3953, %v3956
        %v3958 = vrot.slane %v3957, 4
        %v3960 = vshll.u32 %v3586, 16
        %v3962 = vrot.slane %v3960, 5
        %v3963 = vsel %vm384, %v3958, %v3962
        %v3965 = vshrl.u32 %v3587, 16
        %v3967 = vrot.slane %v3965, 4
        %v3968 = vshll.u32 %v3587, 16
        %v3970 = vrot.slane %v3968, 5
        %v3971 = vor.u32 %v3967, %v3970
        %v3972 = vrot.slane %v3971, 4
        %v3974 = vshll.u32 %v3588, 16
        %v3976 = vrot.slane %v3974, 5
        %v3977 = vsel %vm384, %v3972, %v3976
        %v3979 = vshrl.u32 %v3589, 16
        %v3981 = vrot.slane %v3979, 4
        %v3982 = vshll.u32 %v3589, 16
        %v3984 = vrot.slane %v3982, 5
        %v3985 = vor.u32 %v3981, %v3984
        %v3986 = vrot.slane %v3985, 4
        %v3988 = vshll.u32 %v3590, 16
        %v3990 = vrot.slane %v3988, 5
        %v3991 = vsel %vm384, %v3986, %v3990
        %v3993 = vshrl.u32 %v3591, 16
        %v3995 = vrot.slane %v3993, 4
        %v3996 = vshll.u32 %v3591, 16
        %v3998 = vrot.slane %v3996, 5
        %v3999 = vor.u32 %v3995, %v3998
        %v4000 = vrot.slane %v3999, 4
        %v4002 = vshll.u32 %v3592, 16
        %v4004 = vrot.slane %v4002, 5
        %v4005 = vsel %vm384, %v4000, %v4004
        %v4007 = vshrl.u32 %v3597, 16
        %v4009 = vrot.slane %v4007, 4
        %v4010 = vshll.u32 %v3597, 16
        %v4012 = vrot.slane %v4010, 5
        %v4013 = vor.u32 %v4009, %v4012
        %v4014 = vrot.slane %v4013, 4
        %v4016 = vshll.u32 %v3598, 16
        %v4018 = vrot.slane %v4016, 5
        %v4019 = vsel %vm384, %v4014, %v4018
        %v4021 = vshrl.u32 %v3599, 16
        %v4023 = vrot.slane %v4021, 4
        %v4024 = vshll.u32 %v3599, 16
        %v4026 = vrot.slane %v4024, 5
        %v4027 = vor.u32 %v4023, %v4026
        %v4028 = vrot.slane %v4027, 4
        %v4030 = vshll.u32 %v3600, 16
        %v4032 = vrot.slane %v4030, 5
        %v4033 = vsel %vm384, %v4028, %v4032
        %v4035 = vshrl.u32 %v3601, 16
        %v4037 = vrot.slane %v4035, 4
        %v4038 = vshll.u32 %v3601, 16
        %v4040 = vrot.slane %v4038, 5
        %v4041 = vor.u32 %v4037, %v4040
        %v4042 = vrot.slane %v4041, 4
        %v4044 = vshll.u32 %v3602, 16
        %v4046 = vrot.slane %v4044, 5
        %v4047 = vsel %vm384, %v4042, %v4046
        %v4049 = vshrl.u32 %v3603, 16
        %v4051 = vrot.slane %v4049, 4
        %v4052 = vshll.u32 %v3603, 16
        %v4054 = vrot.slane %v4052, 5
        %v4055 = vor.u32 %v4051, %v4054
        %v4056 = vrot.slane %v4055, 4
        %v4058 = vshll.u32 %v3604, 16
        %v4060 = vrot.slane %v4058, 5
        %v4061 = vsel %vm384, %v4056, %v4060
        %v4063 = vshrl.u32 %v3605, 16
        %v4065 = vrot.slane %v4063, 4
        %v4066 = vshll.u32 %v3605, 16
        %v4068 = vrot.slane %v4066, 5
        %v4069 = vor.u32 %v4065, %v4068
        %v4070 = vrot.slane %v4069, 4
        %v4072 = vshll.u32 %v3606, 16
        %v4074 = vrot.slane %v4072, 5
        %v4075 = vsel %vm384, %v4070, %v4074
        %v4077 = vshrl.u32 %v3607, 16
        %v4079 = vrot.slane %v4077, 4
        %v4080 = vshll.u32 %v3607, 16
        %v4082 = vrot.slane %v4080, 5
        %v4083 = vor.u32 %v4079, %v4082
        %v4084 = vrot.slane %v4083, 4
        %v4086 = vshll.u32 %v3608, 16
        %v4088 = vrot.slane %v4086, 5
        %v4089 = vsel %vm384, %v4084, %v4088
        %v4091 = vshrl.u32 %v3609, 16
        %v4093 = vrot.slane %v4091, 4
        %v4094 = vshll.u32 %v3609, 16
        %v4096 = vrot.slane %v4094, 5
        %v4097 = vor.u32 %v4093, %v4096
        %v4098 = vrot.slane %v4097, 4
        %v4100 = vshll.u32 %v3610, 16
        %v4102 = vrot.slane %v4100, 5
        %v4103 = vsel %vm384, %v4098, %v4102
        %v4105 = vshrl.u32 %v3611, 16
        %v4107 = vrot.slane %v4105, 4
        %v4108 = vshll.u32 %v3611, 16
        %v4110 = vrot.slane %v4108, 5
        %v4111 = vor.u32 %v4107, %v4110
        %v4112 = vrot.slane %v4111, 4
        %v4114 = vshll.u32 %v3612, 16
        %v4116 = vrot.slane %v4114, 5
        %v4117 = vsel %vm384, %v4112, %v4116
        %v4119 = vshrl.u32 %v3617, 16
        %v4121 = vrot.slane %v4119, 4
        %v4122 = vshll.u32 %v3617, 16
        %v4124 = vrot.slane %v4122, 5
        %v4125 = vor.u32 %v4121, %v4124
        %v4126 = vrot.slane %v4125, 4
        %v4128 = vshll.u32 %v3618, 16
        %v4130 = vrot.slane %v4128, 5
        %v4131 = vsel %vm384, %v4126, %v4130
        %v4133 = vshrl.u32 %v3619, 16
        %v4135 = vrot.slane %v4133, 4
        %v4136 = vshll.u32 %v3619, 16
        %v4138 = vrot.slane %v4136, 5
        %v4139 = vor.u32 %v4135, %v4138
        %v4140 = vrot.slane %v4139, 4
        %v4142 = vshll.u32 %v3620, 16
        %v4144 = vrot.slane %v4142, 5
        %v4145 = vsel %vm384, %v4140, %v4144
        %v4147 = vshrl.u32 %v3621, 16
        %v4149 = vrot.slane %v4147, 4
        %v4150 = vshll.u32 %v3621, 16
        %v4152 = vrot.slane %v4150, 5
        %v4153 = vor.u32 %v4149, %v4152
        %v4154 = vrot.slane %v4153, 4
        %v4156 = vshll.u32 %v3622, 16
        %v4158 = vrot.slane %v4156, 5
        %v4159 = vsel %vm384, %v4154, %v4158
        %v4161 = vshrl.u32 %v3623, 16
        %v4163 = vrot.slane %v4161, 4
        %v4164 = vshll.u32 %v3623, 16
        %v4166 = vrot.slane %v4164, 5
        %v4167 = vor.u32 %v4163, %v4166
        %v4168 = vrot.slane %v4167, 4
        %v4170 = vshll.u32 %v3624, 16
        %v4172 = vrot.slane %v4170, 5
        %v4173 = vsel %vm384, %v4168, %v4172
        %v4175 = vshrl.u32 %v3625, 16
        %v4177 = vrot.slane %v4175, 4
        %v4178 = vshll.u32 %v3625, 16
        %v4180 = vrot.slane %v4178, 5
        %v4181 = vor.u32 %v4177, %v4180
        %v4182 = vrot.slane %v4181, 4
        %v4184 = vshll.u32 %v3626, 16
        %v4186 = vrot.slane %v4184, 5
        %v4187 = vsel %vm384, %v4182, %v4186
        %v4189 = vshrl.u32 %v3627, 16
        %v4191 = vrot.slane %v4189, 4
        %v4192 = vshll.u32 %v3627, 16
        %v4194 = vrot.slane %v4192, 5
        %v4195 = vor.u32 %v4191, %v4194
        %v4196 = vrot.slane %v4195, 4
        %v4198 = vshll.u32 %v3628, 16
        %v4200 = vrot.slane %v4198, 5
        %v4201 = vsel %vm384, %v4196, %v4200
        %v4203 = vshrl.u32 %v3629, 16
        %v4205 = vrot.slane %v4203, 4
        %v4206 = vshll.u32 %v3629, 16
        %v4208 = vrot.slane %v4206, 5
        %v4209 = vor.u32 %v4205, %v4208
        %v4210 = vrot.slane %v4209, 4
        %v4212 = vshll.u32 %v3630, 16
        %v4214 = vrot.slane %v4212, 5
        %v4215 = vsel %vm384, %v4210, %v4214
        %v4217 = vshrl.u32 %v3631, 16
        %v4219 = vrot.slane %v4217, 4
        %v4220 = vshll.u32 %v3631, 16
        %v4222 = vrot.slane %v4220, 5
        %v4223 = vor.u32 %v4219, %v4222
        %v4224 = vrot.slane %v4223, 4
        %v4226 = vshll.u32 %v3632, 16
        %v4228 = vrot.slane %v4226, 5
        %v4229 = vsel %vm384, %v4224, %v4228
        %v4230 = vunpack.c.l.b16 %v3795
        %v4231 = vunpack.c.l.b16 %v3809
        %v4232 = vunpack.c.l.b16 %v3823
        %v4233 = vunpack.c.l.b16 %v3837
        %v4234 = vunpack.c.l.b16 %v3851
        %v4235 = vunpack.c.l.b16 %v3865
        %v4236 = vunpack.c.l.b16 %v3879
        %v4237 = vunpack.c.l.b16 %v3893
        %v4238 = vunpack.c.l.b16 %v3907
        %v4239 = vunpack.c.l.b16 %v3921
        %v4240 = vunpack.c.l.b16 %v3935
        %v4241 = vunpack.c.l.b16 %v3949
        %v4242 = vunpack.c.l.b16 %v3963
        %v4243 = vunpack.c.l.b16 %v3977
        %v4244 = vunpack.c.l.b16 %v3991
        %v4245 = vunpack.c.l.b16 %v4005
        %v4246 = vunpack.c.l.b16 %v4019
        %v4247 = vunpack.c.l.b16 %v4033
        %v4248 = vunpack.c.l.b16 %v4047
        %v4249 = vunpack.c.l.b16 %v4061
        %v4250 = vunpack.c.l.b16 %v4075
        %v4251 = vunpack.c.l.b16 %v4089
        %v4252 = vunpack.c.l.b16 %v4103
        %v4253 = vunpack.c.l.b16 %v4117
        %v4254 = vunpack.c.l.b16 %v4131
        %v4255 = vunpack.c.l.b16 %v4145
        %v4256 = vunpack.c.l.b16 %v4159
        %v4257 = vunpack.c.l.b16 %v4173
        %v4258 = vunpack.c.l.b16 %v4187
        %v4259 = vunpack.c.l.b16 %v4201
        %v4260 = vunpack.c.l.b16 %v4215
        %v4261 = vunpack.c.l.b16 %v4229
        %v4262 = vpack.c.b16 %v4231, %v4230
        %v4263 = vpack.c.b16 %v4233, %v4232
        %v4264 = vpack.c.b16 %v4235, %v4234
        %v4265 = vpack.c.b16 %v4237, %v4236
        %v4266 = vpack.c.b16 %v4239, %v4238
        %v4267 = vpack.c.b16 %v4241, %v4240
        %v4268 = vpack.c.b16 %v4243, %v4242
        %v4269 = vpack.c.b16 %v4245, %v4244
        %v4270 = vpack.c.b16 %v4247, %v4246
        %v4271 = vpack.c.b16 %v4249, %v4248
        %v4272 = vpack.c.b16 %v4251, %v4250
        %v4273 = vpack.c.b16 %v4253, %v4252
        %v4274 = vpack.c.b16 %v4255, %v4254
        %v4275 = vpack.c.b16 %v4257, %v4256
        %v4276 = vpack.c.b16 %v4259, %v4258
        %v4277 = vpack.c.b16 %v4261, %v4260
        %4278 = vrot.lane.b32.xlu0 %v4262, 76
        %v4279 = vpop.permute.xlu0 %4278
        %4280 = vrot.lane.b32.xlu0 %v4263, 76
        %v4281 = vpop.permute.xlu0 %4280
        %4282 = vrot.lane.b32.xlu0 %v4264, 76
        %v4283 = vpop.permute.xlu0 %4282
        %4284 = vrot.lane.b32.xlu0 %v4265, 76
        %v4285 = vpop.permute.xlu0 %4284
        %4286 = vrot.lane.b32.xlu0 %v4266, 76
        %v4287 = vpop.permute.xlu0 %4286
        %4288 = vrot.lane.b32.xlu0 %v4267, 76
        %v4289 = vpop.permute.xlu0 %4288
        %4290 = vrot.lane.b32.xlu0 %v4268, 76
        %v4291 = vpop.permute.xlu0 %4290
        %4292 = vrot.lane.b32.xlu0 %v4269, 76
        %v4293 = vpop.permute.xlu0 %4292
        %4294 = vrot.lane.b32.xlu0 %v4270, 76
        %v4295 = vpop.permute.xlu0 %4294
        %4296 = vrot.lane.b32.xlu0 %v4271, 76
        %v4297 = vpop.permute.xlu0 %4296
        %4298 = vrot.lane.b32.xlu0 %v4272, 76
        %v4299 = vpop.permute.xlu0 %4298
        %4300 = vrot.lane.b32.xlu0 %v4273, 76
        %v4301 = vpop.permute.xlu0 %4300
        %4302 = vrot.lane.b32.xlu0 %v4274, 76
        %v4303 = vpop.permute.xlu0 %4302
        %4304 = vrot.lane.b32.xlu0 %v4275, 76
        %v4305 = vpop.permute.xlu0 %4304
        %4306 = vrot.lane.b32.xlu0 %v4276, 76
        %v4307 = vpop.permute.xlu0 %4306
        %4308 = vrot.lane.b32.xlu0 %v4277, 76
        %v4309 = vpop.permute.xlu0 %4308
        %vm4326 = vcmask 654944
        %4327 = vst.msk [vmem:[#allocation2] sm:$0xff] %vm4326, %v4279
        %4328 = vst.msk [vmem:[#allocation2 + $0x8] sm:$0xff] %vm4326, %v4281
        %4329 = vst.msk [vmem:[#allocation2 + $0x10] sm:$0xff] %vm4326, %v4283
        %4330 = vst.msk [vmem:[#allocation2 + $0x18] sm:$0xff] %vm4326, %v4285
        %4331 = vst.msk [vmem:[#allocation2 + $0x20] sm:$0xff] %vm4326, %v4287
        %4332 = vst.msk [vmem:[#allocation2 + $0x28] sm:$0xff] %vm4326, %v4289
        %4333 = vst.msk [vmem:[#allocation2 + $0x30] sm:$0xff] %vm4326, %v4291
        %4334 = vst.msk [vmem:[#allocation2 + $0x38] sm:$0xff] %vm4326, %v4293
        %4335 = vst.msk [vmem:[#allocation2 + $0x40] sm:$0xff] %vm4326, %v4295
        %4336 = vst.msk [vmem:[#allocation2 + $0x48] sm:$0xff] %vm4326, %v4297
        %4337 = vst.msk [vmem:[#allocation2 + $0x50] sm:$0xff] %vm4326, %v4299
        %4338 = vst.msk [vmem:[#allocation2 + $0x58] sm:$0xff] %vm4326, %v4301
        %4339 = vst.msk [vmem:[#allocation2 + $0x60] sm:$0xff] %vm4326, %v4303
        %4340 = vst.msk [vmem:[#allocation2 + $0x68] sm:$0xff] %vm4326, %v4305
        %4341 = vst.msk [vmem:[#allocation2 + $0x70] sm:$0xff] %vm4326, %v4307
        %4342 = vst.msk [vmem:[#allocation2 + $0x78] sm:$0xff] %vm4326, %v4309
        %v4375 = vrot.slane %v3557, 5
        %v4376 = vrot.slane %v4375, 4
        %v4377 = vrot.slane %v3558, 5
        %v4378 = vsel %vm980, %v4376, %v4377
        %v4379 = vrot.slane %v3559, 5
        %v4380 = vrot.slane %v4379, 4
        %v4381 = vrot.slane %v3560, 5
        %v4382 = vsel %vm980, %v4380, %v4381
        %v4383 = vrot.slane %v3561, 5
        %v4384 = vrot.slane %v4383, 4
        %v4385 = vrot.slane %v3562, 5
        %v4386 = vsel %vm980, %v4384, %v4385
        %v4387 = vrot.slane %v3563, 5
        %v4388 = vrot.slane %v4387, 4
        %v4389 = vrot.slane %v3564, 5
        %v4390 = vsel %vm980, %v4388, %v4389
        %v4391 = vrot.slane %v3565, 5
        %v4392 = vrot.slane %v4391, 4
        %v4393 = vrot.slane %v3566, 5
        %v4394 = vsel %vm980, %v4392, %v4393
        %v4395 = vrot.slane %v3567, 5
        %v4396 = vrot.slane %v4395, 4
        %v4397 = vrot.slane %v3568, 5
        %v4398 = vsel %vm980, %v4396, %v4397
        %v4399 = vrot.slane %v3569, 5
        %v4400 = vrot.slane %v4399, 4
        %v4401 = vrot.slane %v3570, 5
        %v4402 = vsel %vm980, %v4400, %v4401
        %v4403 = vrot.slane %v3571, 5
        %v4404 = vrot.slane %v4403, 4
        %v4405 = vrot.slane %v3572, 5
        %v4406 = vsel %vm980, %v4404, %v4405
        %v4407 = vrot.slane %v3577, 5
        %v4408 = vrot.slane %v4407, 4
        %v4409 = vrot.slane %v3578, 5
        %v4410 = vsel %vm980, %v4408, %v4409
        %v4411 = vrot.slane %v3579, 5
        %v4412 = vrot.slane %v4411, 4
        %v4413 = vrot.slane %v3580, 5
        %v4414 = vsel %vm980, %v4412, %v4413
        %v4415 = vrot.slane %v3581, 5
        %v4416 = vrot.slane %v4415, 4
        %v4417 = vrot.slane %v3582, 5
        %v4418 = vsel %vm980, %v4416, %v4417
        %v4419 = vrot.slane %v3583, 5
        %v4420 = vrot.slane %v4419, 4
        %v4421 = vrot.slane %v3584, 5
        %v4422 = vsel %vm980, %v4420, %v4421
        %v4423 = vrot.slane %v3585, 5
        %v4424 = vrot.slane %v4423, 4
        %v4425 = vrot.slane %v3586, 5
        %v4426 = vsel %vm980, %v4424, %v4425
        %v4427 = vrot.slane %v3587, 5
        %v4428 = vrot.slane %v4427, 4
        %v4429 = vrot.slane %v3588, 5
        %v4430 = vsel %vm980, %v4428, %v4429
        %v4431 = vrot.slane %v3589, 5
        %v4432 = vrot.slane %v4431, 4
        %v4433 = vrot.slane %v3590, 5
        %v4434 = vsel %vm980, %v4432, %v4433
        %v4435 = vrot.slane %v3591, 5
        %v4436 = vrot.slane %v4435, 4
        %v4437 = vrot.slane %v3592, 5
        %v4438 = vsel %vm980, %v4436, %v4437
        %v4439 = vrot.slane %v3597, 5
        %v4440 = vrot.slane %v4439, 4
        %v4441 = vrot.slane %v3598, 5
        %v4442 = vsel %vm980, %v4440, %v4441
        %v4443 = vrot.slane %v3599, 5
        %v4444 = vrot.slane %v4443, 4
        %v4445 = vrot.slane %v3600, 5
        %v4446 = vsel %vm980, %v4444, %v4445
        %v4447 = vrot.slane %v3601, 5
        %v4448 = vrot.slane %v4447, 4
        %v4449 = vrot.slane %v3602, 5
        %v4450 = vsel %vm980, %v4448, %v4449
        %v4451 = vrot.slane %v3603, 5
        %v4452 = vrot.slane %v4451, 4
        %v4453 = vrot.slane %v3604, 5
        %v4454 = vsel %vm980, %v4452, %v4453
        %v4455 = vrot.slane %v3605, 5
        %v4456 = vrot.slane %v4455, 4
        %v4457 = vrot.slane %v3606, 5
        %v4458 = vsel %vm980, %v4456, %v4457
        %v4459 = vrot.slane %v3607, 5
        %v4460 = vrot.slane %v4459, 4
        %v4461 = vrot.slane %v3608, 5
        %v4462 = vsel %vm980, %v4460, %v4461
        %v4463 = vrot.slane %v3609, 5
        %v4464 = vrot.slane %v4463, 4
        %v4465 = vrot.slane %v3610, 5
        %v4466 = vsel %vm980, %v4464, %v4465
        %v4467 = vrot.slane %v3611, 5
        %v4468 = vrot.slane %v4467, 4
        %v4469 = vrot.slane %v3612, 5
        %v4470 = vsel %vm980, %v4468, %v4469
        %v4471 = vrot.slane %v3617, 5
        %v4472 = vrot.slane %v4471, 4
        %v4473 = vrot.slane %v3618, 5
        %v4474 = vsel %vm980, %v4472, %v4473
        %v4475 = vrot.slane %v3619, 5
        %v4476 = vrot.slane %v4475, 4
        %v4477 = vrot.slane %v3620, 5
        %v4478 = vsel %vm980, %v4476, %v4477
        %v4479 = vrot.slane %v3621, 5
        %v4480 = vrot.slane %v4479, 4
        %v4481 = vrot.slane %v3622, 5
        %v4482 = vsel %vm980, %v4480, %v4481
        %v4483 = vrot.slane %v3623, 5
        %v4484 = vrot.slane %v4483, 4
        %v4485 = vrot.slane %v3624, 5
        %v4486 = vsel %vm980, %v4484, %v4485
        %v4487 = vrot.slane %v3625, 5
        %v4488 = vrot.slane %v4487, 4
        %v4489 = vrot.slane %v3626, 5
        %v4490 = vsel %vm980, %v4488, %v4489
        %v4491 = vrot.slane %v3627, 5
        %v4492 = vrot.slane %v4491, 4
        %v4493 = vrot.slane %v3628, 5
        %v4494 = vsel %vm980, %v4492, %v4493
        %v4495 = vrot.slane %v3629, 5
        %v4496 = vrot.slane %v4495, 4
        %v4497 = vrot.slane %v3630, 5
        %v4498 = vsel %vm980, %v4496, %v4497
        %v4499 = vrot.slane %v3631, 5
        %v4500 = vrot.slane %v4499, 4
        %v4501 = vrot.slane %v3632, 5
        %v4502 = vsel %vm980, %v4500, %v4501
        %v4503 = vunpack.c.l.b16 %v4378
        %v4504 = vunpack.c.l.b16 %v4382
        %v4505 = vunpack.c.l.b16 %v4386
        %v4506 = vunpack.c.l.b16 %v4390
        %v4507 = vunpack.c.l.b16 %v4394
        %v4508 = vunpack.c.l.b16 %v4398
        %v4509 = vunpack.c.l.b16 %v4402
        %v4510 = vunpack.c.l.b16 %v4406
        %v4511 = vunpack.c.l.b16 %v4410
        %v4512 = vunpack.c.l.b16 %v4414
        %v4513 = vunpack.c.l.b16 %v4418
        %v4514 = vunpack.c.l.b16 %v4422
        %v4515 = vunpack.c.l.b16 %v4426
        %v4516 = vunpack.c.l.b16 %v4430
        %v4517 = vunpack.c.l.b16 %v4434
        %v4518 = vunpack.c.l.b16 %v4438
        %v4519 = vunpack.c.l.b16 %v4442
        %v4520 = vunpack.c.l.b16 %v4446
        %v4521 = vunpack.c.l.b16 %v4450
        %v4522 = vunpack.c.l.b16 %v4454
        %v4523 = vunpack.c.l.b16 %v4458
        %v4524 = vunpack.c.l.b16 %v4462
        %v4525 = vunpack.c.l.b16 %v4466
        %v4526 = vunpack.c.l.b16 %v4470
        %v4527 = vunpack.c.l.b16 %v4474
        %v4528 = vunpack.c.l.b16 %v4478
        %v4529 = vunpack.c.l.b16 %v4482
        %v4530 = vunpack.c.l.b16 %v4486
        %v4531 = vunpack.c.l.b16 %v4490
        %v4532 = vunpack.c.l.b16 %v4494
        %v4533 = vunpack.c.l.b16 %v4498
        %v4534 = vunpack.c.l.b16 %v4502
        %v4535 = vpack.c.b16 %v4504, %v4503
        %v4536 = vpack.c.b16 %v4506, %v4505
        %v4537 = vpack.c.b16 %v4508, %v4507
        %v4538 = vpack.c.b16 %v4510, %v4509
        %v4539 = vpack.c.b16 %v4512, %v4511
        %v4540 = vpack.c.b16 %v4514, %v4513
        %v4541 = vpack.c.b16 %v4516, %v4515
        %v4542 = vpack.c.b16 %v4518, %v4517
        %v4543 = vpack.c.b16 %v4520, %v4519
        %v4544 = vpack.c.b16 %v4522, %v4521
        %v4545 = vpack.c.b16 %v4524, %v4523
        %v4546 = vpack.c.b16 %v4526, %v4525
        %v4547 = vpack.c.b16 %v4528, %v4527
        %v4548 = vpack.c.b16 %v4530, %v4529
        %v4549 = vpack.c.b16 %v4532, %v4531
        %v4550 = vpack.c.b16 %v4534, %v4533
        %4551 = vrot.lane.b32.xlu0 %v4535, 80
        %v4552 = vpop.permute.xlu0 %4551
        %4553 = vrot.lane.b32.xlu0 %v4536, 80
        %v4554 = vpop.permute.xlu0 %4553
        %4555 = vrot.lane.b32.xlu0 %v4537, 80
        %v4556 = vpop.permute.xlu0 %4555
        %4557 = vrot.lane.b32.xlu0 %v4538, 80
        %v4558 = vpop.permute.xlu0 %4557
        %4559 = vrot.lane.b32.xlu0 %v4539, 80
        %v4560 = vpop.permute.xlu0 %4559
        %4561 = vrot.lane.b32.xlu0 %v4540, 80
        %v4562 = vpop.permute.xlu0 %4561
        %4563 = vrot.lane.b32.xlu0 %v4541, 80
        %v4564 = vpop.permute.xlu0 %4563
        %4565 = vrot.lane.b32.xlu0 %v4542, 80
        %v4566 = vpop.permute.xlu0 %4565
        %4567 = vrot.lane.b32.xlu0 %v4543, 80
        %v4568 = vpop.permute.xlu0 %4567
        %4569 = vrot.lane.b32.xlu0 %v4544, 80
        %v4570 = vpop.permute.xlu0 %4569
        %4571 = vrot.lane.b32.xlu0 %v4545, 80
        %v4572 = vpop.permute.xlu0 %4571
        %4573 = vrot.lane.b32.xlu0 %v4546, 80
        %v4574 = vpop.permute.xlu0 %4573
        %4575 = vrot.lane.b32.xlu0 %v4547, 80
        %v4576 = vpop.permute.xlu0 %4575
        %4577 = vrot.lane.b32.xlu0 %v4548, 80
        %v4578 = vpop.permute.xlu0 %4577
        %4579 = vrot.lane.b32.xlu0 %v4549, 80
        %v4580 = vpop.permute.xlu0 %4579
        %4581 = vrot.lane.b32.xlu0 %v4550, 80
        %v4582 = vpop.permute.xlu0 %4581
        %vm4599 = vcmask 687744
        %4600 = vst.msk [vmem:[#allocation2] sm:$0xff] %vm4599, %v4552
        %4601 = vst.msk [vmem:[#allocation2 + $0x8] sm:$0xff] %vm4599, %v4554
        %4602 = vst.msk [vmem:[#allocation2 + $0x10] sm:$0xff] %vm4599, %v4556
        %4603 = vst.msk [vmem:[#allocation2 + $0x18] sm:$0xff] %vm4599, %v4558
        %4604 = vst.msk [vmem:[#allocation2 + $0x20] sm:$0xff] %vm4599, %v4560
        %4605 = vst.msk [vmem:[#allocation2 + $0x28] sm:$0xff] %vm4599, %v4562
        %4606 = vst.msk [vmem:[#allocation2 + $0x30] sm:$0xff] %vm4599, %v4564
        %4607 = vst.msk [vmem:[#allocation2 + $0x38] sm:$0xff] %vm4599, %v4566
        %4608 = vst.msk [vmem:[#allocation2 + $0x40] sm:$0xff] %vm4599, %v4568
        %4609 = vst.msk [vmem:[#allocation2 + $0x48] sm:$0xff] %vm4599, %v4570
        %4610 = vst.msk [vmem:[#allocation2 + $0x50] sm:$0xff] %vm4599, %v4572
        %4611 = vst.msk [vmem:[#allocation2 + $0x58] sm:$0xff] %vm4599, %v4574
        %4612 = vst.msk [vmem:[#allocation2 + $0x60] sm:$0xff] %vm4599, %v4576
        %4613 = vst.msk [vmem:[#allocation2 + $0x68] sm:$0xff] %vm4599, %v4578
        %4614 = vst.msk [vmem:[#allocation2 + $0x70] sm:$0xff] %vm4599, %v4580
        %4615 = vst.msk [vmem:[#allocation2 + $0x78] sm:$0xff] %vm4599, %v4582
        %v4620 = vunpack.c.l.b16 %v3573
        %v4621 = vunpack.c.l.b16 %v3593
        %v4622 = vunpack.c.l.b16 %v3613
        %v4623 = vunpack.c.l.b16 %v3633
        %v4624 = vpack.c.b16 %v3671, %v3670
        %v4625 = vpack.c.b16 %v3673, %v3672
        %v4626 = vpack.c.b16 %v3675, %v3674
        %v4627 = vpack.c.b16 %v4620, %v3676
        %v4628 = vpack.c.b16 %v3679, %v3678
        %v4629 = vpack.c.b16 %v3681, %v3680
        %v4630 = vpack.c.b16 %v3683, %v3682
        %v4631 = vpack.c.b16 %v4621, %v3684
        %v4632 = vpack.c.b16 %v3687, %v3686
        %v4633 = vpack.c.b16 %v3689, %v3688
        %v4634 = vpack.c.b16 %v3691, %v3690
        %v4635 = vpack.c.b16 %v4622, %v3692
        %v4636 = vpack.c.b16 %v3695, %v3694
        %v4637 = vpack.c.b16 %v3697, %v3696
        %v4638 = vpack.c.b16 %v3699, %v3698
        %v4639 = vpack.c.b16 %v4623, %v3700
        %4640 = vrot.lane.b32.xlu0 %v4624, 84
        %v4641 = vpop.permute.xlu0 %4640
        %4642 = vrot.lane.b32.xlu0 %v4625, 84
        %v4643 = vpop.permute.xlu0 %4642
        %4644 = vrot.lane.b32.xlu0 %v4626, 84
        %v4645 = vpop.permute.xlu0 %4644
        %4646 = vrot.lane.b32.xlu0 %v4627, 84
        %v4647 = vpop.permute.xlu0 %4646
        %4648 = vrot.lane.b32.xlu0 %v4628, 84
        %v4649 = vpop.permute.xlu0 %4648
        %4650 = vrot.lane.b32.xlu0 %v4629, 84
        %v4651 = vpop.permute.xlu0 %4650
        %4652 = vrot.lane.b32.xlu0 %v4630, 84
        %v4653 = vpop.permute.xlu0 %4652
        %4654 = vrot.lane.b32.xlu0 %v4631, 84
        %v4655 = vpop.permute.xlu0 %4654
        %4656 = vrot.lane.b32.xlu0 %v4632, 84
        %v4657 = vpop.permute.xlu0 %4656
        %4658 = vrot.lane.b32.xlu0 %v4633, 84
        %v4659 = vpop.permute.xlu0 %4658
        %4660 = vrot.lane.b32.xlu0 %v4634, 84
        %v4661 = vpop.permute.xlu0 %4660
        %4662 = vrot.lane.b32.xlu0 %v4635, 84
        %v4663 = vpop.permute.xlu0 %4662
        %4664 = vrot.lane.b32.xlu0 %v4636, 84
        %v4665 = vpop.permute.xlu0 %4664
        %4666 = vrot.lane.b32.xlu0 %v4637, 84
        %v4667 = vpop.permute.xlu0 %4666
        %4668 = vrot.lane.b32.xlu0 %v4638, 84
        %v4669 = vpop.permute.xlu0 %4668
        %4670 = vrot.lane.b32.xlu0 %v4639, 84
        %v4671 = vpop.permute.xlu0 %4670
        %vm4688 = vcmask 720544
        %4689 = vst.msk [vmem:[#allocation2] sm:$0xff] %vm4688, %v4641
        %4690 = vst.msk [vmem:[#allocation2 + $0x8] sm:$0xff] %vm4688, %v4643
        %4691 = vst.msk [vmem:[#allocation2 + $0x10] sm:$0xff] %vm4688, %v4645
        %4692 = vst.msk [vmem:[#allocation2 + $0x18] sm:$0xff] %vm4688, %v4647
        %4693 = vst.msk [vmem:[#allocation2 + $0x20] sm:$0xff] %vm4688, %v4649
        %4694 = vst.msk [vmem:[#allocation2 + $0x28] sm:$0xff] %vm4688, %v4651
        %4695 = vst.msk [vmem:[#allocation2 + $0x30] sm:$0xff] %vm4688, %v4653
        %4696 = vst.msk [vmem:[#allocation2 + $0x38] sm:$0xff] %vm4688, %v4655
        %4697 = vst.msk [vmem:[#allocation2 + $0x40] sm:$0xff] %vm4688, %v4657
        %4698 = vst.msk [vmem:[#allocation2 + $0x48] sm:$0xff] %vm4688, %v4659
        %4699 = vst.msk [vmem:[#allocation2 + $0x50] sm:$0xff] %vm4688, %v4661
        %4700 = vst.msk [vmem:[#allocation2 + $0x58] sm:$0xff] %vm4688, %v4663
        %4701 = vst.msk [vmem:[#allocation2 + $0x60] sm:$0xff] %vm4688, %v4665
        %4702 = vst.msk [vmem:[#allocation2 + $0x68] sm:$0xff] %vm4688, %v4667
        %4703 = vst.msk [vmem:[#allocation2 + $0x70] sm:$0xff] %vm4688, %v4669
        %4704 = vst.msk [vmem:[#allocation2 + $0x78] sm:$0xff] %vm4688, %v4671
        %v4706 = vshrl.u32 %v3573, 16
        %v4708 = vrot.slane %v4706, 4
        %v4709 = vshll.u32 %v3573, 16
        %v4711 = vrot.slane %v4709, 5
        %v4712 = vor.u32 %v4708, %v4711
        %v4713 = vrot.slane %v4712, 4
        %v4715 = vshll.u32 %v3574, 16
        %v4717 = vrot.slane %v4715, 5
        %v4718 = vsel %vm384, %v4713, %v4717
        %v4720 = vshrl.u32 %v3593, 16
        %v4722 = vrot.slane %v4720, 4
        %v4723 = vshll.u32 %v3593, 16
        %v4725 = vrot.slane %v4723, 5
        %v4726 = vor.u32 %v4722, %v4725
        %v4727 = vrot.slane %v4726, 4
        %v4729 = vshll.u32 %v3594, 16
        %v4731 = vrot.slane %v4729, 5
        %v4732 = vsel %vm384, %v4727, %v4731
        %v4734 = vshrl.u32 %v3613, 16
        %v4736 = vrot.slane %v4734, 4
        %v4737 = vshll.u32 %v3613, 16
        %v4739 = vrot.slane %v4737, 5
        %v4740 = vor.u32 %v4736, %v4739
        %v4741 = vrot.slane %v4740, 4
        %v4743 = vshll.u32 %v3614, 16
        %v4745 = vrot.slane %v4743, 5
        %v4746 = vsel %vm384, %v4741, %v4745
        %v4748 = vshrl.u32 %v3633, 16
        %v4750 = vrot.slane %v4748, 4
        %v4751 = vshll.u32 %v3633, 16
        %v4753 = vrot.slane %v4751, 5
        %v4754 = vor.u32 %v4750, %v4753
        %v4755 = vrot.slane %v4754, 4
        %v4757 = vshll.u32 %v3634, 16
        %v4759 = vrot.slane %v4757, 5
        %v4760 = vsel %vm384, %v4755, %v4759
        %v4761 = vunpack.c.l.b16 %v4718
        %v4762 = vunpack.c.l.b16 %v4732
        %v4763 = vunpack.c.l.b16 %v4746
        %v4764 = vunpack.c.l.b16 %v4760
        %v4765 = vpack.c.b16 %v4232, %v4231
        %v4766 = vpack.c.b16 %v4234, %v4233
        %v4767 = vpack.c.b16 %v4236, %v4235
        %v4768 = vpack.c.b16 %v4761, %v4237
        %v4769 = vpack.c.b16 %v4240, %v4239
        %v4770 = vpack.c.b16 %v4242, %v4241
        %v4771 = vpack.c.b16 %v4244, %v4243
        %v4772 = vpack.c.b16 %v4762, %v4245
        %v4773 = vpack.c.b16 %v4248, %v4247
        %v4774 = vpack.c.b16 %v4250, %v4249
        %v4775 = vpack.c.b16 %v4252, %v4251
        %v4776 = vpack.c.b16 %v4763, %v4253
        %v4777 = vpack.c.b16 %v4256, %v4255
        %v4778 = vpack.c.b16 %v4258, %v4257
        %v4779 = vpack.c.b16 %v4260, %v4259
        %v4780 = vpack.c.b16 %v4764, %v4261
        %4781 = vrot.lane.b32.xlu0 %v4765, 88
        %v4782 = vpop.permute.xlu0 %4781
        %4783 = vrot.lane.b32.xlu0 %v4766, 88
        %v4784 = vpop.permute.xlu0 %4783
        %4785 = vrot.lane.b32.xlu0 %v4767, 88
        %v4786 = vpop.permute.xlu0 %4785
        %4787 = vrot.lane.b32.xlu0 %v4768, 88
        %v4788 = vpop.permute.xlu0 %4787
        %4789 = vrot.lane.b32.xlu0 %v4769, 88
        %v4790 = vpop.permute.xlu0 %4789
        %4791 = vrot.lane.b32.xlu0 %v4770, 88
        %v4792 = vpop.permute.xlu0 %4791
        %4793 = vrot.lane.b32.xlu0 %v4771, 88
        %v4794 = vpop.permute.xlu0 %4793
        %4795 = vrot.lane.b32.xlu0 %v4772, 88
        %v4796 = vpop.permute.xlu0 %4795
        %4797 = vrot.lane.b32.xlu0 %v4773, 88
        %v4798 = vpop.permute.xlu0 %4797
        %4799 = vrot.lane.b32.xlu0 %v4774, 88
        %v4800 = vpop.permute.xlu0 %4799
        %4801 = vrot.lane.b32.xlu0 %v4775, 88
        %v4802 = vpop.permute.xlu0 %4801
        %4803 = vrot.lane.b32.xlu0 %v4776, 88
        %v4804 = vpop.permute.xlu0 %4803
        %4805 = vrot.lane.b32.xlu0 %v4777, 88
        %v4806 = vpop.permute.xlu0 %4805
        %4807 = vrot.lane.b32.xlu0 %v4778, 88
        %v4808 = vpop.permute.xlu0 %4807
        %4809 = vrot.lane.b32.xlu0 %v4779, 88
        %v4810 = vpop.permute.xlu0 %4809
        %4811 = vrot.lane.b32.xlu0 %v4780, 88
        %v4812 = vpop.permute.xlu0 %4811
        %vm4829 = vcmask 753344
        %4830 = vst.msk [vmem:[#allocation2] sm:$0xff] %vm4829, %v4782
        %4831 = vst.msk [vmem:[#allocation2 + $0x8] sm:$0xff] %vm4829, %v4784
        %4832 = vst.msk [vmem:[#allocation2 + $0x10] sm:$0xff] %vm4829, %v4786
        %4833 = vst.msk [vmem:[#allocation2 + $0x18] sm:$0xff] %vm4829, %v4788
        %4834 = vst.msk [vmem:[#allocation2 + $0x20] sm:$0xff] %vm4829, %v4790
        %4835 = vst.msk [vmem:[#allocation2 + $0x28] sm:$0xff] %vm4829, %v4792
        %4836 = vst.msk [vmem:[#allocation2 + $0x30] sm:$0xff] %vm4829, %v4794
        %4837 = vst.msk [vmem:[#allocation2 + $0x38] sm:$0xff] %vm4829, %v4796
        %4838 = vst.msk [vmem:[#allocation2 + $0x40] sm:$0xff] %vm4829, %v4798
        %4839 = vst.msk [vmem:[#allocation2 + $0x48] sm:$0xff] %vm4829, %v4800
        %4840 = vst.msk [vmem:[#allocation2 + $0x50] sm:$0xff] %vm4829, %v4802
        %4841 = vst.msk [vmem:[#allocation2 + $0x58] sm:$0xff] %vm4829, %v4804
        %4842 = vst.msk [vmem:[#allocation2 + $0x60] sm:$0xff] %vm4829, %v4806
        %4843 = vst.msk [vmem:[#allocation2 + $0x68] sm:$0xff] %vm4829, %v4808
        %4844 = vst.msk [vmem:[#allocation2 + $0x70] sm:$0xff] %vm4829, %v4810
        %4845 = vst.msk [vmem:[#allocation2 + $0x78] sm:$0xff] %vm4829, %v4812
        %v4850 = vrot.slane %v3573, 5
        %v4851 = vrot.slane %v4850, 4
        %v4852 = vrot.slane %v3574, 5
        %v4853 = vsel %vm980, %v4851, %v4852
        %v4854 = vrot.slane %v3593, 5
        %v4855 = vrot.slane %v4854, 4
        %v4856 = vrot.slane %v3594, 5
        %v4857 = vsel %vm980, %v4855, %v4856
        %v4858 = vrot.slane %v3613, 5
        %v4859 = vrot.slane %v4858, 4
        %v4860 = vrot.slane %v3614, 5
        %v4861 = vsel %vm980, %v4859, %v4860
        %v4862 = vrot.slane %v3633, 5
        %v4863 = vrot.slane %v4862, 4
        %v4864 = vrot.slane %v3634, 5
        %v4865 = vsel %vm980, %v4863, %v4864
        %v4866 = vunpack.c.l.b16 %v4853
        %v4867 = vunpack.c.l.b16 %v4857
        %v4868 = vunpack.c.l.b16 %v4861
        %v4869 = vunpack.c.l.b16 %v4865
        %v4870 = vpack.c.b16 %v4505, %v4504
        %v4871 = vpack.c.b16 %v4507, %v4506
        %v4872 = vpack.c.b16 %v4509, %v4508
        %v4873 = vpack.c.b16 %v4866, %v4510
        %v4874 = vpack.c.b16 %v4513, %v4512
        %v4875 = vpack.c.b16 %v4515, %v4514
        %v4876 = vpack.c.b16 %v4517, %v4516
        %v4877 = vpack.c.b16 %v4867, %v4518
        %v4878 = vpack.c.b16 %v4521, %v4520
        %v4879 = vpack.c.b16 %v4523, %v4522
        %v4880 = vpack.c.b16 %v4525, %v4524
        %v4881 = vpack.c.b16 %v4868, %v4526
        %v4882 = vpack.c.b16 %v4529, %v4528
        %v4883 = vpack.c.b16 %v4531, %v4530
        %v4884 = vpack.c.b16 %v4533, %v4532
        %v4885 = vpack.c.b16 %v4869, %v4534
        %4886 = vrot.lane.b32.xlu0 %v4870, 92
        %v4887 = vpop.permute.xlu0 %4886
        %4888 = vrot.lane.b32.xlu0 %v4871, 92
        %v4889 = vpop.permute.xlu0 %4888
        %4890 = vrot.lane.b32.xlu0 %v4872, 92
        %v4891 = vpop.permute.xlu0 %4890
        %4892 = vrot.lane.b32.xlu0 %v4873, 92
        %v4893 = vpop.permute.xlu0 %4892
        %4894 = vrot.lane.b32.xlu0 %v4874, 92
        %v4895 = vpop.permute.xlu0 %4894
        %4896 = vrot.lane.b32.xlu0 %v4875, 92
        %v4897 = vpop.permute.xlu0 %4896
        %4898 = vrot.lane.b32.xlu0 %v4876, 92
        %v4899 = vpop.permute.xlu0 %4898
        %4900 = vrot.lane.b32.xlu0 %v4877, 92
        %v4901 = vpop.permute.xlu0 %4900
        %4902 = vrot.lane.b32.xlu0 %v4878, 92
        %v4903 = vpop.permute.xlu0 %4902
        %4904 = vrot.lane.b32.xlu0 %v4879, 92
        %v4905 = vpop.permute.xlu0 %4904
        %4906 = vrot.lane.b32.xlu0 %v4880, 92
        %v4907 = vpop.permute.xlu0 %4906
        %4908 = vrot.lane.b32.xlu0 %v4881, 92
        %v4909 = vpop.permute.xlu0 %4908
        %4910 = vrot.lane.b32.xlu0 %v4882, 92
        %v4911 = vpop.permute.xlu0 %4910
        %4912 = vrot.lane.b32.xlu0 %v4883, 92
        %v4913 = vpop.permute.xlu0 %4912
        %4914 = vrot.lane.b32.xlu0 %v4884, 92
        %v4915 = vpop.permute.xlu0 %4914
        %4916 = vrot.lane.b32.xlu0 %v4885, 92
        %v4917 = vpop.permute.xlu0 %4916
        %vm4934 = vcmask 786144
        %4935 = vst.msk [vmem:[#allocation2] sm:$0xff] %vm4934, %v4887
        %4936 = vst.msk [vmem:[#allocation2 + $0x8] sm:$0xff] %vm4934, %v4889
        %4937 = vst.msk [vmem:[#allocation2 + $0x10] sm:$0xff] %vm4934, %v4891
        %4938 = vst.msk [vmem:[#allocation2 + $0x18] sm:$0xff] %vm4934, %v4893
        %4939 = vst.msk [vmem:[#allocation2 + $0x20] sm:$0xff] %vm4934, %v4895
        %4940 = vst.msk [vmem:[#allocation2 + $0x28] sm:$0xff] %vm4934, %v4897
        %4941 = vst.msk [vmem:[#allocation2 + $0x30] sm:$0xff] %vm4934, %v4899
        %4942 = vst.msk [vmem:[#allocation2 + $0x38] sm:$0xff] %vm4934, %v4901
        %4943 = vst.msk [vmem:[#allocation2 + $0x40] sm:$0xff] %vm4934, %v4903
        %4944 = vst.msk [vmem:[#allocation2 + $0x48] sm:$0xff] %vm4934, %v4905
        %4945 = vst.msk [vmem:[#allocation2 + $0x50] sm:$0xff] %vm4934, %v4907
        %4946 = vst.msk [vmem:[#allocation2 + $0x58] sm:$0xff] %vm4934, %v4909
        %4947 = vst.msk [vmem:[#allocation2 + $0x60] sm:$0xff] %vm4934, %v4911
        %4948 = vst.msk [vmem:[#allocation2 + $0x68] sm:$0xff] %vm4934, %v4913
        %4949 = vst.msk [vmem:[#allocation2 + $0x70] sm:$0xff] %vm4934, %v4915
        %4950 = vst.msk [vmem:[#allocation2 + $0x78] sm:$0xff] %vm4934, %v4917
        %v4955 = vunpack.c.l.b16 %v3575
        %v4956 = vunpack.c.l.b16 %v3595
        %v4957 = vunpack.c.l.b16 %v3615
        %v4958 = vunpack.c.l.b16 %v3635
        %v4959 = vpack.c.b16 %v4955, %v4620
        %v4960 = vpack.c.b16 %v4956, %v4621
        %v4961 = vpack.c.b16 %v4957, %v4622
        %v4962 = vpack.c.b16 %v4958, %v4623
        %4963 = vrot.lane.b32.xlu0 %v3702, 96
        %v4964 = vpop.permute.xlu0 %4963
        %4965 = vrot.lane.b32.xlu0 %v3703, 96
        %v4966 = vpop.permute.xlu0 %4965
        %4967 = vrot.lane.b32.xlu0 %v3704, 96
        %v4968 = vpop.permute.xlu0 %4967
        %4969 = vrot.lane.b32.xlu0 %v4959, 96
        %v4970 = vpop.permute.xlu0 %4969
        %4971 = vrot.lane.b32.xlu0 %v3706, 96
        %v4972 = vpop.permute.xlu0 %4971
        %4973 = vrot.lane.b32.xlu0 %v3707, 96
        %v4974 = vpop.permute.xlu0 %4973
        %4975 = vrot.lane.b32.xlu0 %v3708, 96
        %v4976 = vpop.permute.xlu0 %4975
        %4977 = vrot.lane.b32.xlu0 %v4960, 96
        %v4978 = vpop.permute.xlu0 %4977
        %4979 = vrot.lane.b32.xlu0 %v3710, 96
        %v4980 = vpop.permute.xlu0 %4979
        %4981 = vrot.lane.b32.xlu0 %v3711, 96
        %v4982 = vpop.permute.xlu0 %4981
        %4983 = vrot.lane.b32.xlu0 %v3712, 96
        %v4984 = vpop.permute.xlu0 %4983
        %4985 = vrot.lane.b32.xlu0 %v4961, 96
        %v4986 = vpop.permute.xlu0 %4985
        %4987 = vrot.lane.b32.xlu0 %v3714, 96
        %v4988 = vpop.permute.xlu0 %4987
        %4989 = vrot.lane.b32.xlu0 %v3715, 96
        %v4990 = vpop.permute.xlu0 %4989
        %4991 = vrot.lane.b32.xlu0 %v3716, 96
        %v4992 = vpop.permute.xlu0 %4991
        %4993 = vrot.lane.b32.xlu0 %v4962, 96
        %v4994 = vpop.permute.xlu0 %4993
        %vm5011 = vcmask 818944
        %5012 = vst.msk [vmem:[#allocation2] sm:$0xff] %vm5011, %v4964
        %5013 = vst.msk [vmem:[#allocation2 + $0x8] sm:$0xff] %vm5011, %v4966
        %5014 = vst.msk [vmem:[#allocation2 + $0x10] sm:$0xff] %vm5011, %v4968
        %5015 = vst.msk [vmem:[#allocation2 + $0x18] sm:$0xff] %vm5011, %v4970
        %5016 = vst.msk [vmem:[#allocation2 + $0x20] sm:$0xff] %vm5011, %v4972
        %5017 = vst.msk [vmem:[#allocation2 + $0x28] sm:$0xff] %vm5011, %v4974
        %5018 = vst.msk [vmem:[#allocation2 + $0x30] sm:$0xff] %vm5011, %v4976
        %5019 = vst.msk [vmem:[#allocation2 + $0x38] sm:$0xff] %vm5011, %v4978
        %5020 = vst.msk [vmem:[#allocation2 + $0x40] sm:$0xff] %vm5011, %v4980
        %5021 = vst.msk [vmem:[#allocation2 + $0x48] sm:$0xff] %vm5011, %v4982
        %5022 = vst.msk [vmem:[#allocation2 + $0x50] sm:$0xff] %vm5011, %v4984
        %5023 = vst.msk [vmem:[#allocation2 + $0x58] sm:$0xff] %vm5011, %v4986
        %5024 = vst.msk [vmem:[#allocation2 + $0x60] sm:$0xff] %vm5011, %v4988
        %5025 = vst.msk [vmem:[#allocation2 + $0x68] sm:$0xff] %vm5011, %v4990
        %5026 = vst.msk [vmem:[#allocation2 + $0x70] sm:$0xff] %vm5011, %v4992
        %5027 = vst.msk [vmem:[#allocation2 + $0x78] sm:$0xff] %vm5011, %v4994
        %v5029 = vshrl.u32 %v3575, 16
        %v5031 = vrot.slane %v5029, 4
        %v5032 = vshll.u32 %v3575, 16
        %v5034 = vrot.slane %v5032, 5
        %v5035 = vor.u32 %v5031, %v5034
        %v5036 = vrot.slane %v5035, 4
        %v5038 = vshll.u32 %v3576, 16
        %v5040 = vrot.slane %v5038, 5
        %v5041 = vsel %vm384, %v5036, %v5040
        %v5043 = vshrl.u32 %v3595, 16
        %v5045 = vrot.slane %v5043, 4
        %v5046 = vshll.u32 %v3595, 16
        %v5048 = vrot.slane %v5046, 5
        %v5049 = vor.u32 %v5045, %v5048
        %v5050 = vrot.slane %v5049, 4
        %v5052 = vshll.u32 %v3596, 16
        %v5054 = vrot.slane %v5052, 5
        %v5055 = vsel %vm384, %v5050, %v5054
        %v5057 = vshrl.u32 %v3615, 16
        %v5059 = vrot.slane %v5057, 4
        %v5060 = vshll.u32 %v3615, 16
        %v5062 = vrot.slane %v5060, 5
        %v5063 = vor.u32 %v5059, %v5062
        %v5064 = vrot.slane %v5063, 4
        %v5066 = vshll.u32 %v3616, 16
        %v5068 = vrot.slane %v5066, 5
        %v5069 = vsel %vm384, %v5064, %v5068
        %v5071 = vshrl.u32 %v3635, 16
        %v5073 = vrot.slane %v5071, 4
        %v5074 = vshll.u32 %v3635, 16
        %v5076 = vrot.slane %v5074, 5
        %v5077 = vor.u32 %v5073, %v5076
        %v5078 = vrot.slane %v5077, 4
        %v5080 = vshll.u32 %v3636, 16
        %v5082 = vrot.slane %v5080, 5
        %v5083 = vsel %vm384, %v5078, %v5082
        %v5084 = vunpack.c.l.b16 %v5041
        %v5085 = vunpack.c.l.b16 %v5055
        %v5086 = vunpack.c.l.b16 %v5069
        %v5087 = vunpack.c.l.b16 %v5083
        %v5088 = vpack.c.b16 %v5084, %v4761
        %v5089 = vpack.c.b16 %v5085, %v4762
        %v5090 = vpack.c.b16 %v5086, %v4763
        %v5091 = vpack.c.b16 %v5087, %v4764
        %5092 = vrot.lane.b32.xlu0 %v4263, 100
        %v5093 = vpop.permute.xlu0 %5092
        %5094 = vrot.lane.b32.xlu0 %v4264, 100
        %v5095 = vpop.permute.xlu0 %5094
        %5096 = vrot.lane.b32.xlu0 %v4265, 100
        %v5097 = vpop.permute.xlu0 %5096
        %5098 = vrot.lane.b32.xlu0 %v5088, 100
        %v5099 = vpop.permute.xlu0 %5098
        %5100 = vrot.lane.b32.xlu0 %v4267, 100
        %v5101 = vpop.permute.xlu0 %5100
        %5102 = vrot.lane.b32.xlu0 %v4268, 100
        %v5103 = vpop.permute.xlu0 %5102
        %5104 = vrot.lane.b32.xlu0 %v4269, 100
        %v5105 = vpop.permute.xlu0 %5104
        %5106 = vrot.lane.b32.xlu0 %v5089, 100
        %v5107 = vpop.permute.xlu0 %5106
        %5108 = vrot.lane.b32.xlu0 %v4271, 100
        %v5109 = vpop.permute.xlu0 %5108
        %5110 = vrot.lane.b32.xlu0 %v4272, 100
        %v5111 = vpop.permute.xlu0 %5110
        %5112 = vrot.lane.b32.xlu0 %v4273, 100
        %v5113 = vpop.permute.xlu0 %5112
        %5114 = vrot.lane.b32.xlu0 %v5090, 100
        %v5115 = vpop.permute.xlu0 %5114
        %5116 = vrot.lane.b32.xlu0 %v4275, 100
        %v5117 = vpop.permute.xlu0 %5116
        %5118 = vrot.lane.b32.xlu0 %v4276, 100
        %v5119 = vpop.permute.xlu0 %5118
        %5120 = vrot.lane.b32.xlu0 %v4277, 100
        %v5121 = vpop.permute.xlu0 %5120
        %5122 = vrot.lane.b32.xlu0 %v5091, 100
        %v5123 = vpop.permute.xlu0 %5122
        %vm5140 = vcmask 851744
        %5141 = vst.msk [vmem:[#allocation2] sm:$0xff] %vm5140, %v5093
        %5142 = vst.msk [vmem:[#allocation2 + $0x8] sm:$0xff] %vm5140, %v5095
        %5143 = vst.msk [vmem:[#allocation2 + $0x10] sm:$0xff] %vm5140, %v5097
        %5144 = vst.msk [vmem:[#allocation2 + $0x18] sm:$0xff] %vm5140, %v5099
        %5145 = vst.msk [vmem:[#allocation2 + $0x20] sm:$0xff] %vm5140, %v5101
        %5146 = vst.msk [vmem:[#allocation2 + $0x28] sm:$0xff] %vm5140, %v5103
        %5147 = vst.msk [vmem:[#allocation2 + $0x30] sm:$0xff] %vm5140, %v5105
        %5148 = vst.msk [vmem:[#allocation2 + $0x38] sm:$0xff] %vm5140, %v5107
        %5149 = vst.msk [vmem:[#allocation2 + $0x40] sm:$0xff] %vm5140, %v5109
        %5150 = vst.msk [vmem:[#allocation2 + $0x48] sm:$0xff] %vm5140, %v5111
        %5151 = vst.msk [vmem:[#allocation2 + $0x50] sm:$0xff] %vm5140, %v5113
        %5152 = vst.msk [vmem:[#allocation2 + $0x58] sm:$0xff] %vm5140, %v5115
        %5153 = vst.msk [vmem:[#allocation2 + $0x60] sm:$0xff] %vm5140, %v5117
        %5154 = vst.msk [vmem:[#allocation2 + $0x68] sm:$0xff] %vm5140, %v5119
        %5155 = vst.msk [vmem:[#allocation2 + $0x70] sm:$0xff] %vm5140, %v5121
        %5156 = vst.msk [vmem:[#allocation2 + $0x78] sm:$0xff] %vm5140, %v5123
        %v5161 = vrot.slane %v3575, 5
        %v5162 = vrot.slane %v5161, 4
        %v5163 = vrot.slane %v3576, 5
        %v5164 = vsel %vm980, %v5162, %v5163
        %v5165 = vrot.slane %v3595, 5
        %v5166 = vrot.slane %v5165, 4
        %v5167 = vrot.slane %v3596, 5
        %v5168 = vsel %vm980, %v5166, %v5167
        %v5169 = vrot.slane %v3615, 5
        %v5170 = vrot.slane %v5169, 4
        %v5171 = vrot.slane %v3616, 5
        %v5172 = vsel %vm980, %v5170, %v5171
        %v5173 = vrot.slane %v3635, 5
        %v5174 = vrot.slane %v5173, 4
        %v5175 = vrot.slane %v3636, 5
        %v5176 = vsel %vm980, %v5174, %v5175
        %v5177 = vunpack.c.l.b16 %v5164
        %v5178 = vunpack.c.l.b16 %v5168
        %v5179 = vunpack.c.l.b16 %v5172
        %v5180 = vunpack.c.l.b16 %v5176
        %v5181 = vpack.c.b16 %v5177, %v4866
        %v5182 = vpack.c.b16 %v5178, %v4867
        %v5183 = vpack.c.b16 %v5179, %v4868
        %v5184 = vpack.c.b16 %v5180, %v4869
        %5185 = vrot.lane.b32.xlu0 %v4536, 104
        %v5186 = vpop.permute.xlu0 %5185
        %5187 = vrot.lane.b32.xlu0 %v4537, 104
        %v5188 = vpop.permute.xlu0 %5187
        %5189 = vrot.lane.b32.xlu0 %v4538, 104
        %v5190 = vpop.permute.xlu0 %5189
        %5191 = vrot.lane.b32.xlu0 %v5181, 104
        %v5192 = vpop.permute.xlu0 %5191
        %5193 = vrot.lane.b32.xlu0 %v4540, 104
        %v5194 = vpop.permute.xlu0 %5193
        %5195 = vrot.lane.b32.xlu0 %v4541, 104
        %v5196 = vpop.permute.xlu0 %5195
        %5197 = vrot.lane.b32.xlu0 %v4542, 104
        %v5198 = vpop.permute.xlu0 %5197
        %5199 = vrot.lane.b32.xlu0 %v5182, 104
        %v5200 = vpop.permute.xlu0 %5199
        %5201 = vrot.lane.b32.xlu0 %v4544, 104
        %v5202 = vpop.permute.xlu0 %5201
        %5203 = vrot.lane.b32.xlu0 %v4545, 104
        %v5204 = vpop.permute.xlu0 %5203
        %5205 = vrot.lane.b32.xlu0 %v4546, 104
        %v5206 = vpop.permute.xlu0 %5205
        %5207 = vrot.lane.b32.xlu0 %v5183, 104
        %v5208 = vpop.permute.xlu0 %5207
        %5209 = vrot.lane.b32.xlu0 %v4548, 104
        %v5210 = vpop.permute.xlu0 %5209
        %5211 = vrot.lane.b32.xlu0 %v4549, 104
        %v5212 = vpop.permute.xlu0 %5211
        %5213 = vrot.lane.b32.xlu0 %v4550, 104
        %v5214 = vpop.permute.xlu0 %5213
        %5215 = vrot.lane.b32.xlu0 %v5184, 104
        %v5216 = vpop.permute.xlu0 %5215
        %vm5233 = vcmask 884544
        %5234 = vst.msk [vmem:[#allocation2] sm:$0xff] %vm5233, %v5186
        %5235 = vst.msk [vmem:[#allocation2 + $0x8] sm:$0xff] %vm5233, %v5188
        %5236 = vst.msk [vmem:[#allocation2 + $0x10] sm:$0xff] %vm5233, %v5190
        %5237 = vst.msk [vmem:[#allocation2 + $0x18] sm:$0xff] %vm5233, %v5192
        %5238 = vst.msk [vmem:[#allocation2 + $0x20] sm:$0xff] %vm5233, %v5194
        %5239 = vst.msk [vmem:[#allocation2 + $0x28] sm:$0xff] %vm5233, %v5196
        %5240 = vst.msk [vmem:[#allocation2 + $0x30] sm:$0xff] %vm5233, %v5198
        %5241 = vst.msk [vmem:[#allocation2 + $0x38] sm:$0xff] %vm5233, %v5200
        %5242 = vst.msk [vmem:[#allocation2 + $0x40] sm:$0xff] %vm5233, %v5202
        %5243 = vst.msk [vmem:[#allocation2 + $0x48] sm:$0xff] %vm5233, %v5204
        %5244 = vst.msk [vmem:[#allocation2 + $0x50] sm:$0xff] %vm5233, %v5206
        %5245 = vst.msk [vmem:[#allocation2 + $0x58] sm:$0xff] %vm5233, %v5208
        %5246 = vst.msk [vmem:[#allocation2 + $0x60] sm:$0xff] %vm5233, %v5210
        %5247 = vst.msk [vmem:[#allocation2 + $0x68] sm:$0xff] %vm5233, %v5212
        %5248 = vst.msk [vmem:[#allocation2 + $0x70] sm:$0xff] %vm5233, %v5214
        %5249 = vst.msk [vmem:[#allocation2 + $0x78] sm:$0xff] %vm5233, %v5216
        %v5250 = vld [vmem:[%s1] sm:$0xf]
        %v5251 = vld [vmem:[%s1 + $0x4] sm:$0xf]
        %v5252 = vld [vmem:[%s1 + $0x8] sm:$0xf]
        %v5253 = vld [vmem:[%s1 + $0xc] sm:$0xf]
        %v5254 = vld [vmem:[%s1 + $0x10] sm:$0xf]
        %v5255 = vld [vmem:[%s1 + $0x14] sm:$0xf]
        %v5256 = vld [vmem:[%s1 + $0x18] sm:$0xf]
        %v5257 = vld [vmem:[%s1 + $0x1c] sm:$0xf]
        %v5258 = vld [vmem:[%s1 + $0x20] sm:$0xf]
        %v5259 = vld [vmem:[%s1 + $0x24] sm:$0xf]
        %v5260 = vld [vmem:[%s1 + $0x28] sm:$0xf]
        %v5261 = vld [vmem:[%s1 + $0x2c] sm:$0xf]
        %v5262 = vld [vmem:[%s1 + $0x30] sm:$0xf]
        %v5263 = vld [vmem:[%s1 + $0x34] sm:$0x3]
        %v5264 = vld [vmem:[%s2] sm:$0x1]
        %v5265 = vld [vmem:[#allocation2] sm:$0xff]
        %v5266 = vld [vmem:[#allocation2 + $0x8] sm:$0xff]
        %v5267 = vld [vmem:[#allocation2 + $0x10] sm:$0xff]
        %v5268 = vld [vmem:[#allocation2 + $0x18] sm:$0xff]
        %v5269 = vld [vmem:[#allocation2 + $0x20] sm:$0xff]
        %v5270 = vld [vmem:[#allocation2 + $0x28] sm:$0xff]
        %v5271 = vld [vmem:[#allocation2 + $0x30] sm:$0xff]
        %v5272 = vld [vmem:[#allocation2 + $0x38] sm:$0xff]
        %v5273 = vld [vmem:[#allocation2 + $0x40] sm:$0xff]
        %v5274 = vld [vmem:[#allocation2 + $0x48] sm:$0xff]
        %v5275 = vld [vmem:[#allocation2 + $0x50] sm:$0xff]
        %v5276 = vld [vmem:[#allocation2 + $0x58] sm:$0xff]
        %v5277 = vld [vmem:[#allocation2 + $0x60] sm:$0xff]
        %v5278 = vld [vmem:[#allocation2 + $0x68] sm:$0xff]
        %v5279 = vld [vmem:[#allocation2 + $0x70] sm:$0xff]
        %v5280 = vld [vmem:[#allocation2 + $0x78] sm:$0xff]
        %v5282 = vlaneseq
        %v5283 = vshrl.u32 %v5282, 7
        %v5284 = vsub.s32 0, %v5283
        %v5285 = vrot.slane %v5264, %v5284
        %v5301 = vunpack.c.l.b16 %v5250
        %v5302 = vunpack.c.l.b16 %v5251
        %v5303 = vunpack.c.l.b16 %v5252
        %v5304 = vunpack.c.l.b16 %v5253
        %v5305 = vunpack.c.l.b16 %v5254
        %v5306 = vunpack.c.l.b16 %v5255
        %v5307 = vunpack.c.l.b16 %v5256
        %v5308 = vunpack.c.l.b16 %v5257
        %v5309 = vunpack.c.l.b16 %v5258
        %v5310 = vunpack.c.l.b16 %v5259
        %v5311 = vunpack.c.l.b16 %v5260
        %v5312 = vunpack.c.l.b16 %v5261
        %v5313 = vunpack.c.l.b16 %v5262
        %v5314 = vunpack.c.l.b16 %v5263
        %v5315 = vpack.c.b16 %v5302, %v5301
        %v5316 = vpack.c.b16 %v5304, %v5303
        %v5317 = vpack.c.b16 %v5306, %v5305
        %v5318 = vpack.c.b16 %v5308, %v5307
        %v5319 = vpack.c.b16 %v5310, %v5309
        %v5320 = vpack.c.b16 %v5312, %v5311
        %v5321 = vpack.c.b16 %v5314, %v5313
        %vm5328 = vcmask 883712
        %v5330 = vsel %vm5328, %v5265, 0
        %v5333 = vsel %vm5328, %v5266, 0
        %v5336 = vsel %vm5328, %v5267, 0
        %v5339 = vsel %vm5328, %v5268, 0
        %v5342 = vsel %vm5328, %v5269, 0
        %v5345 = vsel %vm5328, %v5270, 0
        %v5348 = vsel %vm5328, %v5271, 0
        %v5351 = vsel %vm5328, %v5272, 0
        %v5354 = vsel %vm5328, %v5273, 0
        %v5357 = vsel %vm5328, %v5274, 0
        %v5360 = vsel %vm5328, %v5275, 0
        %v5363 = vsel %vm5328, %v5276, 0
        %v5366 = vsel %vm5328, %v5277, 0
        %v5369 = vsel %vm5328, %v5278, 0
        %v5372 = vsel %vm5328, %v5279, 0
        %v5375 = vsel %vm5328, %v5280, 0
        %vm5377 = vcmask 1045504
        %v5379 = vsel %vm5377, %v5321, 0
        %5381 = vmatprep.subr.bf16.mxu0 0
        %5382 = vmatpush1.bf16.msra.mxu0 %v5315
        %5383 = vmatprep.subr.bf16.mxu0 0
        %5384 = vmatpush1.bf16.msra.mxu0 %v5316
        %5385 = vmatprep.subr.bf16.mxu0 0
        %5386 = vmatpush1.bf16.msra.mxu0 %v5317
        %5387 = vmatprep.subr.bf16.mxu0 0
        %5388 = vmatpush1.bf16.msra.mxu0 %v5318
        %5389 = vmatprep.subr.bf16.mxu0 0
        %5390 = vmatpush1.bf16.msra.mxu0 %v5319
        %5391 = vmatprep.subr.bf16.mxu0 0
        %5392 = vmatpush1.bf16.msra.mxu0 %v5320
        %5393 = vmatprep.subr.bf16.mxu0 0
        %5394 = vmatpush1.bf16.msra.mxu0 %v5379
        %5395 = vmatprep.subr.bf16.mxu0 0
        %5396 = vmatpush1.bf16.msra.mxu0 0
        %5397 = vmatprep.subr.bf16.mxu0 0
        %5398 = vmatpush1.bf16.msra.mxu0 0
        %5399 = vmatprep.subr.bf16.mxu0 0
        %5400 = vmatpush1.bf16.msra.mxu0 0
        %5401 = vmatprep.subr.bf16.mxu0 0
        %5402 = vmatpush1.bf16.msra.mxu0 0
        %5403 = vmatprep.subr.bf16.mxu0 0
        %5404 = vmatpush1.bf16.msra.mxu0 0
        %5405 = vmatprep.subr.bf16.mxu0 0
        %5406 = vmatpush1.bf16.msra.mxu0 0
        %5407 = vmatprep.subr.bf16.mxu0 0
        %5408 = vmatpush1.bf16.msra.mxu0 0
        %5409 = vmatprep.subr.bf16.mxu0 0
        %5410 = vmatpush1.bf16.msra.mxu0 0
        %5411 = vmatprep.subr.bf16.mxu0 0
        %5412 = vmatpush1.bf16.msra.mxu0 0
        %5413 = vmatprep.mubr.bf16.mxu0 0
        %5414 = vmatmul.mubr.bf16.gmra.mrb[0].mxu0 %v5330
        %v5415 = vpop.f32.mrb[0].mxu0
        %v5416 = vadd.f32 %v5285, %v5415
        %v5417 = vpop.f32.mrb[0].mxu0
        %v5418 = vpop.f32.mrb[0].mxu0
        %v5419 = vadd.f32 %v5285, %v5418
        %v5420 = vpop.f32.mrb[0].mxu0
        %5421 = vmatprep.mubr.bf16.mxu0 0
        %5422 = vmatmul.mubr.bf16.gmra.mrb[0].mxu0 %v5333
        %v5423 = vpop.f32.mrb[0].mxu0
        %v5424 = vadd.f32 %v5285, %v5423
        %v5425 = vpop.f32.mrb[0].mxu0
        %v5426 = vpop.f32.mrb[0].mxu0
        %v5427 = vadd.f32 %v5285, %v5426
        %v5428 = vpop.f32.mrb[0].mxu0
        %5429 = vmatprep.mubr.bf16.mxu0 0
        %5430 = vmatmul.mubr.bf16.gmra.mrb[0].mxu0 %v5336
        %v5431 = vpop.f32.mrb[0].mxu0
        %v5432 = vadd.f32 %v5285, %v5431
        %v5433 = vpop.f32.mrb[0].mxu0
        %v5434 = vpop.f32.mrb[0].mxu0
        %v5435 = vadd.f32 %v5285, %v5434
        %v5436 = vpop.f32.mrb[0].mxu0
        %5437 = vmatprep.mubr.bf16.mxu0 0
        %5438 = vmatmul.mubr.bf16.gmra.mrb[0].mxu0 %v5339
        %v5439 = vpop.f32.mrb[0].mxu0
        %v5440 = vadd.f32 %v5285, %v5439
        %v5441 = vpop.f32.mrb[0].mxu0
        %v5442 = vpop.f32.mrb[0].mxu0
        %v5443 = vadd.f32 %v5285, %v5442
        %v5444 = vpop.f32.mrb[0].mxu0
        %5445 = vmatprep.mubr.bf16.mxu0 0
        %5446 = vmatmul.mubr.bf16.gmra.mrb[0].mxu0 %v5342
        %v5447 = vpop.f32.mrb[0].mxu0
        %v5448 = vadd.f32 %v5285, %v5447
        %v5449 = vpop.f32.mrb[0].mxu0
        %v5450 = vpop.f32.mrb[0].mxu0
        %v5451 = vadd.f32 %v5285, %v5450
        %v5452 = vpop.f32.mrb[0].mxu0
        %5453 = vmatprep.mubr.bf16.mxu0 0
        %5454 = vmatmul.mubr.bf16.gmra.mrb[0].mxu0 %v5345
        %v5455 = vpop.f32.mrb[0].mxu0
        %v5456 = vadd.f32 %v5285, %v5455
        %v5457 = vpop.f32.mrb[0].mxu0
        %v5458 = vpop.f32.mrb[0].mxu0
        %v5459 = vadd.f32 %v5285, %v5458
        %v5460 = vpop.f32.mrb[0].mxu0
        %5461 = vmatprep.mubr.bf16.mxu0 0
        %5462 = vmatmul.mubr.bf16.gmra.mrb[0].mxu0 %v5348
        %v5463 = vpop.f32.mrb[0].mxu0
        %v5464 = vadd.f32 %v5285, %v5463
        %v5465 = vpop.f32.mrb[0].mxu0
        %v5466 = vpop.f32.mrb[0].mxu0
        %v5467 = vadd.f32 %v5285, %v5466
        %v5468 = vpop.f32.mrb[0].mxu0
        %5469 = vmatprep.mubr.bf16.mxu0 0
        %5470 = vmatmul.mubr.bf16.gmra.mrb[0].mxu0 %v5351
        %v5471 = vpop.f32.mrb[0].mxu0
        %v5472 = vadd.f32 %v5285, %v5471
        %v5473 = vpop.f32.mrb[0].mxu0
        %v5474 = vpop.f32.mrb[0].mxu0
        %v5475 = vadd.f32 %v5285, %v5474
        %v5476 = vpop.f32.mrb[0].mxu0
        %5477 = vmatprep.mubr.bf16.mxu0 0
        %5478 = vmatmul.mubr.bf16.gmra.mrb[0].mxu0 %v5354
        %v5479 = vpop.f32.mrb[0].mxu0
        %v5480 = vadd.f32 %v5285, %v5479
        %v5481 = vpop.f32.mrb[0].mxu0
        %v5482 = vpop.f32.mrb[0].mxu0
        %v5483 = vadd.f32 %v5285, %v5482
        %v5484 = vpop.f32.mrb[0].mxu0
        %5485 = vmatprep.mubr.bf16.mxu0 0
        %5486 = vmatmul.mubr.bf16.gmra.mrb[0].mxu0 %v5357
        %v5487 = vpop.f32.mrb[0].mxu0
        %v5488 = vadd.f32 %v5285, %v5487
        %v5489 = vpop.f32.mrb[0].mxu0
        %v5490 = vpop.f32.mrb[0].mxu0
        %v5491 = vadd.f32 %v5285, %v5490
        %v5492 = vpop.f32.mrb[0].mxu0
        %5493 = vmatprep.mubr.bf16.mxu0 0
        %5494 = vmatmul.mubr.bf16.gmra.mrb[0].mxu0 %v5360
        %v5495 = vpop.f32.mrb[0].mxu0
        %v5496 = vadd.f32 %v5285, %v5495
        %v5497 = vpop.f32.mrb[0].mxu0
        %v5498 = vpop.f32.mrb[0].mxu0
        %v5499 = vadd.f32 %v5285, %v5498
        %v5500 = vpop.f32.mrb[0].mxu0
        %5501 = vmatprep.mubr.bf16.mxu0 0
        %5502 = vmatmul.mubr.bf16.gmra.mrb[0].mxu0 %v5363
        %v5503 = vpop.f32.mrb[0].mxu0
        %v5504 = vadd.f32 %v5285, %v5503
        %v5505 = vpop.f32.mrb[0].mxu0
        %v5506 = vpop.f32.mrb[0].mxu0
        %v5507 = vadd.f32 %v5285, %v5506
        %v5508 = vpop.f32.mrb[0].mxu0
        %5509 = vmatprep.mubr.bf16.mxu0 0
        %5510 = vmatmul.mubr.bf16.gmra.mrb[0].mxu0 %v5366
        %v5511 = vpop.f32.mrb[0].mxu0
        %v5512 = vadd.f32 %v5285, %v5511
        %v5513 = vpop.f32.mrb[0].mxu0
        %v5514 = vpop.f32.mrb[0].mxu0
        %v5515 = vadd.f32 %v5285, %v5514
        %v5516 = vpop.f32.mrb[0].mxu0
        %5517 = vmatprep.mubr.bf16.mxu0 0
        %5518 = vmatmul.mubr.bf16.gmra.mrb[0].mxu0 %v5369
        %v5519 = vpop.f32.mrb[0].mxu0
        %v5520 = vadd.f32 %v5285, %v5519
        %v5521 = vpop.f32.mrb[0].mxu0
        %v5522 = vpop.f32.mrb[0].mxu0
        %v5523 = vadd.f32 %v5285, %v5522
        %v5524 = vpop.f32.mrb[0].mxu0
        %5525 = vmatprep.mubr.bf16.mxu0 0
        %5526 = vmatmul.mubr.bf16.gmra.mrb[0].mxu0 %v5372
        %v5527 = vpop.f32.mrb[0].mxu0
        %v5528 = vadd.f32 %v5285, %v5527
        %v5529 = vpop.f32.mrb[0].mxu0
        %v5530 = vpop.f32.mrb[0].mxu0
        %v5531 = vadd.f32 %v5285, %v5530
        %v5532 = vpop.f32.mrb[0].mxu0
        %5533 = vmatprep.mubr.bf16.mxu0 0
        %5534 = vmatmul.mubr.bf16.gmra.mrb[0].mxu0 %v5375
        %v5535 = vpop.f32.mrb[0].mxu0
        %v5536 = vadd.f32 %v5285, %v5535
        %v5537 = vpop.f32.mrb[0].mxu0
        %v5538 = vpop.f32.mrb[0].mxu0
        %v5539 = vadd.f32 %v5285, %v5538
        %v5540 = vpop.f32.mrb[0].mxu0
        %5541 = vdwg.mxu0
        %v5542 = vmax.f32 %v5416, 0.0
        %v5543 = vmax.f32 %v5419, 0.0
        %v5544 = vmax.f32 %v5424, 0.0
        %v5545 = vmax.f32 %v5427, 0.0
        %v5546 = vmax.f32 %v5432, 0.0
        %v5547 = vmax.f32 %v5435, 0.0
        %v5548 = vmax.f32 %v5440, 0.0
        %v5549 = vmax.f32 %v5443, 0.0
        %v5550 = vmax.f32 %v5448, 0.0
        %v5551 = vmax.f32 %v5451, 0.0
        %v5552 = vmax.f32 %v5456, 0.0
        %v5553 = vmax.f32 %v5459, 0.0
        %v5554 = vmax.f32 %v5464, 0.0
        %v5555 = vmax.f32 %v5467, 0.0
        %v5556 = vmax.f32 %v5472, 0.0
        %v5557 = vmax.f32 %v5475, 0.0
        %v5558 = vmax.f32 %v5480, 0.0
        %v5559 = vmax.f32 %v5483, 0.0
        %v5560 = vmax.f32 %v5488, 0.0
        %v5561 = vmax.f32 %v5491, 0.0
        %v5562 = vmax.f32 %v5496, 0.0
        %v5563 = vmax.f32 %v5499, 0.0
        %v5564 = vmax.f32 %v5504, 0.0
        %v5565 = vmax.f32 %v5507, 0.0
        %v5566 = vmax.f32 %v5512, 0.0
        %v5567 = vmax.f32 %v5515, 0.0
        %v5568 = vmax.f32 %v5520, 0.0
        %v5569 = vmax.f32 %v5523, 0.0
        %v5570 = vmax.f32 %v5528, 0.0
        %v5571 = vmax.f32 %v5531, 0.0
        %v5572 = vmax.f32 %v5536, 0.0
        %v5573 = vmax.f32 %v5539, 0.0
        %5574 = vst [vmem:[%s177] sm:$0xff] %v5542
        %5575 = vst [vmem:[%s177 + $0x8] sm:$0xff] %v5543
        %5576 = vst [vmem:[%s177 + $0x10] sm:$0xff] %v5544
        %5577 = vst [vmem:[%s177 + $0x18] sm:$0xff] %v5545
        %5578 = vst [vmem:[%s177 + $0x20] sm:$0xff] %v5546
        %5579 = vst [vmem:[%s177 + $0x28] sm:$0xff] %v5547
        %5580 = vst [vmem:[%s177 + $0x30] sm:$0xff] %v5548
        %5581 = vst [vmem:[%s177 + $0x38] sm:$0xff] %v5549
        %5582 = vst [vmem:[%s177 + $0x40] sm:$0xff] %v5550
        %5583 = vst [vmem:[%s177 + $0x48] sm:$0xff] %v5551
        %5584 = vst [vmem:[%s177 + $0x50] sm:$0xff] %v5552
        %5585 = vst [vmem:[%s177 + $0x58] sm:$0xff] %v5553
        %5586 = vst [vmem:[%s177 + $0x60] sm:$0xff] %v5554
        %5587 = vst [vmem:[%s177 + $0x68] sm:$0xff] %v5555
        %5588 = vst [vmem:[%s177 + $0x70] sm:$0xff] %v5556
        %5589 = vst [vmem:[%s177 + $0x78] sm:$0xff] %v5557
        %5590 = vst [vmem:[%s177 + $0x80] sm:$0xff] %v5558
        %5591 = vst [vmem:[%s177 + $0x88] sm:$0xff] %v5559
        %5592 = vst [vmem:[%s177 + $0x90] sm:$0xff] %v5560
        %5593 = vst [vmem:[%s177 + $0x98] sm:$0xff] %v5561
        %5594 = vst [vmem:[%s177 + $0xa0] sm:$0xff] %v5562
        %5595 = vst [vmem:[%s177 + $0xa8] sm:$0xff] %v5563
        %5596 = vst [vmem:[%s177 + $0xb0] sm:$0xff] %v5564
        %5597 = vst [vmem:[%s177 + $0xb8] sm:$0xff] %v5565
        %5598 = vst [vmem:[%s177 + $0xc0] sm:$0xff] %v5566
        %5599 = vst [vmem:[%s177 + $0xc8] sm:$0xff] %v5567
        %5600 = vst [vmem:[%s177 + $0xd0] sm:$0xff] %v5568
        %5601 = vst [vmem:[%s177 + $0xd8] sm:$0xff] %v5569
        %5602 = vst [vmem:[%s177 + $0xe0] sm:$0xff] %v5570
        %5603 = vst [vmem:[%s177 + $0xe8] sm:$0xff] %v5571
        %5604 = vst [vmem:[%s177 + $0xf0] sm:$0xff] %v5572
        %5605 = vst [vmem:[%s177 + $0xf8] sm:$0xff] %v5573
        %s5606 = sand.u32 %s107, 1
        %s5607 = scalar_lea.sflag [#allocation4], %s5606
        %s5608 = sand.u32 %s107, 1
        %s5609 = smul.addr %s5608, 256
        %s5610 = scalar_lea.vmem [#allocation3], %s5609
        // Predicated region
        $region33: #{tpu_custom_call.1} parent=31 // pred_check
          %p5611 = pneg %p117
        $region34: #{tpu_custom_call.1} parent=31 // pred_check_branch
          %5613 = sbr.rel (%p5611) target = $region36
        $region35: #{tpu_custom_call.1} parent=31 // pred_region
          %s5614 = smul.u32 32, %s22
          %s5616 = ssub.s32 4096, 4096
          %5617 = vsyncadd %s5607, %s5616
          %s5618 = smul.addr %s21, 64
          %s5619 = sadd.s32 %s5614, %s5618
          %s5620 = smul.addr %s5619, 128
          %s5621 = scalar_lea.hbm %s3, %s5620
          %s5622 = sshll.u32 %s5610, 4
          %s5623 = int_to_ptr.vmem [resolvable:$true] %s5622
          %5628 = dma.vmem_to_hbm [thread:$0]  %s5623, 4096, %s5621, %s5607, 128, 128, 8
        $region36: #{tpu_custom_call.1} parent=31 // pred_fallthru
          _
      $region32: #{tpu_custom_call.1} parent=5 // pred_fallthru
        _
      %p5629 = scmp.le.s32.totalorder 2, %s12
      // Predicated region
      $region37: #{tpu_custom_call.1} parent=5 // pred_check
        %p5630 = pneg %p5629
      $region38: #{tpu_custom_call.1} parent=5 // pred_check_branch
        %5632 = sbr.rel (%p5630) target = $region40
      $region39: #{tpu_custom_call.1} parent=5 // pred_region
        %s5633 = ssub.s32 %s12, 2
        // Predicated region
        $region41: #{tpu_custom_call.1} parent=39 // pred_check
          %p5634 = pneg %p123
        $region42: #{tpu_custom_call.1} parent=39 // pred_check_branch
          %5636 = sbr.rel (%p5634) target = $region44
        $region43: #{tpu_custom_call.1} parent=39 // pred_region
          %s5637 = sand.u32 %s108, 1
          %s5638 = scalar_lea.sflag [#allocation4], %s5637
          %s5639 = sand.u32 %s108, 1
          %s5640 = smul.addr %s5639, 256
          %s5641 = scalar_lea.vmem [#allocation3], %s5640
          %5642 = dma.done %s5638, 4096
        $region44: #{tpu_custom_call.1} parent=39 // pred_fallthru
          _
      $region40: #{tpu_custom_call.1} parent=5 // pred_fallthru
        _
    $region6: #{tpu_custom_call.1} parent=1 // loop_footer
      %s16 = sadd.s32 1, %s12
    $region7: #{tpu_custom_call.1} parent=1 // loop_footer_branch
      %11 = sbr.rel target = $region3
    $region8: #{tpu_custom_call.1} parent=1 // loop_exit
      _
    %5643 = vsyncpa [#allocation4], 1
    %s5644 = scalar_lea.sflag [#allocation4], 1
    %5645 = vsyncpa %s5644, 1

</llo_original>
